<compile_context>
chip_gen: v7x
topology: tpu7x:2x2x1
jax: 0.10.0
libtpu: 0.0.40
codegen_flags: <defaults>
</compile_context>

<pallas_src>
import functools

import jax
import jax.numpy as jnp
from jax import lax
from jax.experimental import pallas as pl
from jax.experimental.pallas import tpu as pltpu


def capsule_kernel(wt_ref, bias_ref, ut_ref, vt_ref, upred_ref, *,
                   n_in, n_out, d_out, r, lane_chunk):
    # wt_ref:    (n_in*n_out*d_out, n_in*d_in)  bf16  block-diag weight^T
    # bias_ref:  (n_in*n_out*d_out, 1)          f32
    # ut_ref:    (n_in*d_in, TB)                bf16  batch tile on lanes
    # vt_ref:    (n_out*d_out, TB)              f32   lane-dense output
    # upred_ref: (n_in*n_out*d_out, TB)         f32   scratch for u_{j|i}
    nod = n_out * d_out
    tb = ut_ref.shape[1]
    n_chunks = tb // lane_chunk

    # ---- predictions u_{j|i} for the whole batch tile: one MXU matmul ------
    # Full-tile matmul amortizes the weight-stationary load over all TB result
    # columns; bias is added after f32 accumulation.
    upred_ref[...] = (
        jnp.dot(wt_ref[...], ut_ref[...], preferred_element_type=jnp.float32)
        + bias_ref[...])

    def routing_chunk(off):
        # All routing tensors for this chunk are (*, lane_chunk) -> <=2 vregs
        # each, bounding register pressure independently of TB.
        def slab(i, j):                                  # u_{j|i}: (d_out, lc)
            base = i * nod + j * d_out
            return upred_ref[base:base + d_out, pl.ds(off, lane_chunk)]

        def agreement(v):
            # out[j][i, :] = sum_k u_{j|i}[k, :] * v_j[k, :]
            out = []
            for j in range(n_out):
                rows = [jnp.sum(slab(i, j) * v[j], axis=0, keepdims=True)
                        for i in range(n_in)]
                out.append(jnp.concatenate(rows, axis=0))  # (n_in, lc)
            return out

        def squash(s):
            # Exact f32 math (no approx reciprocal) for accuracy.
            norm2 = jnp.sum(s * s, axis=0, keepdims=True)  # (1, lc)
            norm = jnp.sqrt(norm2)
            return (norm / (1.0 + norm2)) * s

        # ---- routing iteration 0: b == 0 => uniform coupling c = 1/n_out ---
        inv_n_out = 1.0 / n_out
        v = []
        for j in range(n_out):
            s_j = slab(0, j)
            for i in range(1, n_in):
                s_j = s_j + slab(i, j)
            v.append(squash(s_j * inv_n_out))

        if r > 1:
            b = agreement(v)                              # b was zero
            for it in range(1, r):
                # softmax over n_out (unrolled), exact divide
                m = b[0]
                for j in range(1, n_out):
                    m = jnp.maximum(m, b[j])
                e = [jnp.exp(b[j] - m) for j in range(n_out)]
                denom = e[0]
                for j in range(1, n_out):
                    denom = denom + e[j]
                c = [e[j] / denom for j in range(n_out)]  # (n_in, lc) each

                v = []
                for j in range(n_out):
                    s_j = c[j][0:1, :] * slab(0, j)
                    for i in range(1, n_in):
                        s_j = s_j + c[j][i:i + 1, :] * slab(i, j)
                    v.append(squash(s_j))

                if it < r - 1:                            # last update unused
                    d = agreement(v)
                    b = [b[j] + d[j] for j in range(n_out)]

        # ---- lane-dense store: row j*d_out + k, batch on lanes -------------
        for j in range(n_out):
            vt_ref[j * d_out:(j + 1) * d_out, pl.ds(off, lane_chunk)] = v[j]

    def body(ci, carry):
        routing_chunk(pl.multiple_of(ci * lane_chunk, lane_chunk))
        return carry

    lax.fori_loop(0, n_chunks, body, 0, unroll=True)


def capsule_forward(u_i, weight, bias, r, *, tb=None, lane_chunk=128,
                    tb_max=512):
    """u_i: (B, n_in, d_in); weight: (1, n_in, n_out, d_in, d_out);
    bias: (n_in, n_out, 1)  ->  v: (B, n_out, d_out)"""
    B, n_in, d_in = u_i.shape
    _, _, n_out, _, d_out = weight.shape
    nod = n_out * d_out
    d_all_in = n_in * d_in
    d_all_out = n_in * nod

    # -- XLA glue: block-diagonal weight (transposed), bf16 for the MXU ------
    w_per = jnp.transpose(weight[0], (0, 2, 1, 3)).reshape(n_in, d_in, nod)
    eye = jnp.eye(n_in, dtype=w_per.dtype)
    w_bd = eye[:, :, None, None] * w_per[:, None, :, :]        # (ni,ni,di,nod)
    w_bd = jnp.transpose(w_bd, (0, 2, 1, 3)).reshape(d_all_in, d_all_out)
    wt = w_bd.T.astype(jnp.bfloat16)                           # (d_all_out, d_all_in)

    # bias expanded over d_out, kept f32 (added after f32 accumulation)
    bias_t = jnp.broadcast_to(bias, (n_in, n_out, d_out)).reshape(d_all_out, 1)
    bias_t = bias_t.astype(jnp.float32)

    # -- batch tile sizing ----------------------------------------------------
    b128 = -(-B // lane_chunk) * lane_chunk
    if tb is None:
        tb = min(tb_max, b128)
        # v7x megacore: prefer >= 2 grid steps when the batch allows it.
        if b128 >= 2 * lane_chunk and b128 // tb < 2:
            tb = max(lane_chunk, (b128 // 2 // lane_chunk) * lane_chunk)
    assert tb % lane_chunk == 0
    b_pad = -(-b128 // tb) * tb

    # input capsules transposed so the batch tile sits on TPU lanes.
    # TODO(synk): feeding u_i untransposed (trans_b contraction) would save a
    # glue HBM round trip but may insert an in-kernel vxpose; kept as-is.
    ut = u_i.reshape(B, d_all_in).T.astype(jnp.bfloat16)       # (d_all_in, B)
    ut = jnp.pad(ut, ((0, 0), (0, b_pad - B)))

    kernel = functools.partial(capsule_kernel, n_in=n_in, n_out=n_out,
                               d_out=d_out, r=r, lane_chunk=lane_chunk)
    vt = pl.pallas_call(
        kernel,
        out_shape=jax.ShapeDtypeStruct((nod, b_pad), jnp.float32),
        grid=(b_pad // tb,),
        in_specs=[
            # Constant index_maps: Mosaic's revisiting keeps these blocks
            # resident in VMEM across grid steps (no per-step refetch).
            pl.BlockSpec((d_all_out, d_all_in), lambda g: (0, 0)),  # weight
            pl.BlockSpec((d_all_out, 1), lambda g: (0, 0)),         # bias
            pl.BlockSpec((d_all_in, tb), lambda g: (0, g)),         # u tile
        ],
        out_specs=pl.BlockSpec((nod, tb), lambda g: (0, g)),
        scratch_shapes=[pltpu.VMEM((d_all_out, tb), jnp.float32)],
        compiler_params=pltpu.CompilerParams(
            dimension_semantics=("parallel",)),
    )(wt, bias_t, ut)

    # un-transpose in cheap XLA glue: (nod, B_pad) -> (B, n_out, d_out)
    return vt[:, :B].T.reshape(B, n_out, d_out)


def capsule_reference(u_i, weight, bias, r):
    """Pure-JAX reference mirroring the PyTorch module (f32 routing)."""
    w = weight[0]                                              # (ni, no, di, do)
    u_ji = jnp.einsum('bid,ijde->bije', u_i, w,
                      precision=jax.lax.Precision.HIGHEST)
    u_ji = u_ji + bias[None]                                   # (B, ni, no, do)
    B, n_in, n_out, d_out = u_ji.shape
    b = jnp.zeros((B, n_in, n_out), jnp.float32)
    v = None
    for _ in range(r):
        c = jax.nn.softmax(b, axis=-1)
        s = jnp.sum(c[..., None] * u_ji, axis=1)
        norm = jnp.linalg.norm(s, axis=-1, keepdims=True)
        v = norm / (1.0 + norm ** 2) * s
        b = b + jnp.einsum('bije,bje->bij', u_ji, v,
                           precision=jax.lax.Precision.HIGHEST)
    return v


if __name__ == "__main__":
    # Small shapes consistent with the module's forward signature.
    B, n_in, d_in, n_out, d_out, r = 4, 8, 16, 4, 16, 3

    key = jax.random.PRNGKey(0)
    k_u, k_w, k_b = jax.random.split(key, 3)
    u_i = jax.random.normal(k_u, (B, n_in, d_in), dtype=jnp.float32)
    weight = jax.random.normal(k_w, (1, n_in, n_out, d_in, d_out),
                               dtype=jnp.float32)
    bias = jax.random.normal(k_b, (n_in, n_out, 1), dtype=jnp.float32)

    v_kernel = jax.block_until_ready(capsule_forward(u_i, weight, bias, r))

    # Reference with the same bf16 rounding applied to the matmul operands
    # (routing stays f32 in both), so the check isolates kernel correctness
    # from the intentional bf16-for-MXU cast.
    u_m = u_i.astype(jnp.bfloat16).astype(jnp.float32)
    w_m = weight.astype(jnp.bfloat16).astype(jnp.float32)
    v_ref = jax.block_until_ready(capsule_reference(u_m, w_m, bias, r))

    assert v_kernel.shape == (B, n_out, d_out)
    assert jnp.allclose(v_kernel, v_ref, rtol=5e-3, atol=5e-3), (
        f"max abs err = {jnp.max(jnp.abs(v_kernel - v_ref))}")
    print("KERNEL_OK")
</pallas_src>

<mosaic_0001>
module attributes {stable_mosaic.version = 11 : i64} {
  func.func @capsule_kernel(%arg0: i32, %arg1: memref<512x128xbf16, #tpu.memory_space<vmem>>, %arg2: memref<512x1xf32, #tpu.memory_space<vmem>>, %arg3: memref<128x128xbf16, #tpu.memory_space<vmem>>, %arg4: memref<64x128xf32, #tpu.memory_space<vmem>>, %arg5: memref<512x128xf32, #tpu.memory_space<vmem>>) attributes {dimension_semantics = [#tpu.dimension_semantics<parallel>], iteration_bounds = array<i64: 1>, scalar_prefetch = 0 : i64, scratch_operands = 1 : i64, tpu.core_type = #tpu.core_type<tc>, window_params = [{pipeline_mode = #tpu.pipeline_mode<synchronous>, transform_indices = @transform_0, window_bounds = array<i64: 512, 128>}, {pipeline_mode = #tpu.pipeline_mode<synchronous>, transform_indices = @transform_1, window_bounds = array<i64: 512, 1>}, {transform_indices = @transform_2, window_bounds = array<i64: 128, 128>}, {transform_indices = @transform_3, window_bounds = array<i64: 64, 128>}]} {
    %c0 = arith.constant 0 : index
    %c0_0 = arith.constant 0 : index
    %0 = vector.load %arg1[%c0, %c0_0] : memref<512x128xbf16, #tpu.memory_space<vmem>>, vector<512x128xbf16>
    %c0_1 = arith.constant 0 : index
    %c0_2 = arith.constant 0 : index
    %1 = vector.load %arg3[%c0_1, %c0_2] : memref<128x128xbf16, #tpu.memory_space<vmem>>, vector<128x128xbf16>
    %cst = arith.constant dense<0.000000e+00> : vector<512x128xf32>
    %2 = tpu.matmul %0, %1, %cst {dimension_numbers = #tpu.dot_dimension_numbers<[1], [0], [0], [1], [0, 0, 1, 1], [], []>} : vector<512x128xbf16>, vector<128x128xbf16>, vector<512x128xf32> -> vector<512x128xf32>
    %c0_3 = arith.constant 0 : index
    %c0_4 = arith.constant 0 : index
    %3 = vector.load %arg2[%c0_3, %c0_4] : memref<512x1xf32, #tpu.memory_space<vmem>>, vector<512x1xf32>
    %4 = vector.broadcast %3 : vector<512x1xf32> to vector<512x128xf32>
    %5 = arith.addf %2, %4 : vector<512x128xf32>
    %c0_5 = arith.constant 0 : index
    %c0_6 = arith.constant 0 : index
    %6 = vector.load %arg5[%c0_5, %c0_6] : memref<512x128xf32, #tpu.memory_space<vmem>>, vector<512x128xf32>
    tpu.vector_store %arg5[%c0_5, %c0_6], %5 {strides = array<i32>} : memref<512x128xf32, #tpu.memory_space<vmem>>, vector<512x128xf32>,
    %c0_i32 = arith.constant 0 : i32
    %c128_i32 = arith.constant 128 : i32
    %7 = arith.muli %c0_i32, %c128_i32 : i32
    %8 = tpu.assume_multiple %7, 128 : i32
    %c0_7 = arith.constant 0 : index
    %9 = arith.index_cast %8 : i32 to index
    %10 = vector.load %arg5[%c0_7, %9] : memref<512x128xf32, #tpu.memory_space<vmem>>, vector<16x128xf32>
    %c64 = arith.constant 64 : index
    %11 = arith.index_cast %8 : i32 to index
    %12 = vector.load %arg5[%c64, %11] : memref<512x128xf32, #tpu.memory_space<vmem>>, vector<16x128xf32>
    %13 = arith.addf %10, %12 : vector<16x128xf32>
    %c128 = arith.constant 128 : index
    %14 = arith.index_cast %8 : i32 to index
    %15 = vector.load %arg5[%c128, %14] : memref<512x128xf32, #tpu.memory_space<vmem>>, vector<16x128xf32>
    %16 = arith.addf %13, %15 : vector<16x128xf32>
    %c192 = arith.constant 192 : index
    %17 = arith.index_cast %8 : i32 to index
    %18 = vector.load %arg5[%c192, %17] : memref<512x128xf32, #tpu.memory_space<vmem>>, vector<16x128xf32>
    %19 = arith.addf %16, %18 : vector<16x128xf32>
    %c256 = arith.constant 256 : index
    %20 = arith.index_cast %8 : i32 to index
    %21 = vector.load %arg5[%c256, %20] : memref<512x128xf32, #tpu.memory_space<vmem>>, vector<16x128xf32>
    %22 = arith.addf %19, %21 : vector<16x128xf32>
    %c320 = arith.constant 320 : index
    %23 = arith.index_cast %8 : i32 to index
    %24 = vector.load %arg5[%c320, %23] : memref<512x128xf32, #tpu.memory_space<vmem>>, vector<16x128xf32>
    %25 = arith.addf %22, %24 : vector<16x128xf32>
    %c384 = arith.constant 384 : index
    %26 = arith.index_cast %8 : i32 to index
    %27 = vector.load %arg5[%c384, %26] : memref<512x128xf32, #tpu.memory_space<vmem>>, vector<16x128xf32>
    %28 = arith.addf %25, %27 : vector<16x128xf32>
    %c448 = arith.constant 448 : index
    %29 = arith.index_cast %8 : i32 to index
    %30 = vector.load %arg5[%c448, %29] : memref<512x128xf32, #tpu.memory_space<vmem>>, vector<16x128xf32>
    %31 = arith.addf %28, %30 : vector<16x128xf32>
    %cst_8 = arith.constant 2.500000e-01 : f32
    %32 = vector.broadcast %cst_8 : f32 to vector<16x128xf32>
    %33 = arith.mulf %31, %32 : vector<16x128xf32>
    %34 = arith.mulf %33, %33 : vector<16x128xf32>
    %cst_9 = arith.constant dense<0.000000e+00> : vector<128xf32>
    %35 = vector.multi_reduction <add>, %34, %cst_9 [0] : vector<16x128xf32> to vector<128xf32>
    %36 = vector.shape_cast %35 : vector<128xf32> to vector<1x128xf32>
    %37 = math.sqrt %36 : vector<1x128xf32>
    %cst_10 = arith.constant 1.000000e+00 : f32
    %38 = vector.broadcast %cst_10 : f32 to vector<1x128xf32>
    %39 = arith.addf %38, %36 : vector<1x128xf32>
    %40 = arith.divf %37, %39 : vector<1x128xf32>
    %41 = vector.broadcast %40 : vector<1x128xf32> to vector<16x128xf32>
    %42 = arith.mulf %41, %33 : vector<16x128xf32>
    %c16 = arith.constant 16 : index
    %43 = arith.index_cast %8 : i32 to index
    %44 = vector.load %arg5[%c16, %43] : memref<512x128xf32, #tpu.memory_space<vmem>>, vector<16x128xf32>
    %c80 = arith.constant 80 : index
    %45 = arith.index_cast %8 : i32 to index
    %46 = vector.load %arg5[%c80, %45] : memref<512x128xf32, #tpu.memory_space<vmem>>, vector<16x128xf32>
    %47 = arith.addf %44, %46 : vector<16x128xf32>
    %c144 = arith.constant 144 : index
    %48 = arith.index_cast %8 : i32 to index
    %49 = vector.load %arg5[%c144, %48] : memref<512x128xf32, #tpu.memory_space<vmem>>, vector<16x128xf32>
    %50 = arith.addf %47, %49 : vector<16x128xf32>
    %c208 = arith.constant 208 : index
    %51 = arith.index_cast %8 : i32 to index
    %52 = vector.load %arg5[%c208, %51] : memref<512x128xf32, #tpu.memory_space<vmem>>, vector<16x128xf32>
    %53 = arith.addf %50, %52 : vector<16x128xf32>
    %c272 = arith.constant 272 : index
    %54 = arith.index_cast %8 : i32 to index
    %55 = vector.load %arg5[%c272, %54] : memref<512x128xf32, #tpu.memory_space<vmem>>, vector<16x128xf32>
    %56 = arith.addf %53, %55 : vector<16x128xf32>
    %c336 = arith.constant 336 : index
    %57 = arith.index_cast %8 : i32 to index
    %58 = vector.load %arg5[%c336, %57] : memref<512x128xf32, #tpu.memory_space<vmem>>, vector<16x128xf32>
    %59 = arith.addf %56, %58 : vector<16x128xf32>
    %c400 = arith.constant 400 : index
    %60 = arith.index_cast %8 : i32 to index
    %61 = vector.load %arg5[%c400, %60] : memref<512x128xf32, #tpu.memory_space<vmem>>, vector<16x128xf32>
    %62 = arith.addf %59, %61 : vector<16x128xf32>
    %c464 = arith.constant 464 : index
    %63 = arith.index_cast %8 : i32 to index
    %64 = vector.load %arg5[%c464, %63] : memref<512x128xf32, #tpu.memory_space<vmem>>, vector<16x128xf32>
    %65 = arith.addf %62, %64 : vector<16x128xf32>
    %cst_11 = arith.constant 2.500000e-01 : f32
    %66 = vector.broadcast %cst_11 : f32 to vector<16x128xf32>
    %67 = arith.mulf %65, %66 : vector<16x128xf32>
    %68 = arith.mulf %67, %67 : vector<16x128xf32>
    %cst_12 = arith.constant dense<0.000000e+00> : vector<128xf32>
    %69 = vector.multi_reduction <add>, %68, %cst_12 [0] : vector<16x128xf32> to vector<128xf32>
    %70 = vector.shape_cast %69 : vector<128xf32> to vector<1x128xf32>
    %71 = math.sqrt %70 : vector<1x128xf32>
    %cst_13 = arith.constant 1.000000e+00 : f32
    %72 = vector.broadcast %cst_13 : f32 to vector<1x128xf32>
    %73 = arith.addf %72, %70 : vector<1x128xf32>
    %74 = arith.divf %71, %73 : vector<1x128xf32>
    %75 = vector.broadcast %74 : vector<1x128xf32> to vector<16x128xf32>
    %76 = arith.mulf %75, %67 : vector<16x128xf32>
    %c32 = arith.constant 32 : index
    %77 = arith.index_cast %8 : i32 to index
    %78 = vector.load %arg5[%c32, %77] : memref<512x128xf32, #tpu.memory_space<vmem>>, vector<16x128xf32>
    %c96 = arith.constant 96 : index
    %79 = arith.index_cast %8 : i32 to index
    %80 = vector.load %arg5[%c96, %79] : memref<512x128xf32, #tpu.memory_space<vmem>>, vector<16x128xf32>
    %81 = arith.addf %78, %80 : vector<16x128xf32>
    %c160 = arith.constant 160 : index
    %82 = arith.index_cast %8 : i32 to index
    %83 = vector.load %arg5[%c160, %82] : memref<512x128xf32, #tpu.memory_space<vmem>>, vector<16x128xf32>
    %84 = arith.addf %81, %83 : vector<16x128xf32>
    %c224 = arith.constant 224 : index
    %85 = arith.index_cast %8 : i32 to index
    %86 = vector.load %arg5[%c224, %85] : memref<512x128xf32, #tpu.memory_space<vmem>>, vector<16x128xf32>
    %87 = arith.addf %84, %86 : vector<16x128xf32>
    %c288 = arith.constant 288 : index
    %88 = arith.index_cast %8 : i32 to index
    %89 = vector.load %arg5[%c288, %88] : memref<512x128xf32, #tpu.memory_space<vmem>>, vector<16x128xf32>
    %90 = arith.addf %87, %89 : vector<16x128xf32>
    %c352 = arith.constant 352 : index
    %91 = arith.index_cast %8 : i32 to index
    %92 = vector.load %arg5[%c352, %91] : memref<512x128xf32, #tpu.memory_space<vmem>>, vector<16x128xf32>
    %93 = arith.addf %90, %92 : vector<16x128xf32>
    %c416 = arith.constant 416 : index
    %94 = arith.index_cast %8 : i32 to index
    %95 = vector.load %arg5[%c416, %94] : memref<512x128xf32, #tpu.memory_space<vmem>>, vector<16x128xf32>
    %96 = arith.addf %93, %95 : vector<16x128xf32>
    %c480 = arith.constant 480 : index
    %97 = arith.index_cast %8 : i32 to index
    %98 = vector.load %arg5[%c480, %97] : memref<512x128xf32, #tpu.memory_space<vmem>>, vector<16x128xf32>
    %99 = arith.addf %96, %98 : vector<16x128xf32>
    %cst_14 = arith.constant 2.500000e-01 : f32
    %100 = vector.broadcast %cst_14 : f32 to vector<16x128xf32>
    %101 = arith.mulf %99, %100 : vector<16x128xf32>
    %102 = arith.mulf %101, %101 : vector<16x128xf32>
    %cst_15 = arith.constant dense<0.000000e+00> : vector<128xf32>
    %103 = vector.multi_reduction <add>, %102, %cst_15 [0] : vector<16x128xf32> to vector<128xf32>
    %104 = vector.shape_cast %103 : vector<128xf32> to vector<1x128xf32>
    %105 = math.sqrt %104 : vector<1x128xf32>
    %cst_16 = arith.constant 1.000000e+00 : f32
    %106 = vector.broadcast %cst_16 : f32 to vector<1x128xf32>
    %107 = arith.addf %106, %104 : vector<1x128xf32>
    %108 = arith.divf %105, %107 : vector<1x128xf32>
    %109 = vector.broadcast %108 : vector<1x128xf32> to vector<16x128xf32>
    %110 = arith.mulf %109, %101 : vector<16x128xf32>
    %c48 = arith.constant 48 : index
    %111 = arith.index_cast %8 : i32 to index
    %112 = vector.load %arg5[%c48, %111] : memref<512x128xf32, #tpu.memory_space<vmem>>, vector<16x128xf32>
    %c112 = arith.constant 112 : index
    %113 = arith.index_cast %8 : i32 to index
    %114 = vector.load %arg5[%c112, %113] : memref<512x128xf32, #tpu.memory_space<vmem>>, vector<16x128xf32>
    %115 = arith.addf %112, %114 : vector<16x128xf32>
    %c176 = arith.constant 176 : index
    %116 = arith.index_cast %8 : i32 to index
    %117 = vector.load %arg5[%c176, %116] : memref<512x128xf32, #tpu.memory_space<vmem>>, vector<16x128xf32>
    %118 = arith.addf %115, %117 : vector<16x128xf32>
    %c240 = arith.constant 240 : index
    %119 = arith.index_cast %8 : i32 to index
    %120 = vector.load %arg5[%c240, %119] : memref<512x128xf32, #tpu.memory_space<vmem>>, vector<16x128xf32>
    %121 = arith.addf %118, %120 : vector<16x128xf32>
    %c304 = arith.constant 304 : index
    %122 = arith.index_cast %8 : i32 to index
    %123 = vector.load %arg5[%c304, %122] : memref<512x128xf32, #tpu.memory_space<vmem>>, vector<16x128xf32>
    %124 = arith.addf %121, %123 : vector<16x128xf32>
    %c368 = arith.constant 368 : index
    %125 = arith.index_cast %8 : i32 to index
    %126 = vector.load %arg5[%c368, %125] : memref<512x128xf32, #tpu.memory_space<vmem>>, vector<16x128xf32>
    %127 = arith.addf %124, %126 : vector<16x128xf32>
    %c432 = arith.constant 432 : index
    %128 = arith.index_cast %8 : i32 to index
    %129 = vector.load %arg5[%c432, %128] : memref<512x128xf32, #tpu.memory_space<vmem>>, vector<16x128xf32>
    %130 = arith.addf %127, %129 : vector<16x128xf32>
    %c496 = arith.constant 496 : index
    %131 = arith.index_cast %8 : i32 to index
    %132 = vector.load %arg5[%c496, %131] : memref<512x128xf32, #tpu.memory_space<vmem>>, vector<16x128xf32>
    %133 = arith.addf %130, %132 : vector<16x128xf32>
    %cst_17 = arith.constant 2.500000e-01 : f32
    %134 = vector.broadcast %cst_17 : f32 to vector<16x128xf32>
    %135 = arith.mulf %133, %134 : vector<16x128xf32>
    %136 = arith.mulf %135, %135 : vector<16x128xf32>
    %cst_18 = arith.constant dense<0.000000e+00> : vector<128xf32>
    %137 = vector.multi_reduction <add>, %136, %cst_18 [0] : vector<16x128xf32> to vector<128xf32>
    %138 = vector.shape_cast %137 : vector<128xf32> to vector<1x128xf32>
    %139 = math.sqrt %138 : vector<1x128xf32>
    %cst_19 = arith.constant 1.000000e+00 : f32
    %140 = vector.broadcast %cst_19 : f32 to vector<1x128xf32>
    %141 = arith.addf %140, %138 : vector<1x128xf32>
    %142 = arith.divf %139, %141 : vector<1x128xf32>
    %143 = vector.broadcast %142 : vector<1x128xf32> to vector<16x128xf32>
    %144 = arith.mulf %143, %135 : vector<16x128xf32>
    %c0_20 = arith.constant 0 : index
    %145 = arith.index_cast %8 : i32 to index
    %146 = vector.load %arg5[%c0_20, %145] : memref<512x128xf32, #tpu.memory_space<vmem>>, vector<16x128xf32>
    %147 = arith.mulf %146, %42 : vector<16x128xf32>
    %cst_21 = arith.constant dense<0.000000e+00> : vector<128xf32>
    %148 = vector.multi_reduction <add>, %147, %cst_21 [0] : vector<16x128xf32> to vector<128xf32>
    %149 = vector.shape_cast %148 : vector<128xf32> to vector<1x128xf32>
    %c64_22 = arith.constant 64 : index
    %150 = arith.index_cast %8 : i32 to index
    %151 = vector.load %arg5[%c64_22, %150] : memref<512x128xf32, #tpu.memory_space<vmem>>, vector<16x128xf32>
    %152 = arith.mulf %151, %42 : vector<16x128xf32>
    %cst_23 = arith.constant dense<0.000000e+00> : vector<128xf32>
    %153 = vector.multi_reduction <add>, %152, %cst_23 [0] : vector<16x128xf32> to vector<128xf32>
    %154 = vector.shape_cast %153 : vector<128xf32> to vector<1x128xf32>
    %c128_24 = arith.constant 128 : index
    %155 = arith.index_cast %8 : i32 to index
    %156 = vector.load %arg5[%c128_24, %155] : memref<512x128xf32, #tpu.memory_space<vmem>>, vector<16x128xf32>
    %157 = arith.mulf %156, %42 : vector<16x128xf32>
    %cst_25 = arith.constant dense<0.000000e+00> : vector<128xf32>
    %158 = vector.multi_reduction <add>, %157, %cst_25 [0] : vector<16x128xf32> to vector<128xf32>
    %159 = vector.shape_cast %158 : vector<128xf32> to vector<1x128xf32>
    %c192_26 = arith.constant 192 : index
    %160 = arith.index_cast %8 : i32 to index
    %161 = vector.load %arg5[%c192_26, %160] : memref<512x128xf32, #tpu.memory_space<vmem>>, vector<16x128xf32>
    %162 = arith.mulf %161, %42 : vector<16x128xf32>
    %cst_27 = arith.constant dense<0.000000e+00> : vector<128xf32>
    %163 = vector.multi_reduction <add>, %162, %cst_27 [0] : vector<16x128xf32> to vector<128xf32>
    %164 = vector.shape_cast %163 : vector<128xf32> to vector<1x128xf32>
    %c256_28 = arith.constant 256 : index
    %165 = arith.index_cast %8 : i32 to index
    %166 = vector.load %arg5[%c256_28, %165] : memref<512x128xf32, #tpu.memory_space<vmem>>, vector<16x128xf32>
    %167 = arith.mulf %166, %42 : vector<16x128xf32>
    %cst_29 = arith.constant dense<0.000000e+00> : vector<128xf32>
    %168 = vector.multi_reduction <add>, %167, %cst_29 [0] : vector<16x128xf32> to vector<128xf32>
    %169 = vector.shape_cast %168 : vector<128xf32> to vector<1x128xf32>
    %c320_30 = arith.constant 320 : index
    %170 = arith.index_cast %8 : i32 to index
    %171 = vector.load %arg5[%c320_30, %170] : memref<512x128xf32, #tpu.memory_space<vmem>>, vector<16x128xf32>
    %172 = arith.mulf %171, %42 : vector<16x128xf32>
    %cst_31 = arith.constant dense<0.000000e+00> : vector<128xf32>
    %173 = vector.multi_reduction <add>, %172, %cst_31 [0] : vector<16x128xf32> to vector<128xf32>
    %174 = vector.shape_cast %173 : vector<128xf32> to vector<1x128xf32>
    %c384_32 = arith.constant 384 : index
    %175 = arith.index_cast %8 : i32 to index
    %176 = vector.load %arg5[%c384_32, %175] : memref<512x128xf32, #tpu.memory_space<vmem>>, vector<16x128xf32>
    %177 = arith.mulf %176, %42 : vector<16x128xf32>
    %cst_33 = arith.constant dense<0.000000e+00> : vector<128xf32>
    %178 = vector.multi_reduction <add>, %177, %cst_33 [0] : vector<16x128xf32> to vector<128xf32>
    %179 = vector.shape_cast %178 : vector<128xf32> to vector<1x128xf32>
    %c448_34 = arith.constant 448 : index
    %180 = arith.index_cast %8 : i32 to index
    %181 = vector.load %arg5[%c448_34, %180] : memref<512x128xf32, #tpu.memory_space<vmem>>, vector<16x128xf32>
    %182 = arith.mulf %181, %42 : vector<16x128xf32>
    %cst_35 = arith.constant dense<0.000000e+00> : vector<128xf32>
    %183 = vector.multi_reduction <add>, %182, %cst_35 [0] : vector<16x128xf32> to vector<128xf32>
    %184 = vector.shape_cast %183 : vector<128xf32> to vector<1x128xf32>
    %185 = tpu.concatenate %149, %154, %159, %164, %169, %174, %179, %184 in 0 : vector<1x128xf32>, vector<1x128xf32>, vector<1x128xf32>, vector<1x128xf32>, vector<1x128xf32>, vector<1x128xf32>, vector<1x128xf32>, vector<1x128xf32> -> vector<8x128xf32>
    %c16_36 = arith.constant 16 : index
    %186 = arith.index_cast %8 : i32 to index
    %187 = vector.load %arg5[%c16_36, %186] : memref<512x128xf32, #tpu.memory_space<vmem>>, vector<16x128xf32>
    %188 = arith.mulf %187, %76 : vector<16x128xf32>
    %cst_37 = arith.constant dense<0.000000e+00> : vector<128xf32>
    %189 = vector.multi_reduction <add>, %188, %cst_37 [0] : vector<16x128xf32> to vector<128xf32>
    %190 = vector.shape_cast %189 : vector<128xf32> to vector<1x128xf32>
    %c80_38 = arith.constant 80 : index
    %191 = arith.index_cast %8 : i32 to index
    %192 = vector.load %arg5[%c80_38, %191] : memref<512x128xf32, #tpu.memory_space<vmem>>, vector<16x128xf32>
    %193 = arith.mulf %192, %76 : vector<16x128xf32>
    %cst_39 = arith.constant dense<0.000000e+00> : vector<128xf32>
    %194 = vector.multi_reduction <add>, %193, %cst_39 [0] : vector<16x128xf32> to vector<128xf32>
    %195 = vector.shape_cast %194 : vector<128xf32> to vector<1x128xf32>
    %c144_40 = arith.constant 144 : index
    %196 = arith.index_cast %8 : i32 to index
    %197 = vector.load %arg5[%c144_40, %196] : memref<512x128xf32, #tpu.memory_space<vmem>>, vector<16x128xf32>
    %198 = arith.mulf %197, %76 : vector<16x128xf32>
    %cst_41 = arith.constant dense<0.000000e+00> : vector<128xf32>
    %199 = vector.multi_reduction <add>, %198, %cst_41 [0] : vector<16x128xf32> to vector<128xf32>
    %200 = vector.shape_cast %199 : vector<128xf32> to vector<1x128xf32>
    %c208_42 = arith.constant 208 : index
    %201 = arith.index_cast %8 : i32 to index
    %202 = vector.load %arg5[%c208_42, %201] : memref<512x128xf32, #tpu.memory_space<vmem>>, vector<16x128xf32>
    %203 = arith.mulf %202, %76 : vector<16x128xf32>
    %cst_43 = arith.constant dense<0.000000e+00> : vector<128xf32>
    %204 = vector.multi_reduction <add>, %203, %cst_43 [0] : vector<16x128xf32> to vector<128xf32>
    %205 = vector.shape_cast %204 : vector<128xf32> to vector<1x128xf32>
    %c272_44 = arith.constant 272 : index
    %206 = arith.index_cast %8 : i32 to index
    %207 = vector.load %arg5[%c272_44, %206] : memref<512x128xf32, #tpu.memory_space<vmem>>, vector<16x128xf32>
    %208 = arith.mulf %207, %76 : vector<16x128xf32>
    %cst_45 = arith.constant dense<0.000000e+00> : vector<128xf32>
    %209 = vector.multi_reduction <add>, %208, %cst_45 [0] : vector<16x128xf32> to vector<128xf32>
    %210 = vector.shape_cast %209 : vector<128xf32> to vector<1x128xf32>
    %c336_46 = arith.constant 336 : index
    %211 = arith.index_cast %8 : i32 to index
    %212 = vector.load %arg5[%c336_46, %211] : memref<512x128xf32, #tpu.memory_space<vmem>>, vector<16x128xf32>
    %213 = arith.mulf %212, %76 : vector<16x128xf32>
    %cst_47 = arith.constant dense<0.000000e+00> : vector<128xf32>
    %214 = vector.multi_reduction <add>, %213, %cst_47 [0] : vector<16x128xf32> to vector<128xf32>
    %215 = vector.shape_cast %214 : vector<128xf32> to vector<1x128xf32>
    %c400_48 = arith.constant 400 : index
    %216 = arith.index_cast %8 : i32 to index
    %217 = vector.load %arg5[%c400_48, %216] : memref<512x128xf32, #tpu.memory_space<vmem>>, vector<16x128xf32>
    %218 = arith.mulf %217, %76 : vector<16x128xf32>
    %cst_49 = arith.constant dense<0.000000e+00> : vector<128xf32>
    %219 = vector.multi_reduction <add>, %218, %cst_49 [0] : vector<16x128xf32> to vector<128xf32>
    %220 = vector.shape_cast %219 : vector<128xf32> to vector<1x128xf32>
    %c464_50 = arith.constant 464 : index
    %221 = arith.index_cast %8 : i32 to index
    %222 = vector.load %arg5[%c464_50, %221] : memref<512x128xf32, #tpu.memory_space<vmem>>, vector<16x128xf32>
    %223 = arith.mulf %222, %76 : vector<16x128xf32>
    %cst_51 = arith.constant dense<0.000000e+00> : vector<128xf32>
    %224 = vector.multi_reduction <add>, %223, %cst_51 [0] : vector<16x128xf32> to vector<128xf32>
    %225 = vector.shape_cast %224 : vector<128xf32> to vector<1x128xf32>
    %226 = tpu.concatenate %190, %195, %200, %205, %210, %215, %220, %225 in 0 : vector<1x128xf32>, vector<1x128xf32>, vector<1x128xf32>, vector<1x128xf32>, vector<1x128xf32>, vector<1x128xf32>, vector<1x128xf32>, vector<1x128xf32> -> vector<8x128xf32>
    %c32_52 = arith.constant 32 : index
    %227 = arith.index_cast %8 : i32 to index
    %228 = vector.load %arg5[%c32_52, %227] : memref<512x128xf32, #tpu.memory_space<vmem>>, vector<16x128xf32>
    %229 = arith.mulf %228, %110 : vector<16x128xf32>
    %cst_53 = arith.constant dense<0.000000e+00> : vector<128xf32>
    %230 = vector.multi_reduction <add>, %229, %cst_53 [0] : vector<16x128xf32> to vector<128xf32>
    %231 = vector.shape_cast %230 : vector<128xf32> to vector<1x128xf32>
    %c96_54 = arith.constant 96 : index
    %232 = arith.index_cast %8 : i32 to index
    %233 = vector.load %arg5[%c96_54, %232] : memref<512x128xf32, #tpu.memory_space<vmem>>, vector<16x128xf32>
    %234 = arith.mulf %233, %110 : vector<16x128xf32>
    %cst_55 = arith.constant dense<0.000000e+00> : vector<128xf32>
    %235 = vector.multi_reduction <add>, %234, %cst_55 [0] : vector<16x128xf32> to vector<128xf32>
    %236 = vector.shape_cast %235 : vector<128xf32> to vector<1x128xf32>
    %c160_56 = arith.constant 160 : index
    %237 = arith.index_cast %8 : i32 to index
    %238 = vector.load %arg5[%c160_56, %237] : memref<512x128xf32, #tpu.memory_space<vmem>>, vector<16x128xf32>
    %239 = arith.mulf %238, %110 : vector<16x128xf32>
    %cst_57 = arith.constant dense<0.000000e+00> : vector<128xf32>
    %240 = vector.multi_reduction <add>, %239, %cst_57 [0] : vector<16x128xf32> to vector<128xf32>
    %241 = vector.shape_cast %240 : vector<128xf32> to vector<1x128xf32>
    %c224_58 = arith.constant 224 : index
    %242 = arith.index_cast %8 : i32 to index
    %243 = vector.load %arg5[%c224_58, %242] : memref<512x128xf32, #tpu.memory_space<vmem>>, vector<16x128xf32>
    %244 = arith.mulf %243, %110 : vector<16x128xf32>
    %cst_59 = arith.constant dense<0.000000e+00> : vector<128xf32>
    %245 = vector.multi_reduction <add>, %244, %cst_59 [0] : vector<16x128xf32> to vector<128xf32>
    %246 = vector.shape_cast %245 : vector<128xf32> to vector<1x128xf32>
    %c288_60 = arith.constant 288 : index
    %247 = arith.index_cast %8 : i32 to index
    %248 = vector.load %arg5[%c288_60, %247] : memref<512x128xf32, #tpu.memory_space<vmem>>, vector<16x128xf32>
    %249 = arith.mulf %248, %110 : vector<16x128xf32>
    %cst_61 = arith.constant dense<0.000000e+00> : vector<128xf32>
    %250 = vector.multi_reduction <add>, %249, %cst_61 [0] : vector<16x128xf32> to vector<128xf32>
    %251 = vector.shape_cast %250 : vector<128xf32> to vector<1x128xf32>
    %c352_62 = arith.constant 352 : index
    %252 = arith.index_cast %8 : i32 to index
    %253 = vector.load %arg5[%c352_62, %252] : memref<512x128xf32, #tpu.memory_space<vmem>>, vector<16x128xf32>
    %254 = arith.mulf %253, %110 : vector<16x128xf32>
    %cst_63 = arith.constant dense<0.000000e+00> : vector<128xf32>
    %255 = vector.multi_reduction <add>, %254, %cst_63 [0] : vector<16x128xf32> to vector<128xf32>
    %256 = vector.shape_cast %255 : vector<128xf32> to vector<1x128xf32>
    %c416_64 = arith.constant 416 : index
    %257 = arith.index_cast %8 : i32 to index
    %258 = vector.load %arg5[%c416_64, %257] : memref<512x128xf32, #tpu.memory_space<vmem>>, vector<16x128xf32>
    %259 = arith.mulf %258, %110 : vector<16x128xf32>
    %cst_65 = arith.constant dense<0.000000e+00> : vector<128xf32>
    %260 = vector.multi_reduction <add>, %259, %cst_65 [0] : vector<16x128xf32> to vector<128xf32>
    %261 = vector.shape_cast %260 : vector<128xf32> to vector<1x128xf32>
    %c480_66 = arith.constant 480 : index
    %262 = arith.index_cast %8 : i32 to index
    %263 = vector.load %arg5[%c480_66, %262] : memref<512x128xf32, #tpu.memory_space<vmem>>, vector<16x128xf32>
    %264 = arith.mulf %263, %110 : vector<16x128xf32>
    %cst_67 = arith.constant dense<0.000000e+00> : vector<128xf32>
    %265 = vector.multi_reduction <add>, %264, %cst_67 [0] : vector<16x128xf32> to vector<128xf32>
    %266 = vector.shape_cast %265 : vector<128xf32> to vector<1x128xf32>
    %267 = tpu.concatenate %231, %236, %241, %246, %251, %256, %261, %266 in 0 : vector<1x128xf32>, vector<1x128xf32>, vector<1x128xf32>, vector<1x128xf32>, vector<1x128xf32>, vector<1x128xf32>, vector<1x128xf32>, vector<1x128xf32> -> vector<8x128xf32>
    %c48_68 = arith.constant 48 : index
    %268 = arith.index_cast %8 : i32 to index
    %269 = vector.load %arg5[%c48_68, %268] : memref<512x128xf32, #tpu.memory_space<vmem>>, vector<16x128xf32>
    %270 = arith.mulf %269, %144 : vector<16x128xf32>
    %cst_69 = arith.constant dense<0.000000e+00> : vector<128xf32>
    %271 = vector.multi_reduction <add>, %270, %cst_69 [0] : vector<16x128xf32> to vector<128xf32>
    %272 = vector.shape_cast %271 : vector<128xf32> to vector<1x128xf32>
    %c112_70 = arith.constant 112 : index
    %273 = arith.index_cast %8 : i32 to index
    %274 = vector.load %arg5[%c112_70, %273] : memref<512x128xf32, #tpu.memory_space<vmem>>, vector<16x128xf32>
    %275 = arith.mulf %274, %144 : vector<16x128xf32>
    %cst_71 = arith.constant dense<0.000000e+00> : vector<128xf32>
    %276 = vector.multi_reduction <add>, %275, %cst_71 [0] : vector<16x128xf32> to vector<128xf32>
    %277 = vector.shape_cast %276 : vector<128xf32> to vector<1x128xf32>
    %c176_72 = arith.constant 176 : index
    %278 = arith.index_cast %8 : i32 to index
    %279 = vector.load %arg5[%c176_72, %278] : memref<512x128xf32, #tpu.memory_space<vmem>>, vector<16x128xf32>
    %280 = arith.mulf %279, %144 : vector<16x128xf32>
    %cst_73 = arith.constant dense<0.000000e+00> : vector<128xf32>
    %281 = vector.multi_reduction <add>, %280, %cst_73 [0] : vector<16x128xf32> to vector<128xf32>
    %282 = vector.shape_cast %281 : vector<128xf32> to vector<1x128xf32>
    %c240_74 = arith.constant 240 : index
    %283 = arith.index_cast %8 : i32 to index
    %284 = vector.load %arg5[%c240_74, %283] : memref<512x128xf32, #tpu.memory_space<vmem>>, vector<16x128xf32>
    %285 = arith.mulf %284, %144 : vector<16x128xf32>
    %cst_75 = arith.constant dense<0.000000e+00> : vector<128xf32>
    %286 = vector.multi_reduction <add>, %285, %cst_75 [0] : vector<16x128xf32> to vector<128xf32>
    %287 = vector.shape_cast %286 : vector<128xf32> to vector<1x128xf32>
    %c304_76 = arith.constant 304 : index
    %288 = arith.index_cast %8 : i32 to index
    %289 = vector.load %arg5[%c304_76, %288] : memref<512x128xf32, #tpu.memory_space<vmem>>, vector<16x128xf32>
    %290 = arith.mulf %289, %144 : vector<16x128xf32>
    %cst_77 = arith.constant dense<0.000000e+00> : vector<128xf32>
    %291 = vector.multi_reduction <add>, %290, %cst_77 [0] : vector<16x128xf32> to vector<128xf32>
    %292 = vector.shape_cast %291 : vector<128xf32> to vector<1x128xf32>
    %c368_78 = arith.constant 368 : index
    %293 = arith.index_cast %8 : i32 to index
    %294 = vector.load %arg5[%c368_78, %293] : memref<512x128xf32, #tpu.memory_space<vmem>>, vector<16x128xf32>
    %295 = arith.mulf %294, %144 : vector<16x128xf32>
    %cst_79 = arith.constant dense<0.000000e+00> : vector<128xf32>
    %296 = vector.multi_reduction <add>, %295, %cst_79 [0] : vector<16x128xf32> to vector<128xf32>
    %297 = vector.shape_cast %296 : vector<128xf32> to vector<1x128xf32>
    %c432_80 = arith.constant 432 : index
    %298 = arith.index_cast %8 : i32 to index
    %299 = vector.load %arg5[%c432_80, %298] : memref<512x128xf32, #tpu.memory_space<vmem>>, vector<16x128xf32>
    %300 = arith.mulf %299, %144 : vector<16x128xf32>
    %cst_81 = arith.constant dense<0.000000e+00> : vector<128xf32>
    %301 = vector.multi_reduction <add>, %300, %cst_81 [0] : vector<16x128xf32> to vector<128xf32>
    %302 = vector.shape_cast %301 : vector<128xf32> to vector<1x128xf32>
    %c496_82 = arith.constant 496 : index
    %303 = arith.index_cast %8 : i32 to index
    %304 = vector.load %arg5[%c496_82, %303] : memref<512x128xf32, #tpu.memory_space<vmem>>, vector<16x128xf32>
    %305 = arith.mulf %304, %144 : vector<16x128xf32>
    %cst_83 = arith.constant dense<0.000000e+00> : vector<128xf32>
    %306 = vector.multi_reduction <add>, %305, %cst_83 [0] : vector<16x128xf32> to vector<128xf32>
    %307 = vector.shape_cast %306 : vector<128xf32> to vector<1x128xf32>
    %308 = tpu.concatenate %272, %277, %282, %287, %292, %297, %302, %307 in 0 : vector<1x128xf32>, vector<1x128xf32>, vector<1x128xf32>, vector<1x128xf32>, vector<1x128xf32>, vector<1x128xf32>, vector<1x128xf32>, vector<1x128xf32> -> vector<8x128xf32>
    %309 = arith.maximumf %185, %226 : vector<8x128xf32>
    %310 = arith.maximumf %309, %267 : vector<8x128xf32>
    %311 = arith.maximumf %310, %308 : vector<8x128xf32>
    %312 = arith.subf %185, %311 : vector<8x128xf32>
    %313 = math.exp %312 : vector<8x128xf32>
    %314 = arith.subf %226, %311 : vector<8x128xf32>
    %315 = math.exp %314 : vector<8x128xf32>
    %316 = arith.subf %267, %311 : vector<8x128xf32>
    %317 = math.exp %316 : vector<8x128xf32>
    %318 = arith.subf %308, %311 : vector<8x128xf32>
    %319 = math.exp %318 : vector<8x128xf32>
    %320 = arith.addf %313, %315 : vector<8x128xf32>
    %321 = arith.addf %320, %317 : vector<8x128xf32>
    %322 = arith.addf %321, %319 : vector<8x128xf32>
    %323 = arith.divf %313, %322 : vector<8x128xf32>
    %324 = arith.divf %315, %322 : vector<8x128xf32>
    %325 = arith.divf %317, %322 : vector<8x128xf32>
    %326 = arith.divf %319, %322 : vector<8x128xf32>
    %327 = vector.extract_strided_slice %323 {offsets = [0, 0], sizes = [1, 128], strides = [1, 1]} : vector<8x128xf32> to vector<1x128xf32>
    %c0_84 = arith.constant 0 : index
    %328 = arith.index_cast %8 : i32 to index
    %329 = vector.load %arg5[%c0_84, %328] : memref<512x128xf32, #tpu.memory_space<vmem>>, vector<16x128xf32>
    %330 = vector.broadcast %327 : vector<1x128xf32> to vector<16x128xf32>
    %331 = arith.mulf %330, %329 : vector<16x128xf32>
    %332 = vector.extract_strided_slice %323 {offsets = [1, 0], sizes = [1, 128], strides = [1, 1]} : vector<8x128xf32> to vector<1x128xf32>
    %c64_85 = arith.constant 64 : index
    %333 = arith.index_cast %8 : i32 to index
    %334 = vector.load %arg5[%c64_85, %333] : memref<512x128xf32, #tpu.memory_space<vmem>>, vector<16x128xf32>
    %335 = vector.broadcast %332 : vector<1x128xf32> to vector<16x128xf32>
    %336 = arith.mulf %335, %334 : vector<16x128xf32>
    %337 = arith.addf %331, %336 : vector<16x128xf32>
    %338 = vector.extract_strided_slice %323 {offsets = [2, 0], sizes = [1, 128], strides = [1, 1]} : vector<8x128xf32> to vector<1x128xf32>
    %c128_86 = arith.constant 128 : index
    %339 = arith.index_cast %8 : i32 to index
    %340 = vector.load %arg5[%c128_86, %339] : memref<512x128xf32, #tpu.memory_space<vmem>>, vector<16x128xf32>
    %341 = vector.broadcast %338 : vector<1x128xf32> to vector<16x128xf32>
    %342 = arith.mulf %341, %340 : vector<16x128xf32>
    %343 = arith.addf %337, %342 : vector<16x128xf32>
    %344 = vector.extract_strided_slice %323 {offsets = [3, 0], sizes = [1, 128], strides = [1, 1]} : vector<8x128xf32> to vector<1x128xf32>
    %c192_87 = arith.constant 192 : index
    %345 = arith.index_cast %8 : i32 to index
    %346 = vector.load %arg5[%c192_87, %345] : memref<512x128xf32, #tpu.memory_space<vmem>>, vector<16x128xf32>
    %347 = vector.broadcast %344 : vector<1x128xf32> to vector<16x128xf32>
    %348 = arith.mulf %347, %346 : vector<16x128xf32>
    %349 = arith.addf %343, %348 : vector<16x128xf32>
    %350 = vector.extract_strided_slice %323 {offsets = [4, 0], sizes = [1, 128], strides = [1, 1]} : vector<8x128xf32> to vector<1x128xf32>
    %c256_88 = arith.constant 256 : index
    %351 = arith.index_cast %8 : i32 to index
    %352 = vector.load %arg5[%c256_88, %351] : memref<512x128xf32, #tpu.memory_space<vmem>>, vector<16x128xf32>
    %353 = vector.broadcast %350 : vector<1x128xf32> to vector<16x128xf32>
    %354 = arith.mulf %353, %352 : vector<16x128xf32>
    %355 = arith.addf %349, %354 : vector<16x128xf32>
    %356 = vector.extract_strided_slice %323 {offsets = [5, 0], sizes = [1, 128], strides = [1, 1]} : vector<8x128xf32> to vector<1x128xf32>
    %c320_89 = arith.constant 320 : index
    %357 = arith.index_cast %8 : i32 to index
    %358 = vector.load %arg5[%c320_89, %357] : memref<512x128xf32, #tpu.memory_space<vmem>>, vector<16x128xf32>
    %359 = vector.broadcast %356 : vector<1x128xf32> to vector<16x128xf32>
    %360 = arith.mulf %359, %358 : vector<16x128xf32>
    %361 = arith.addf %355, %360 : vector<16x128xf32>
    %362 = vector.extract_strided_slice %323 {offsets = [6, 0], sizes = [1, 128], strides = [1, 1]} : vector<8x128xf32> to vector<1x128xf32>
    %c384_90 = arith.constant 384 : index
    %363 = arith.index_cast %8 : i32 to index
    %364 = vector.load %arg5[%c384_90, %363] : memref<512x128xf32, #tpu.memory_space<vmem>>, vector<16x128xf32>
    %365 = vector.broadcast %362 : vector<1x128xf32> to vector<16x128xf32>
    %366 = arith.mulf %365, %364 : vector<16x128xf32>
    %367 = arith.addf %361, %366 : vector<16x128xf32>
    %368 = vector.extract_strided_slice %323 {offsets = [7, 0], sizes = [1, 128], strides = [1, 1]} : vector<8x128xf32> to vector<1x128xf32>
    %c448_91 = arith.constant 448 : index
    %369 = arith.index_cast %8 : i32 to index
    %370 = vector.load %arg5[%c448_91, %369] : memref<512x128xf32, #tpu.memory_space<vmem>>, vector<16x128xf32>
    %371 = vector.broadcast %368 : vector<1x128xf32> to vector<16x128xf32>
    %372 = arith.mulf %371, %370 : vector<16x128xf32>
    %373 = arith.addf %367, %372 : vector<16x128xf32>
    %374 = arith.mulf %373, %373 : vector<16x128xf32>
    %cst_92 = arith.constant dense<0.000000e+00> : vector<128xf32>
    %375 = vector.multi_reduction <add>, %374, %cst_92 [0] : vector<16x128xf32> to vector<128xf32>
    %376 = vector.shape_cast %375 : vector<128xf32> to vector<1x128xf32>
    %377 = math.sqrt %376 : vector<1x128xf32>
    %cst_93 = arith.constant 1.000000e+00 : f32
    %378 = vector.broadcast %cst_93 : f32 to vector<1x128xf32>
    %379 = arith.addf %378, %376 : vector<1x128xf32>
    %380 = arith.divf %377, %379 : vector<1x128xf32>
    %381 = vector.broadcast %380 : vector<1x128xf32> to vector<16x128xf32>
    %382 = arith.mulf %381, %373 : vector<16x128xf32>
    %383 = vector.extract_strided_slice %324 {offsets = [0, 0], sizes = [1, 128], strides = [1, 1]} : vector<8x128xf32> to vector<1x128xf32>
    %c16_94 = arith.constant 16 : index
    %384 = arith.index_cast %8 : i32 to index
    %385 = vector.load %arg5[%c16_94, %384] : memref<512x128xf32, #tpu.memory_space<vmem>>, vector<16x128xf32>
    %386 = vector.broadcast %383 : vector<1x128xf32> to vector<16x128xf32>
    %387 = arith.mulf %386, %385 : vector<16x128xf32>
    %388 = vector.extract_strided_slice %324 {offsets = [1, 0], sizes = [1, 128], strides = [1, 1]} : vector<8x128xf32> to vector<1x128xf32>
    %c80_95 = arith.constant 80 : index
    %389 = arith.index_cast %8 : i32 to index
    %390 = vector.load %arg5[%c80_95, %389] : memref<512x128xf32, #tpu.memory_space<vmem>>, vector<16x128xf32>
    %391 = vector.broadcast %388 : vector<1x128xf32> to vector<16x128xf32>
    %392 = arith.mulf %391, %390 : vector<16x128xf32>
    %393 = arith.addf %387, %392 : vector<16x128xf32>
    %394 = vector.extract_strided_slice %324 {offsets = [2, 0], sizes = [1, 128], strides = [1, 1]} : vector<8x128xf32> to vector<1x128xf32>
    %c144_96 = arith.constant 144 : index
    %395 = arith.index_cast %8 : i32 to index
    %396 = vector.load %arg5[%c144_96, %395] : memref<512x128xf32, #tpu.memory_space<vmem>>, vector<16x128xf32>
    %397 = vector.broadcast %394 : vector<1x128xf32> to vector<16x128xf32>
    %398 = arith.mulf %397, %396 : vector<16x128xf32>
    %399 = arith.addf %393, %398 : vector<16x128xf32>
    %400 = vector.extract_strided_slice %324 {offsets = [3, 0], sizes = [1, 128], strides = [1, 1]} : vector<8x128xf32> to vector<1x128xf32>
    %c208_97 = arith.constant 208 : index
    %401 = arith.index_cast %8 : i32 to index
    %402 = vector.load %arg5[%c208_97, %401] : memref<512x128xf32, #tpu.memory_space<vmem>>, vector<16x128xf32>
    %403 = vector.broadcast %400 : vector<1x128xf32> to vector<16x128xf32>
    %404 = arith.mulf %403, %402 : vector<16x128xf32>
    %405 = arith.addf %399, %404 : vector<16x128xf32>
    %406 = vector.extract_strided_slice %324 {offsets = [4, 0], sizes = [1, 128], strides = [1, 1]} : vector<8x128xf32> to vector<1x128xf32>
    %c272_98 = arith.constant 272 : index
    %407 = arith.index_cast %8 : i32 to index
    %408 = vector.load %arg5[%c272_98, %407] : memref<512x128xf32, #tpu.memory_space<vmem>>, vector<16x128xf32>
    %409 = vector.broadcast %406 : vector<1x128xf32> to vector<16x128xf32>
    %410 = arith.mulf %409, %408 : vector<16x128xf32>
    %411 = arith.addf %405, %410 : vector<16x128xf32>
    %412 = vector.extract_strided_slice %324 {offsets = [5, 0], sizes = [1, 128], strides = [1, 1]} : vector<8x128xf32> to vector<1x128xf32>
    %c336_99 = arith.constant 336 : index
    %413 = arith.index_cast %8 : i32 to index
    %414 = vector.load %arg5[%c336_99, %413] : memref<512x128xf32, #tpu.memory_space<vmem>>, vector<16x128xf32>
    %415 = vector.broadcast %412 : vector<1x128xf32> to vector<16x128xf32>
    %416 = arith.mulf %415, %414 : vector<16x128xf32>
    %417 = arith.addf %411, %416 : vector<16x128xf32>
    %418 = vector.extract_strided_slice %324 {offsets = [6, 0], sizes = [1, 128], strides = [1, 1]} : vector<8x128xf32> to vector<1x128xf32>
    %c400_100 = arith.constant 400 : index
    %419 = arith.index_cast %8 : i32 to index
    %420 = vector.load %arg5[%c400_100, %419] : memref<512x128xf32, #tpu.memory_space<vmem>>, vector<16x128xf32>
    %421 = vector.broadcast %418 : vector<1x128xf32> to vector<16x128xf32>
    %422 = arith.mulf %421, %420 : vector<16x128xf32>
    %423 = arith.addf %417, %422 : vector<16x128xf32>
    %424 = vector.extract_strided_slice %324 {offsets = [7, 0], sizes = [1, 128], strides = [1, 1]} : vector<8x128xf32> to vector<1x128xf32>
    %c464_101 = arith.constant 464 : index
    %425 = arith.index_cast %8 : i32 to index
    %426 = vector.load %arg5[%c464_101, %425] : memref<512x128xf32, #tpu.memory_space<vmem>>, vector<16x128xf32>
    %427 = vector.broadcast %424 : vector<1x128xf32> to vector<16x128xf32>
    %428 = arith.mulf %427, %426 : vector<16x128xf32>
    %429 = arith.addf %423, %428 : vector<16x128xf32>
    %430 = arith.mulf %429, %429 : vector<16x128xf32>
    %cst_102 = arith.constant dense<0.000000e+00> : vector<128xf32>
    %431 = vector.multi_reduction <add>, %430, %cst_102 [0] : vector<16x128xf32> to vector<128xf32>
    %432 = vector.shape_cast %431 : vector<128xf32> to vector<1x128xf32>
    %433 = math.sqrt %432 : vector<1x128xf32>
    %cst_103 = arith.constant 1.000000e+00 : f32
    %434 = vector.broadcast %cst_103 : f32 to vector<1x128xf32>
    %435 = arith.addf %434, %432 : vector<1x128xf32>
    %436 = arith.divf %433, %435 : vector<1x128xf32>
    %437 = vector.broadcast %436 : vector<1x128xf32> to vector<16x128xf32>
    %438 = arith.mulf %437, %429 : vector<16x128xf32>
    %439 = vector.extract_strided_slice %325 {offsets = [0, 0], sizes = [1, 128], strides = [1, 1]} : vector<8x128xf32> to vector<1x128xf32>
    %c32_104 = arith.constant 32 : index
    %440 = arith.index_cast %8 : i32 to index
    %441 = vector.load %arg5[%c32_104, %440] : memref<512x128xf32, #tpu.memory_space<vmem>>, vector<16x128xf32>
    %442 = vector.broadcast %439 : vector<1x128xf32> to vector<16x128xf32>
    %443 = arith.mulf %442, %441 : vector<16x128xf32>
    %444 = vector.extract_strided_slice %325 {offsets = [1, 0], sizes = [1, 128], strides = [1, 1]} : vector<8x128xf32> to vector<1x128xf32>
    %c96_105 = arith.constant 96 : index
    %445 = arith.index_cast %8 : i32 to index
    %446 = vector.load %arg5[%c96_105, %445] : memref<512x128xf32, #tpu.memory_space<vmem>>, vector<16x128xf32>
    %447 = vector.broadcast %444 : vector<1x128xf32> to vector<16x128xf32>
    %448 = arith.mulf %447, %446 : vector<16x128xf32>
    %449 = arith.addf %443, %448 : vector<16x128xf32>
    %450 = vector.extract_strided_slice %325 {offsets = [2, 0], sizes = [1, 128], strides = [1, 1]} : vector<8x128xf32> to vector<1x128xf32>
    %c160_106 = arith.constant 160 : index
    %451 = arith.index_cast %8 : i32 to index
    %452 = vector.load %arg5[%c160_106, %451] : memref<512x128xf32, #tpu.memory_space<vmem>>, vector<16x128xf32>
    %453 = vector.broadcast %450 : vector<1x128xf32> to vector<16x128xf32>
    %454 = arith.mulf %453, %452 : vector<16x128xf32>
    %455 = arith.addf %449, %454 : vector<16x128xf32>
    %456 = vector.extract_strided_slice %325 {offsets = [3, 0], sizes = [1, 128], strides = [1, 1]} : vector<8x128xf32> to vector<1x128xf32>
    %c224_107 = arith.constant 224 : index
    %457 = arith.index_cast %8 : i32 to index
    %458 = vector.load %arg5[%c224_107, %457] : memref<512x128xf32, #tpu.memory_space<vmem>>, vector<16x128xf32>
    %459 = vector.broadcast %456 : vector<1x128xf32> to vector<16x128xf32>
    %460 = arith.mulf %459, %458 : vector<16x128xf32>
    %461 = arith.addf %455, %460 : vector<16x128xf32>
    %462 = vector.extract_strided_slice %325 {offsets = [4, 0], sizes = [1, 128], strides = [1, 1]} : vector<8x128xf32> to vector<1x128xf32>
    %c288_108 = arith.constant 288 : index
    %463 = arith.index_cast %8 : i32 to index
    %464 = vector.load %arg5[%c288_108, %463] : memref<512x128xf32, #tpu.memory_space<vmem>>, vector<16x128xf32>
    %465 = vector.broadcast %462 : vector<1x128xf32> to vector<16x128xf32>
    %466 = arith.mulf %465, %464 : vector<16x128xf32>
    %467 = arith.addf %461, %466 : vector<16x128xf32>
    %468 = vector.extract_strided_slice %325 {offsets = [5, 0], sizes = [1, 128], strides = [1, 1]} : vector<8x128xf32> to vector<1x128xf32>
    %c352_109 = arith.constant 352 : index
    %469 = arith.index_cast %8 : i32 to index
    %470 = vector.load %arg5[%c352_109, %469] : memref<512x128xf32, #tpu.memory_space<vmem>>, vector<16x128xf32>
    %471 = vector.broadcast %468 : vector<1x128xf32> to vector<16x128xf32>
    %472 = arith.mulf %471, %470 : vector<16x128xf32>
    %473 = arith.addf %467, %472 : vector<16x128xf32>
    %474 = vector.extract_strided_slice %325 {offsets = [6, 0], sizes = [1, 128], strides = [1, 1]} : vector<8x128xf32> to vector<1x128xf32>
    %c416_110 = arith.constant 416 : index
    %475 = arith.index_cast %8 : i32 to index
    %476 = vector.load %arg5[%c416_110, %475] : memref<512x128xf32, #tpu.memory_space<vmem>>, vector<16x128xf32>
    %477 = vector.broadcast %474 : vector<1x128xf32> to vector<16x128xf32>
    %478 = arith.mulf %477, %476 : vector<16x128xf32>
    %479 = arith.addf %473, %478 : vector<16x128xf32>
    %480 = vector.extract_strided_slice %325 {offsets = [7, 0], sizes = [1, 128], strides = [1, 1]} : vector<8x128xf32> to vector<1x128xf32>
    %c480_111 = arith.constant 480 : index
    %481 = arith.index_cast %8 : i32 to index
    %482 = vector.load %arg5[%c480_111, %481] : memref<512x128xf32, #tpu.memory_space<vmem>>, vector<16x128xf32>
    %483 = vector.broadcast %480 : vector<1x128xf32> to vector<16x128xf32>
    %484 = arith.mulf %483, %482 : vector<16x128xf32>
    %485 = arith.addf %479, %484 : vector<16x128xf32>
    %486 = arith.mulf %485, %485 : vector<16x128xf32>
    %cst_112 = arith.constant dense<0.000000e+00> : vector<128xf32>
    %487 = vector.multi_reduction <add>, %486, %cst_112 [0] : vector<16x128xf32> to vector<128xf32>
    %488 = vector.shape_cast %487 : vector<128xf32> to vector<1x128xf32>
    %489 = math.sqrt %488 : vector<1x128xf32>
    %cst_113 = arith.constant 1.000000e+00 : f32
    %490 = vector.broadcast %cst_113 : f32 to vector<1x128xf32>
    %491 = arith.addf %490, %488 : vector<1x128xf32>
    %492 = arith.divf %489, %491 : vector<1x128xf32>
    %493 = vector.broadcast %492 : vector<1x128xf32> to vector<16x128xf32>
    %494 = arith.mulf %493, %485 : vector<16x128xf32>
    %495 = vector.extract_strided_slice %326 {offsets = [0, 0], sizes = [1, 128], strides = [1, 1]} : vector<8x128xf32> to vector<1x128xf32>
    %c48_114 = arith.constant 48 : index
    %496 = arith.index_cast %8 : i32 to index
    %497 = vector.load %arg5[%c48_114, %496] : memref<512x128xf32, #tpu.memory_space<vmem>>, vector<16x128xf32>
    %498 = vector.broadcast %495 : vector<1x128xf32> to vector<16x128xf32>
    %499 = arith.mulf %498, %497 : vector<16x128xf32>
    %500 = vector.extract_strided_slice %326 {offsets = [1, 0], sizes = [1, 128], strides = [1, 1]} : vector<8x128xf32> to vector<1x128xf32>
    %c112_115 = arith.constant 112 : index
    %501 = arith.index_cast %8 : i32 to index
    %502 = vector.load %arg5[%c112_115, %501] : memref<512x128xf32, #tpu.memory_space<vmem>>, vector<16x128xf32>
    %503 = vector.broadcast %500 : vector<1x128xf32> to vector<16x128xf32>
    %504 = arith.mulf %503, %502 : vector<16x128xf32>
    %505 = arith.addf %499, %504 : vector<16x128xf32>
    %506 = vector.extract_strided_slice %326 {offsets = [2, 0], sizes = [1, 128], strides = [1, 1]} : vector<8x128xf32> to vector<1x128xf32>
    %c176_116 = arith.constant 176 : index
    %507 = arith.index_cast %8 : i32 to index
    %508 = vector.load %arg5[%c176_116, %507] : memref<512x128xf32, #tpu.memory_space<vmem>>, vector<16x128xf32>
    %509 = vector.broadcast %506 : vector<1x128xf32> to vector<16x128xf32>
    %510 = arith.mulf %509, %508 : vector<16x128xf32>
    %511 = arith.addf %505, %510 : vector<16x128xf32>
    %512 = vector.extract_strided_slice %326 {offsets = [3, 0], sizes = [1, 128], strides = [1, 1]} : vector<8x128xf32> to vector<1x128xf32>
    %c240_117 = arith.constant 240 : index
    %513 = arith.index_cast %8 : i32 to index
    %514 = vector.load %arg5[%c240_117, %513] : memref<512x128xf32, #tpu.memory_space<vmem>>, vector<16x128xf32>
    %515 = vector.broadcast %512 : vector<1x128xf32> to vector<16x128xf32>
    %516 = arith.mulf %515, %514 : vector<16x128xf32>
    %517 = arith.addf %511, %516 : vector<16x128xf32>
    %518 = vector.extract_strided_slice %326 {offsets = [4, 0], sizes = [1, 128], strides = [1, 1]} : vector<8x128xf32> to vector<1x128xf32>
    %c304_118 = arith.constant 304 : index
    %519 = arith.index_cast %8 : i32 to index
    %520 = vector.load %arg5[%c304_118, %519] : memref<512x128xf32, #tpu.memory_space<vmem>>, vector<16x128xf32>
    %521 = vector.broadcast %518 : vector<1x128xf32> to vector<16x128xf32>
    %522 = arith.mulf %521, %520 : vector<16x128xf32>
    %523 = arith.addf %517, %522 : vector<16x128xf32>
    %524 = vector.extract_strided_slice %326 {offsets = [5, 0], sizes = [1, 128], strides = [1, 1]} : vector<8x128xf32> to vector<1x128xf32>
    %c368_119 = arith.constant 368 : index
    %525 = arith.index_cast %8 : i32 to index
    %526 = vector.load %arg5[%c368_119, %525] : memref<512x128xf32, #tpu.memory_space<vmem>>, vector<16x128xf32>
    %527 = vector.broadcast %524 : vector<1x128xf32> to vector<16x128xf32>
    %528 = arith.mulf %527, %526 : vector<16x128xf32>
    %529 = arith.addf %523, %528 : vector<16x128xf32>
    %530 = vector.extract_strided_slice %326 {offsets = [6, 0], sizes = [1, 128], strides = [1, 1]} : vector<8x128xf32> to vector<1x128xf32>
    %c432_120 = arith.constant 432 : index
    %531 = arith.index_cast %8 : i32 to index
    %532 = vector.load %arg5[%c432_120, %531] : memref<512x128xf32, #tpu.memory_space<vmem>>, vector<16x128xf32>
    %533 = vector.broadcast %530 : vector<1x128xf32> to vector<16x128xf32>
    %534 = arith.mulf %533, %532 : vector<16x128xf32>
    %535 = arith.addf %529, %534 : vector<16x128xf32>
    %536 = vector.extract_strided_slice %326 {offsets = [7, 0], sizes = [1, 128], strides = [1, 1]} : vector<8x128xf32> to vector<1x128xf32>
    %c496_121 = arith.constant 496 : index
    %537 = arith.index_cast %8 : i32 to index
    %538 = vector.load %arg5[%c496_121, %537] : memref<512x128xf32, #tpu.memory_space<vmem>>, vector<16x128xf32>
    %539 = vector.broadcast %536 : vector<1x128xf32> to vector<16x128xf32>
    %540 = arith.mulf %539, %538 : vector<16x128xf32>
    %541 = arith.addf %535, %540 : vector<16x128xf32>
    %542 = arith.mulf %541, %541 : vector<16x128xf32>
    %cst_122 = arith.constant dense<0.000000e+00> : vector<128xf32>
    %543 = vector.multi_reduction <add>, %542, %cst_122 [0] : vector<16x128xf32> to vector<128xf32>
    %544 = vector.shape_cast %543 : vector<128xf32> to vector<1x128xf32>
    %545 = math.sqrt %544 : vector<1x128xf32>
    %cst_123 = arith.constant 1.000000e+00 : f32
    %546 = vector.broadcast %cst_123 : f32 to vector<1x128xf32>
    %547 = arith.addf %546, %544 : vector<1x128xf32>
    %548 = arith.divf %545, %547 : vector<1x128xf32>
    %549 = vector.broadcast %548 : vector<1x128xf32> to vector<16x128xf32>
    %550 = arith.mulf %549, %541 : vector<16x128xf32>
    %c0_124 = arith.constant 0 : index
    %551 = arith.index_cast %8 : i32 to index
    %552 = vector.load %arg5[%c0_124, %551] : memref<512x128xf32, #tpu.memory_space<vmem>>, vector<16x128xf32>
    %553 = arith.mulf %552, %382 : vector<16x128xf32>
    %cst_125 = arith.constant dense<0.000000e+00> : vector<128xf32>
    %554 = vector.multi_reduction <add>, %553, %cst_125 [0] : vector<16x128xf32> to vector<128xf32>
    %555 = vector.shape_cast %554 : vector<128xf32> to vector<1x128xf32>
    %c64_126 = arith.constant 64 : index
    %556 = arith.index_cast %8 : i32 to index
    %557 = vector.load %arg5[%c64_126, %556] : memref<512x128xf32, #tpu.memory_space<vmem>>, vector<16x128xf32>
    %558 = arith.mulf %557, %382 : vector<16x128xf32>
    %cst_127 = arith.constant dense<0.000000e+00> : vector<128xf32>
    %559 = vector.multi_reduction <add>, %558, %cst_127 [0] : vector<16x128xf32> to vector<128xf32>
    %560 = vector.shape_cast %559 : vector<128xf32> to vector<1x128xf32>
    %c128_128 = arith.constant 128 : index
    %561 = arith.index_cast %8 : i32 to index
    %562 = vector.load %arg5[%c128_128, %561] : memref<512x128xf32, #tpu.memory_space<vmem>>, vector<16x128xf32>
    %563 = arith.mulf %562, %382 : vector<16x128xf32>
    %cst_129 = arith.constant dense<0.000000e+00> : vector<128xf32>
    %564 = vector.multi_reduction <add>, %563, %cst_129 [0] : vector<16x128xf32> to vector<128xf32>
    %565 = vector.shape_cast %564 : vector<128xf32> to vector<1x128xf32>
    %c192_130 = arith.constant 192 : index
    %566 = arith.index_cast %8 : i32 to index
    %567 = vector.load %arg5[%c192_130, %566] : memref<512x128xf32, #tpu.memory_space<vmem>>, vector<16x128xf32>
    %568 = arith.mulf %567, %382 : vector<16x128xf32>
    %cst_131 = arith.constant dense<0.000000e+00> : vector<128xf32>
    %569 = vector.multi_reduction <add>, %568, %cst_131 [0] : vector<16x128xf32> to vector<128xf32>
    %570 = vector.shape_cast %569 : vector<128xf32> to vector<1x128xf32>
    %c256_132 = arith.constant 256 : index
    %571 = arith.index_cast %8 : i32 to index
    %572 = vector.load %arg5[%c256_132, %571] : memref<512x128xf32, #tpu.memory_space<vmem>>, vector<16x128xf32>
    %573 = arith.mulf %572, %382 : vector<16x128xf32>
    %cst_133 = arith.constant dense<0.000000e+00> : vector<128xf32>
    %574 = vector.multi_reduction <add>, %573, %cst_133 [0] : vector<16x128xf32> to vector<128xf32>
    %575 = vector.shape_cast %574 : vector<128xf32> to vector<1x128xf32>
    %c320_134 = arith.constant 320 : index
    %576 = arith.index_cast %8 : i32 to index
    %577 = vector.load %arg5[%c320_134, %576] : memref<512x128xf32, #tpu.memory_space<vmem>>, vector<16x128xf32>
    %578 = arith.mulf %577, %382 : vector<16x128xf32>
    %cst_135 = arith.constant dense<0.000000e+00> : vector<128xf32>
    %579 = vector.multi_reduction <add>, %578, %cst_135 [0] : vector<16x128xf32> to vector<128xf32>
    %580 = vector.shape_cast %579 : vector<128xf32> to vector<1x128xf32>
    %c384_136 = arith.constant 384 : index
    %581 = arith.index_cast %8 : i32 to index
    %582 = vector.load %arg5[%c384_136, %581] : memref<512x128xf32, #tpu.memory_space<vmem>>, vector<16x128xf32>
    %583 = arith.mulf %582, %382 : vector<16x128xf32>
    %cst_137 = arith.constant dense<0.000000e+00> : vector<128xf32>
    %584 = vector.multi_reduction <add>, %583, %cst_137 [0] : vector<16x128xf32> to vector<128xf32>
    %585 = vector.shape_cast %584 : vector<128xf32> to vector<1x128xf32>
    %c448_138 = arith.constant 448 : index
    %586 = arith.index_cast %8 : i32 to index
    %587 = vector.load %arg5[%c448_138, %586] : memref<512x128xf32, #tpu.memory_space<vmem>>, vector<16x128xf32>
    %588 = arith.mulf %587, %382 : vector<16x128xf32>
    %cst_139 = arith.constant dense<0.000000e+00> : vector<128xf32>
    %589 = vector.multi_reduction <add>, %588, %cst_139 [0] : vector<16x128xf32> to vector<128xf32>
    %590 = vector.shape_cast %589 : vector<128xf32> to vector<1x128xf32>
    %591 = tpu.concatenate %555, %560, %565, %570, %575, %580, %585, %590 in 0 : vector<1x128xf32>, vector<1x128xf32>, vector<1x128xf32>, vector<1x128xf32>, vector<1x128xf32>, vector<1x128xf32>, vector<1x128xf32>, vector<1x128xf32> -> vector<8x128xf32>
    %c16_140 = arith.constant 16 : index
    %592 = arith.index_cast %8 : i32 to index
    %593 = vector.load %arg5[%c16_140, %592] : memref<512x128xf32, #tpu.memory_space<vmem>>, vector<16x128xf32>
    %594 = arith.mulf %593, %438 : vector<16x128xf32>
    %cst_141 = arith.constant dense<0.000000e+00> : vector<128xf32>
    %595 = vector.multi_reduction <add>, %594, %cst_141 [0] : vector<16x128xf32> to vector<128xf32>
    %596 = vector.shape_cast %595 : vector<128xf32> to vector<1x128xf32>
    %c80_142 = arith.constant 80 : index
    %597 = arith.index_cast %8 : i32 to index
    %598 = vector.load %arg5[%c80_142, %597] : memref<512x128xf32, #tpu.memory_space<vmem>>, vector<16x128xf32>
    %599 = arith.mulf %598, %438 : vector<16x128xf32>
    %cst_143 = arith.constant dense<0.000000e+00> : vector<128xf32>
    %600 = vector.multi_reduction <add>, %599, %cst_143 [0] : vector<16x128xf32> to vector<128xf32>
    %601 = vector.shape_cast %600 : vector<128xf32> to vector<1x128xf32>
    %c144_144 = arith.constant 144 : index
    %602 = arith.index_cast %8 : i32 to index
    %603 = vector.load %arg5[%c144_144, %602] : memref<512x128xf32, #tpu.memory_space<vmem>>, vector<16x128xf32>
    %604 = arith.mulf %603, %438 : vector<16x128xf32>
    %cst_145 = arith.constant dense<0.000000e+00> : vector<128xf32>
    %605 = vector.multi_reduction <add>, %604, %cst_145 [0] : vector<16x128xf32> to vector<128xf32>
    %606 = vector.shape_cast %605 : vector<128xf32> to vector<1x128xf32>
    %c208_146 = arith.constant 208 : index
    %607 = arith.index_cast %8 : i32 to index
    %608 = vector.load %arg5[%c208_146, %607] : memref<512x128xf32, #tpu.memory_space<vmem>>, vector<16x128xf32>
    %609 = arith.mulf %608, %438 : vector<16x128xf32>
    %cst_147 = arith.constant dense<0.000000e+00> : vector<128xf32>
    %610 = vector.multi_reduction <add>, %609, %cst_147 [0] : vector<16x128xf32> to vector<128xf32>
    %611 = vector.shape_cast %610 : vector<128xf32> to vector<1x128xf32>
    %c272_148 = arith.constant 272 : index
    %612 = arith.index_cast %8 : i32 to index
    %613 = vector.load %arg5[%c272_148, %612] : memref<512x128xf32, #tpu.memory_space<vmem>>, vector<16x128xf32>
    %614 = arith.mulf %613, %438 : vector<16x128xf32>
    %cst_149 = arith.constant dense<0.000000e+00> : vector<128xf32>
    %615 = vector.multi_reduction <add>, %614, %cst_149 [0] : vector<16x128xf32> to vector<128xf32>
    %616 = vector.shape_cast %615 : vector<128xf32> to vector<1x128xf32>
    %c336_150 = arith.constant 336 : index
    %617 = arith.index_cast %8 : i32 to index
    %618 = vector.load %arg5[%c336_150, %617] : memref<512x128xf32, #tpu.memory_space<vmem>>, vector<16x128xf32>
    %619 = arith.mulf %618, %438 : vector<16x128xf32>
    %cst_151 = arith.constant dense<0.000000e+00> : vector<128xf32>
    %620 = vector.multi_reduction <add>, %619, %cst_151 [0] : vector<16x128xf32> to vector<128xf32>
    %621 = vector.shape_cast %620 : vector<128xf32> to vector<1x128xf32>
    %c400_152 = arith.constant 400 : index
    %622 = arith.index_cast %8 : i32 to index
    %623 = vector.load %arg5[%c400_152, %622] : memref<512x128xf32, #tpu.memory_space<vmem>>, vector<16x128xf32>
    %624 = arith.mulf %623, %438 : vector<16x128xf32>
    %cst_153 = arith.constant dense<0.000000e+00> : vector<128xf32>
    %625 = vector.multi_reduction <add>, %624, %cst_153 [0] : vector<16x128xf32> to vector<128xf32>
    %626 = vector.shape_cast %625 : vector<128xf32> to vector<1x128xf32>
    %c464_154 = arith.constant 464 : index
    %627 = arith.index_cast %8 : i32 to index
    %628 = vector.load %arg5[%c464_154, %627] : memref<512x128xf32, #tpu.memory_space<vmem>>, vector<16x128xf32>
    %629 = arith.mulf %628, %438 : vector<16x128xf32>
    %cst_155 = arith.constant dense<0.000000e+00> : vector<128xf32>
    %630 = vector.multi_reduction <add>, %629, %cst_155 [0] : vector<16x128xf32> to vector<128xf32>
    %631 = vector.shape_cast %630 : vector<128xf32> to vector<1x128xf32>
    %632 = tpu.concatenate %596, %601, %606, %611, %616, %621, %626, %631 in 0 : vector<1x128xf32>, vector<1x128xf32>, vector<1x128xf32>, vector<1x128xf32>, vector<1x128xf32>, vector<1x128xf32>, vector<1x128xf32>, vector<1x128xf32> -> vector<8x128xf32>
    %c32_156 = arith.constant 32 : index
    %633 = arith.index_cast %8 : i32 to index
    %634 = vector.load %arg5[%c32_156, %633] : memref<512x128xf32, #tpu.memory_space<vmem>>, vector<16x128xf32>
    %635 = arith.mulf %634, %494 : vector<16x128xf32>
    %cst_157 = arith.constant dense<0.000000e+00> : vector<128xf32>
    %636 = vector.multi_reduction <add>, %635, %cst_157 [0] : vector<16x128xf32> to vector<128xf32>
    %637 = vector.shape_cast %636 : vector<128xf32> to vector<1x128xf32>
    %c96_158 = arith.constant 96 : index
    %638 = arith.index_cast %8 : i32 to index
    %639 = vector.load %arg5[%c96_158, %638] : memref<512x128xf32, #tpu.memory_space<vmem>>, vector<16x128xf32>
    %640 = arith.mulf %639, %494 : vector<16x128xf32>
    %cst_159 = arith.constant dense<0.000000e+00> : vector<128xf32>
    %641 = vector.multi_reduction <add>, %640, %cst_159 [0] : vector<16x128xf32> to vector<128xf32>
    %642 = vector.shape_cast %641 : vector<128xf32> to vector<1x128xf32>
    %c160_160 = arith.constant 160 : index
    %643 = arith.index_cast %8 : i32 to index
    %644 = vector.load %arg5[%c160_160, %643] : memref<512x128xf32, #tpu.memory_space<vmem>>, vector<16x128xf32>
    %645 = arith.mulf %644, %494 : vector<16x128xf32>
    %cst_161 = arith.constant dense<0.000000e+00> : vector<128xf32>
    %646 = vector.multi_reduction <add>, %645, %cst_161 [0] : vector<16x128xf32> to vector<128xf32>
    %647 = vector.shape_cast %646 : vector<128xf32> to vector<1x128xf32>
    %c224_162 = arith.constant 224 : index
    %648 = arith.index_cast %8 : i32 to index
    %649 = vector.load %arg5[%c224_162, %648] : memref<512x128xf32, #tpu.memory_space<vmem>>, vector<16x128xf32>
    %650 = arith.mulf %649, %494 : vector<16x128xf32>
    %cst_163 = arith.constant dense<0.000000e+00> : vector<128xf32>
    %651 = vector.multi_reduction <add>, %650, %cst_163 [0] : vector<16x128xf32> to vector<128xf32>
    %652 = vector.shape_cast %651 : vector<128xf32> to vector<1x128xf32>
    %c288_164 = arith.constant 288 : index
    %653 = arith.index_cast %8 : i32 to index
    %654 = vector.load %arg5[%c288_164, %653] : memref<512x128xf32, #tpu.memory_space<vmem>>, vector<16x128xf32>
    %655 = arith.mulf %654, %494 : vector<16x128xf32>
    %cst_165 = arith.constant dense<0.000000e+00> : vector<128xf32>
    %656 = vector.multi_reduction <add>, %655, %cst_165 [0] : vector<16x128xf32> to vector<128xf32>
    %657 = vector.shape_cast %656 : vector<128xf32> to vector<1x128xf32>
    %c352_166 = arith.constant 352 : index
    %658 = arith.index_cast %8 : i32 to index
    %659 = vector.load %arg5[%c352_166, %658] : memref<512x128xf32, #tpu.memory_space<vmem>>, vector<16x128xf32>
    %660 = arith.mulf %659, %494 : vector<16x128xf32>
    %cst_167 = arith.constant dense<0.000000e+00> : vector<128xf32>
    %661 = vector.multi_reduction <add>, %660, %cst_167 [0] : vector<16x128xf32> to vector<128xf32>
    %662 = vector.shape_cast %661 : vector<128xf32> to vector<1x128xf32>
    %c416_168 = arith.constant 416 : index
    %663 = arith.index_cast %8 : i32 to index
    %664 = vector.load %arg5[%c416_168, %663] : memref<512x128xf32, #tpu.memory_space<vmem>>, vector<16x128xf32>
    %665 = arith.mulf %664, %494 : vector<16x128xf32>
    %cst_169 = arith.constant dense<0.000000e+00> : vector<128xf32>
    %666 = vector.multi_reduction <add>, %665, %cst_169 [0] : vector<16x128xf32> to vector<128xf32>
    %667 = vector.shape_cast %666 : vector<128xf32> to vector<1x128xf32>
    %c480_170 = arith.constant 480 : index
    %668 = arith.index_cast %8 : i32 to index
    %669 = vector.load %arg5[%c480_170, %668] : memref<512x128xf32, #tpu.memory_space<vmem>>, vector<16x128xf32>
    %670 = arith.mulf %669, %494 : vector<16x128xf32>
    %cst_171 = arith.constant dense<0.000000e+00> : vector<128xf32>
    %671 = vector.multi_reduction <add>, %670, %cst_171 [0] : vector<16x128xf32> to vector<128xf32>
    %672 = vector.shape_cast %671 : vector<128xf32> to vector<1x128xf32>
    %673 = tpu.concatenate %637, %642, %647, %652, %657, %662, %667, %672 in 0 : vector<1x128xf32>, vector<1x128xf32>, vector<1x128xf32>, vector<1x128xf32>, vector<1x128xf32>, vector<1x128xf32>, vector<1x128xf32>, vector<1x128xf32> -> vector<8x128xf32>
    %c48_172 = arith.constant 48 : index
    %674 = arith.index_cast %8 : i32 to index
    %675 = vector.load %arg5[%c48_172, %674] : memref<512x128xf32, #tpu.memory_space<vmem>>, vector<16x128xf32>
    %676 = arith.mulf %675, %550 : vector<16x128xf32>
    %cst_173 = arith.constant dense<0.000000e+00> : vector<128xf32>
    %677 = vector.multi_reduction <add>, %676, %cst_173 [0] : vector<16x128xf32> to vector<128xf32>
    %678 = vector.shape_cast %677 : vector<128xf32> to vector<1x128xf32>
    %c112_174 = arith.constant 112 : index
    %679 = arith.index_cast %8 : i32 to index
    %680 = vector.load %arg5[%c112_174, %679] : memref<512x128xf32, #tpu.memory_space<vmem>>, vector<16x128xf32>
    %681 = arith.mulf %680, %550 : vector<16x128xf32>
    %cst_175 = arith.constant dense<0.000000e+00> : vector<128xf32>
    %682 = vector.multi_reduction <add>, %681, %cst_175 [0] : vector<16x128xf32> to vector<128xf32>
    %683 = vector.shape_cast %682 : vector<128xf32> to vector<1x128xf32>
    %c176_176 = arith.constant 176 : index
    %684 = arith.index_cast %8 : i32 to index
    %685 = vector.load %arg5[%c176_176, %684] : memref<512x128xf32, #tpu.memory_space<vmem>>, vector<16x128xf32>
    %686 = arith.mulf %685, %550 : vector<16x128xf32>
    %cst_177 = arith.constant dense<0.000000e+00> : vector<128xf32>
    %687 = vector.multi_reduction <add>, %686, %cst_177 [0] : vector<16x128xf32> to vector<128xf32>
    %688 = vector.shape_cast %687 : vector<128xf32> to vector<1x128xf32>
    %c240_178 = arith.constant 240 : index
    %689 = arith.index_cast %8 : i32 to index
    %690 = vector.load %arg5[%c240_178, %689] : memref<512x128xf32, #tpu.memory_space<vmem>>, vector<16x128xf32>
    %691 = arith.mulf %690, %550 : vector<16x128xf32>
    %cst_179 = arith.constant dense<0.000000e+00> : vector<128xf32>
    %692 = vector.multi_reduction <add>, %691, %cst_179 [0] : vector<16x128xf32> to vector<128xf32>
    %693 = vector.shape_cast %692 : vector<128xf32> to vector<1x128xf32>
    %c304_180 = arith.constant 304 : index
    %694 = arith.index_cast %8 : i32 to index
    %695 = vector.load %arg5[%c304_180, %694] : memref<512x128xf32, #tpu.memory_space<vmem>>, vector<16x128xf32>
    %696 = arith.mulf %695, %550 : vector<16x128xf32>
    %cst_181 = arith.constant dense<0.000000e+00> : vector<128xf32>
    %697 = vector.multi_reduction <add>, %696, %cst_181 [0] : vector<16x128xf32> to vector<128xf32>
    %698 = vector.shape_cast %697 : vector<128xf32> to vector<1x128xf32>
    %c368_182 = arith.constant 368 : index
    %699 = arith.index_cast %8 : i32 to index
    %700 = vector.load %arg5[%c368_182, %699] : memref<512x128xf32, #tpu.memory_space<vmem>>, vector<16x128xf32>
    %701 = arith.mulf %700, %550 : vector<16x128xf32>
    %cst_183 = arith.constant dense<0.000000e+00> : vector<128xf32>
    %702 = vector.multi_reduction <add>, %701, %cst_183 [0] : vector<16x128xf32> to vector<128xf32>
    %703 = vector.shape_cast %702 : vector<128xf32> to vector<1x128xf32>
    %c432_184 = arith.constant 432 : index
    %704 = arith.index_cast %8 : i32 to index
    %705 = vector.load %arg5[%c432_184, %704] : memref<512x128xf32, #tpu.memory_space<vmem>>, vector<16x128xf32>
    %706 = arith.mulf %705, %550 : vector<16x128xf32>
    %cst_185 = arith.constant dense<0.000000e+00> : vector<128xf32>
    %707 = vector.multi_reduction <add>, %706, %cst_185 [0] : vector<16x128xf32> to vector<128xf32>
    %708 = vector.shape_cast %707 : vector<128xf32> to vector<1x128xf32>
    %c496_186 = arith.constant 496 : index
    %709 = arith.index_cast %8 : i32 to index
    %710 = vector.load %arg5[%c496_186, %709] : memref<512x128xf32, #tpu.memory_space<vmem>>, vector<16x128xf32>
    %711 = arith.mulf %710, %550 : vector<16x128xf32>
    %cst_187 = arith.constant dense<0.000000e+00> : vector<128xf32>
    %712 = vector.multi_reduction <add>, %711, %cst_187 [0] : vector<16x128xf32> to vector<128xf32>
    %713 = vector.shape_cast %712 : vector<128xf32> to vector<1x128xf32>
    %714 = tpu.concatenate %678, %683, %688, %693, %698, %703, %708, %713 in 0 : vector<1x128xf32>, vector<1x128xf32>, vector<1x128xf32>, vector<1x128xf32>, vector<1x128xf32>, vector<1x128xf32>, vector<1x128xf32>, vector<1x128xf32> -> vector<8x128xf32>
    %715 = arith.addf %185, %591 : vector<8x128xf32>
    %716 = arith.addf %226, %632 : vector<8x128xf32>
    %717 = arith.addf %267, %673 : vector<8x128xf32>
    %718 = arith.addf %308, %714 : vector<8x128xf32>
    %719 = arith.maximumf %715, %716 : vector<8x128xf32>
    %720 = arith.maximumf %719, %717 : vector<8x128xf32>
    %721 = arith.maximumf %720, %718 : vector<8x128xf32>
    %722 = arith.subf %715, %721 : vector<8x128xf32>
    %723 = math.exp %722 : vector<8x128xf32>
    %724 = arith.subf %716, %721 : vector<8x128xf32>
    %725 = math.exp %724 : vector<8x128xf32>
    %726 = arith.subf %717, %721 : vector<8x128xf32>
    %727 = math.exp %726 : vector<8x128xf32>
    %728 = arith.subf %718, %721 : vector<8x128xf32>
    %729 = math.exp %728 : vector<8x128xf32>
    %730 = arith.addf %723, %725 : vector<8x128xf32>
    %731 = arith.addf %730, %727 : vector<8x128xf32>
    %732 = arith.addf %731, %729 : vector<8x128xf32>
    %733 = arith.divf %723, %732 : vector<8x128xf32>
    %734 = arith.divf %725, %732 : vector<8x128xf32>
    %735 = arith.divf %727, %732 : vector<8x128xf32>
    %736 = arith.divf %729, %732 : vector<8x128xf32>
    %737 = vector.extract_strided_slice %733 {offsets = [0, 0], sizes = [1, 128], strides = [1, 1]} : vector<8x128xf32> to vector<1x128xf32>
    %c0_188 = arith.constant 0 : index
    %738 = arith.index_cast %8 : i32 to index
    %739 = vector.load %arg5[%c0_188, %738] : memref<512x128xf32, #tpu.memory_space<vmem>>, vector<16x128xf32>
    %740 = vector.broadcast %737 : vector<1x128xf32> to vector<16x128xf32>
    %741 = arith.mulf %740, %739 : vector<16x128xf32>
    %742 = vector.extract_strided_slice %733 {offsets = [1, 0], sizes = [1, 128], strides = [1, 1]} : vector<8x128xf32> to vector<1x128xf32>
    %c64_189 = arith.constant 64 : index
    %743 = arith.index_cast %8 : i32 to index
    %744 = vector.load %arg5[%c64_189, %743] : memref<512x128xf32, #tpu.memory_space<vmem>>, vector<16x128xf32>
    %745 = vector.broadcast %742 : vector<1x128xf32> to vector<16x128xf32>
    %746 = arith.mulf %745, %744 : vector<16x128xf32>
    %747 = arith.addf %741, %746 : vector<16x128xf32>
    %748 = vector.extract_strided_slice %733 {offsets = [2, 0], sizes = [1, 128], strides = [1, 1]} : vector<8x128xf32> to vector<1x128xf32>
    %c128_190 = arith.constant 128 : index
    %749 = arith.index_cast %8 : i32 to index
    %750 = vector.load %arg5[%c128_190, %749] : memref<512x128xf32, #tpu.memory_space<vmem>>, vector<16x128xf32>
    %751 = vector.broadcast %748 : vector<1x128xf32> to vector<16x128xf32>
    %752 = arith.mulf %751, %750 : vector<16x128xf32>
    %753 = arith.addf %747, %752 : vector<16x128xf32>
    %754 = vector.extract_strided_slice %733 {offsets = [3, 0], sizes = [1, 128], strides = [1, 1]} : vector<8x128xf32> to vector<1x128xf32>
    %c192_191 = arith.constant 192 : index
    %755 = arith.index_cast %8 : i32 to index
    %756 = vector.load %arg5[%c192_191, %755] : memref<512x128xf32, #tpu.memory_space<vmem>>, vector<16x128xf32>
    %757 = vector.broadcast %754 : vector<1x128xf32> to vector<16x128xf32>
    %758 = arith.mulf %757, %756 : vector<16x128xf32>
    %759 = arith.addf %753, %758 : vector<16x128xf32>
    %760 = vector.extract_strided_slice %733 {offsets = [4, 0], sizes = [1, 128], strides = [1, 1]} : vector<8x128xf32> to vector<1x128xf32>
    %c256_192 = arith.constant 256 : index
    %761 = arith.index_cast %8 : i32 to index
    %762 = vector.load %arg5[%c256_192, %761] : memref<512x128xf32, #tpu.memory_space<vmem>>, vector<16x128xf32>
    %763 = vector.broadcast %760 : vector<1x128xf32> to vector<16x128xf32>
    %764 = arith.mulf %763, %762 : vector<16x128xf32>
    %765 = arith.addf %759, %764 : vector<16x128xf32>
    %766 = vector.extract_strided_slice %733 {offsets = [5, 0], sizes = [1, 128], strides = [1, 1]} : vector<8x128xf32> to vector<1x128xf32>
    %c320_193 = arith.constant 320 : index
    %767 = arith.index_cast %8 : i32 to index
    %768 = vector.load %arg5[%c320_193, %767] : memref<512x128xf32, #tpu.memory_space<vmem>>, vector<16x128xf32>
    %769 = vector.broadcast %766 : vector<1x128xf32> to vector<16x128xf32>
    %770 = arith.mulf %769, %768 : vector<16x128xf32>
    %771 = arith.addf %765, %770 : vector<16x128xf32>
    %772 = vector.extract_strided_slice %733 {offsets = [6, 0], sizes = [1, 128], strides = [1, 1]} : vector<8x128xf32> to vector<1x128xf32>
    %c384_194 = arith.constant 384 : index
    %773 = arith.index_cast %8 : i32 to index
    %774 = vector.load %arg5[%c384_194, %773] : memref<512x128xf32, #tpu.memory_space<vmem>>, vector<16x128xf32>
    %775 = vector.broadcast %772 : vector<1x128xf32> to vector<16x128xf32>
    %776 = arith.mulf %775, %774 : vector<16x128xf32>
    %777 = arith.addf %771, %776 : vector<16x128xf32>
    %778 = vector.extract_strided_slice %733 {offsets = [7, 0], sizes = [1, 128], strides = [1, 1]} : vector<8x128xf32> to vector<1x128xf32>
    %c448_195 = arith.constant 448 : index
    %779 = arith.index_cast %8 : i32 to index
    %780 = vector.load %arg5[%c448_195, %779] : memref<512x128xf32, #tpu.memory_space<vmem>>, vector<16x128xf32>
    %781 = vector.broadcast %778 : vector<1x128xf32> to vector<16x128xf32>
    %782 = arith.mulf %781, %780 : vector<16x128xf32>
    %783 = arith.addf %777, %782 : vector<16x128xf32>
    %784 = arith.mulf %783, %783 : vector<16x128xf32>
    %cst_196 = arith.constant dense<0.000000e+00> : vector<128xf32>
    %785 = vector.multi_reduction <add>, %784, %cst_196 [0] : vector<16x128xf32> to vector<128xf32>
    %786 = vector.shape_cast %785 : vector<128xf32> to vector<1x128xf32>
    %787 = math.sqrt %786 : vector<1x128xf32>
    %cst_197 = arith.constant 1.000000e+00 : f32
    %788 = vector.broadcast %cst_197 : f32 to vector<1x128xf32>
    %789 = arith.addf %788, %786 : vector<1x128xf32>
    %790 = arith.divf %787, %789 : vector<1x128xf32>
    %791 = vector.broadcast %790 : vector<1x128xf32> to vector<16x128xf32>
    %792 = arith.mulf %791, %783 : vector<16x128xf32>
    %793 = vector.extract_strided_slice %734 {offsets = [0, 0], sizes = [1, 128], strides = [1, 1]} : vector<8x128xf32> to vector<1x128xf32>
    %c16_198 = arith.constant 16 : index
    %794 = arith.index_cast %8 : i32 to index
    %795 = vector.load %arg5[%c16_198, %794] : memref<512x128xf32, #tpu.memory_space<vmem>>, vector<16x128xf32>
    %796 = vector.broadcast %793 : vector<1x128xf32> to vector<16x128xf32>
    %797 = arith.mulf %796, %795 : vector<16x128xf32>
    %798 = vector.extract_strided_slice %734 {offsets = [1, 0], sizes = [1, 128], strides = [1, 1]} : vector<8x128xf32> to vector<1x128xf32>
    %c80_199 = arith.constant 80 : index
    %799 = arith.index_cast %8 : i32 to index
    %800 = vector.load %arg5[%c80_199, %799] : memref<512x128xf32, #tpu.memory_space<vmem>>, vector<16x128xf32>
    %801 = vector.broadcast %798 : vector<1x128xf32> to vector<16x128xf32>
    %802 = arith.mulf %801, %800 : vector<16x128xf32>
    %803 = arith.addf %797, %802 : vector<16x128xf32>
    %804 = vector.extract_strided_slice %734 {offsets = [2, 0], sizes = [1, 128], strides = [1, 1]} : vector<8x128xf32> to vector<1x128xf32>
    %c144_200 = arith.constant 144 : index
    %805 = arith.index_cast %8 : i32 to index
    %806 = vector.load %arg5[%c144_200, %805] : memref<512x128xf32, #tpu.memory_space<vmem>>, vector<16x128xf32>
    %807 = vector.broadcast %804 : vector<1x128xf32> to vector<16x128xf32>
    %808 = arith.mulf %807, %806 : vector<16x128xf32>
    %809 = arith.addf %803, %808 : vector<16x128xf32>
    %810 = vector.extract_strided_slice %734 {offsets = [3, 0], sizes = [1, 128], strides = [1, 1]} : vector<8x128xf32> to vector<1x128xf32>
    %c208_201 = arith.constant 208 : index
    %811 = arith.index_cast %8 : i32 to index
    %812 = vector.load %arg5[%c208_201, %811] : memref<512x128xf32, #tpu.memory_space<vmem>>, vector<16x128xf32>
    %813 = vector.broadcast %810 : vector<1x128xf32> to vector<16x128xf32>
    %814 = arith.mulf %813, %812 : vector<16x128xf32>
    %815 = arith.addf %809, %814 : vector<16x128xf32>
    %816 = vector.extract_strided_slice %734 {offsets = [4, 0], sizes = [1, 128], strides = [1, 1]} : vector<8x128xf32> to vector<1x128xf32>
    %c272_202 = arith.constant 272 : index
    %817 = arith.index_cast %8 : i32 to index
    %818 = vector.load %arg5[%c272_202, %817] : memref<512x128xf32, #tpu.memory_space<vmem>>, vector<16x128xf32>
    %819 = vector.broadcast %816 : vector<1x128xf32> to vector<16x128xf32>
    %820 = arith.mulf %819, %818 : vector<16x128xf32>
    %821 = arith.addf %815, %820 : vector<16x128xf32>
    %822 = vector.extract_strided_slice %734 {offsets = [5, 0], sizes = [1, 128], strides = [1, 1]} : vector<8x128xf32> to vector<1x128xf32>
    %c336_203 = arith.constant 336 : index
    %823 = arith.index_cast %8 : i32 to index
    %824 = vector.load %arg5[%c336_203, %823] : memref<512x128xf32, #tpu.memory_space<vmem>>, vector<16x128xf32>
    %825 = vector.broadcast %822 : vector<1x128xf32> to vector<16x128xf32>
    %826 = arith.mulf %825, %824 : vector<16x128xf32>
    %827 = arith.addf %821, %826 : vector<16x128xf32>
    %828 = vector.extract_strided_slice %734 {offsets = [6, 0], sizes = [1, 128], strides = [1, 1]} : vector<8x128xf32> to vector<1x128xf32>
    %c400_204 = arith.constant 400 : index
    %829 = arith.index_cast %8 : i32 to index
    %830 = vector.load %arg5[%c400_204, %829] : memref<512x128xf32, #tpu.memory_space<vmem>>, vector<16x128xf32>
    %831 = vector.broadcast %828 : vector<1x128xf32> to vector<16x128xf32>
    %832 = arith.mulf %831, %830 : vector<16x128xf32>
    %833 = arith.addf %827, %832 : vector<16x128xf32>
    %834 = vector.extract_strided_slice %734 {offsets = [7, 0], sizes = [1, 128], strides = [1, 1]} : vector<8x128xf32> to vector<1x128xf32>
    %c464_205 = arith.constant 464 : index
    %835 = arith.index_cast %8 : i32 to index
    %836 = vector.load %arg5[%c464_205, %835] : memref<512x128xf32, #tpu.memory_space<vmem>>, vector<16x128xf32>
    %837 = vector.broadcast %834 : vector<1x128xf32> to vector<16x128xf32>
    %838 = arith.mulf %837, %836 : vector<16x128xf32>
    %839 = arith.addf %833, %838 : vector<16x128xf32>
    %840 = arith.mulf %839, %839 : vector<16x128xf32>
    %cst_206 = arith.constant dense<0.000000e+00> : vector<128xf32>
    %841 = vector.multi_reduction <add>, %840, %cst_206 [0] : vector<16x128xf32> to vector<128xf32>
    %842 = vector.shape_cast %841 : vector<128xf32> to vector<1x128xf32>
    %843 = math.sqrt %842 : vector<1x128xf32>
    %cst_207 = arith.constant 1.000000e+00 : f32
    %844 = vector.broadcast %cst_207 : f32 to vector<1x128xf32>
    %845 = arith.addf %844, %842 : vector<1x128xf32>
    %846 = arith.divf %843, %845 : vector<1x128xf32>
    %847 = vector.broadcast %846 : vector<1x128xf32> to vector<16x128xf32>
    %848 = arith.mulf %847, %839 : vector<16x128xf32>
    %849 = vector.extract_strided_slice %735 {offsets = [0, 0], sizes = [1, 128], strides = [1, 1]} : vector<8x128xf32> to vector<1x128xf32>
    %c32_208 = arith.constant 32 : index
    %850 = arith.index_cast %8 : i32 to index
    %851 = vector.load %arg5[%c32_208, %850] : memref<512x128xf32, #tpu.memory_space<vmem>>, vector<16x128xf32>
    %852 = vector.broadcast %849 : vector<1x128xf32> to vector<16x128xf32>
    %853 = arith.mulf %852, %851 : vector<16x128xf32>
    %854 = vector.extract_strided_slice %735 {offsets = [1, 0], sizes = [1, 128], strides = [1, 1]} : vector<8x128xf32> to vector<1x128xf32>
    %c96_209 = arith.constant 96 : index
    %855 = arith.index_cast %8 : i32 to index
    %856 = vector.load %arg5[%c96_209, %855] : memref<512x128xf32, #tpu.memory_space<vmem>>, vector<16x128xf32>
    %857 = vector.broadcast %854 : vector<1x128xf32> to vector<16x128xf32>
    %858 = arith.mulf %857, %856 : vector<16x128xf32>
    %859 = arith.addf %853, %858 : vector<16x128xf32>
    %860 = vector.extract_strided_slice %735 {offsets = [2, 0], sizes = [1, 128], strides = [1, 1]} : vector<8x128xf32> to vector<1x128xf32>
    %c160_210 = arith.constant 160 : index
    %861 = arith.index_cast %8 : i32 to index
    %862 = vector.load %arg5[%c160_210, %861] : memref<512x128xf32, #tpu.memory_space<vmem>>, vector<16x128xf32>
    %863 = vector.broadcast %860 : vector<1x128xf32> to vector<16x128xf32>
    %864 = arith.mulf %863, %862 : vector<16x128xf32>
    %865 = arith.addf %859, %864 : vector<16x128xf32>
    %866 = vector.extract_strided_slice %735 {offsets = [3, 0], sizes = [1, 128], strides = [1, 1]} : vector<8x128xf32> to vector<1x128xf32>
    %c224_211 = arith.constant 224 : index
    %867 = arith.index_cast %8 : i32 to index
    %868 = vector.load %arg5[%c224_211, %867] : memref<512x128xf32, #tpu.memory_space<vmem>>, vector<16x128xf32>
    %869 = vector.broadcast %866 : vector<1x128xf32> to vector<16x128xf32>
    %870 = arith.mulf %869, %868 : vector<16x128xf32>
    %871 = arith.addf %865, %870 : vector<16x128xf32>
    %872 = vector.extract_strided_slice %735 {offsets = [4, 0], sizes = [1, 128], strides = [1, 1]} : vector<8x128xf32> to vector<1x128xf32>
    %c288_212 = arith.constant 288 : index
    %873 = arith.index_cast %8 : i32 to index
    %874 = vector.load %arg5[%c288_212, %873] : memref<512x128xf32, #tpu.memory_space<vmem>>, vector<16x128xf32>
    %875 = vector.broadcast %872 : vector<1x128xf32> to vector<16x128xf32>
    %876 = arith.mulf %875, %874 : vector<16x128xf32>
    %877 = arith.addf %871, %876 : vector<16x128xf32>
    %878 = vector.extract_strided_slice %735 {offsets = [5, 0], sizes = [1, 128], strides = [1, 1]} : vector<8x128xf32> to vector<1x128xf32>
    %c352_213 = arith.constant 352 : index
    %879 = arith.index_cast %8 : i32 to index
    %880 = vector.load %arg5[%c352_213, %879] : memref<512x128xf32, #tpu.memory_space<vmem>>, vector<16x128xf32>
    %881 = vector.broadcast %878 : vector<1x128xf32> to vector<16x128xf32>
    %882 = arith.mulf %881, %880 : vector<16x128xf32>
    %883 = arith.addf %877, %882 : vector<16x128xf32>
    %884 = vector.extract_strided_slice %735 {offsets = [6, 0], sizes = [1, 128], strides = [1, 1]} : vector<8x128xf32> to vector<1x128xf32>
    %c416_214 = arith.constant 416 : index
    %885 = arith.index_cast %8 : i32 to index
    %886 = vector.load %arg5[%c416_214, %885] : memref<512x128xf32, #tpu.memory_space<vmem>>, vector<16x128xf32>
    %887 = vector.broadcast %884 : vector<1x128xf32> to vector<16x128xf32>
    %888 = arith.mulf %887, %886 : vector<16x128xf32>
    %889 = arith.addf %883, %888 : vector<16x128xf32>
    %890 = vector.extract_strided_slice %735 {offsets = [7, 0], sizes = [1, 128], strides = [1, 1]} : vector<8x128xf32> to vector<1x128xf32>
    %c480_215 = arith.constant 480 : index
    %891 = arith.index_cast %8 : i32 to index
    %892 = vector.load %arg5[%c480_215, %891] : memref<512x128xf32, #tpu.memory_space<vmem>>, vector<16x128xf32>
    %893 = vector.broadcast %890 : vector<1x128xf32> to vector<16x128xf32>
    %894 = arith.mulf %893, %892 : vector<16x128xf32>
    %895 = arith.addf %889, %894 : vector<16x128xf32>
    %896 = arith.mulf %895, %895 : vector<16x128xf32>
    %cst_216 = arith.constant dense<0.000000e+00> : vector<128xf32>
    %897 = vector.multi_reduction <add>, %896, %cst_216 [0] : vector<16x128xf32> to vector<128xf32>
    %898 = vector.shape_cast %897 : vector<128xf32> to vector<1x128xf32>
    %899 = math.sqrt %898 : vector<1x128xf32>
    %cst_217 = arith.constant 1.000000e+00 : f32
    %900 = vector.broadcast %cst_217 : f32 to vector<1x128xf32>
    %901 = arith.addf %900, %898 : vector<1x128xf32>
    %902 = arith.divf %899, %901 : vector<1x128xf32>
    %903 = vector.broadcast %902 : vector<1x128xf32> to vector<16x128xf32>
    %904 = arith.mulf %903, %895 : vector<16x128xf32>
    %905 = vector.extract_strided_slice %736 {offsets = [0, 0], sizes = [1, 128], strides = [1, 1]} : vector<8x128xf32> to vector<1x128xf32>
    %c48_218 = arith.constant 48 : index
    %906 = arith.index_cast %8 : i32 to index
    %907 = vector.load %arg5[%c48_218, %906] : memref<512x128xf32, #tpu.memory_space<vmem>>, vector<16x128xf32>
    %908 = vector.broadcast %905 : vector<1x128xf32> to vector<16x128xf32>
    %909 = arith.mulf %908, %907 : vector<16x128xf32>
    %910 = vector.extract_strided_slice %736 {offsets = [1, 0], sizes = [1, 128], strides = [1, 1]} : vector<8x128xf32> to vector<1x128xf32>
    %c112_219 = arith.constant 112 : index
    %911 = arith.index_cast %8 : i32 to index
    %912 = vector.load %arg5[%c112_219, %911] : memref<512x128xf32, #tpu.memory_space<vmem>>, vector<16x128xf32>
    %913 = vector.broadcast %910 : vector<1x128xf32> to vector<16x128xf32>
    %914 = arith.mulf %913, %912 : vector<16x128xf32>
    %915 = arith.addf %909, %914 : vector<16x128xf32>
    %916 = vector.extract_strided_slice %736 {offsets = [2, 0], sizes = [1, 128], strides = [1, 1]} : vector<8x128xf32> to vector<1x128xf32>
    %c176_220 = arith.constant 176 : index
    %917 = arith.index_cast %8 : i32 to index
    %918 = vector.load %arg5[%c176_220, %917] : memref<512x128xf32, #tpu.memory_space<vmem>>, vector<16x128xf32>
    %919 = vector.broadcast %916 : vector<1x128xf32> to vector<16x128xf32>
    %920 = arith.mulf %919, %918 : vector<16x128xf32>
    %921 = arith.addf %915, %920 : vector<16x128xf32>
    %922 = vector.extract_strided_slice %736 {offsets = [3, 0], sizes = [1, 128], strides = [1, 1]} : vector<8x128xf32> to vector<1x128xf32>
    %c240_221 = arith.constant 240 : index
    %923 = arith.index_cast %8 : i32 to index
    %924 = vector.load %arg5[%c240_221, %923] : memref<512x128xf32, #tpu.memory_space<vmem>>, vector<16x128xf32>
    %925 = vector.broadcast %922 : vector<1x128xf32> to vector<16x128xf32>
    %926 = arith.mulf %925, %924 : vector<16x128xf32>
    %927 = arith.addf %921, %926 : vector<16x128xf32>
    %928 = vector.extract_strided_slice %736 {offsets = [4, 0], sizes = [1, 128], strides = [1, 1]} : vector<8x128xf32> to vector<1x128xf32>
    %c304_222 = arith.constant 304 : index
    %929 = arith.index_cast %8 : i32 to index
    %930 = vector.load %arg5[%c304_222, %929] : memref<512x128xf32, #tpu.memory_space<vmem>>, vector<16x128xf32>
    %931 = vector.broadcast %928 : vector<1x128xf32> to vector<16x128xf32>
    %932 = arith.mulf %931, %930 : vector<16x128xf32>
    %933 = arith.addf %927, %932 : vector<16x128xf32>
    %934 = vector.extract_strided_slice %736 {offsets = [5, 0], sizes = [1, 128], strides = [1, 1]} : vector<8x128xf32> to vector<1x128xf32>
    %c368_223 = arith.constant 368 : index
    %935 = arith.index_cast %8 : i32 to index
    %936 = vector.load %arg5[%c368_223, %935] : memref<512x128xf32, #tpu.memory_space<vmem>>, vector<16x128xf32>
    %937 = vector.broadcast %934 : vector<1x128xf32> to vector<16x128xf32>
    %938 = arith.mulf %937, %936 : vector<16x128xf32>
    %939 = arith.addf %933, %938 : vector<16x128xf32>
    %940 = vector.extract_strided_slice %736 {offsets = [6, 0], sizes = [1, 128], strides = [1, 1]} : vector<8x128xf32> to vector<1x128xf32>
    %c432_224 = arith.constant 432 : index
    %941 = arith.index_cast %8 : i32 to index
    %942 = vector.load %arg5[%c432_224, %941] : memref<512x128xf32, #tpu.memory_space<vmem>>, vector<16x128xf32>
    %943 = vector.broadcast %940 : vector<1x128xf32> to vector<16x128xf32>
    %944 = arith.mulf %943, %942 : vector<16x128xf32>
    %945 = arith.addf %939, %944 : vector<16x128xf32>
    %946 = vector.extract_strided_slice %736 {offsets = [7, 0], sizes = [1, 128], strides = [1, 1]} : vector<8x128xf32> to vector<1x128xf32>
    %c496_225 = arith.constant 496 : index
    %947 = arith.index_cast %8 : i32 to index
    %948 = vector.load %arg5[%c496_225, %947] : memref<512x128xf32, #tpu.memory_space<vmem>>, vector<16x128xf32>
    %949 = vector.broadcast %946 : vector<1x128xf32> to vector<16x128xf32>
    %950 = arith.mulf %949, %948 : vector<16x128xf32>
    %951 = arith.addf %945, %950 : vector<16x128xf32>
    %952 = arith.mulf %951, %951 : vector<16x128xf32>
    %cst_226 = arith.constant dense<0.000000e+00> : vector<128xf32>
    %953 = vector.multi_reduction <add>, %952, %cst_226 [0] : vector<16x128xf32> to vector<128xf32>
    %954 = vector.shape_cast %953 : vector<128xf32> to vector<1x128xf32>
    %955 = math.sqrt %954 : vector<1x128xf32>
    %cst_227 = arith.constant 1.000000e+00 : f32
    %956 = vector.broadcast %cst_227 : f32 to vector<1x128xf32>
    %957 = arith.addf %956, %954 : vector<1x128xf32>
    %958 = arith.divf %955, %957 : vector<1x128xf32>
    %959 = vector.broadcast %958 : vector<1x128xf32> to vector<16x128xf32>
    %960 = arith.mulf %959, %951 : vector<16x128xf32>
    %c0_228 = arith.constant 0 : index
    %961 = arith.index_cast %8 : i32 to index
    %962 = vector.load %arg4[%c0_228, %961] : memref<64x128xf32, #tpu.memory_space<vmem>>, vector<16x128xf32>
    tpu.vector_store %arg4[%c0_228, %961], %792 {strides = array<i32>} : memref<64x128xf32, #tpu.memory_space<vmem>>, vector<16x128xf32>,
    %c16_229 = arith.constant 16 : index
    %963 = arith.index_cast %8 : i32 to index
    %964 = vector.load %arg4[%c16_229, %963] : memref<64x128xf32, #tpu.memory_space<vmem>>, vector<16x128xf32>
    tpu.vector_store %arg4[%c16_229, %963], %848 {strides = array<i32>} : memref<64x128xf32, #tpu.memory_space<vmem>>, vector<16x128xf32>,
    %c32_230 = arith.constant 32 : index
    %965 = arith.index_cast %8 : i32 to index
    %966 = vector.load %arg4[%c32_230, %965] : memref<64x128xf32, #tpu.memory_space<vmem>>, vector<16x128xf32>
    tpu.vector_store %arg4[%c32_230, %965], %904 {strides = array<i32>} : memref<64x128xf32, #tpu.memory_space<vmem>>, vector<16x128xf32>,
    %c48_231 = arith.constant 48 : index
    %967 = arith.index_cast %8 : i32 to index
    %968 = vector.load %arg4[%c48_231, %967] : memref<64x128xf32, #tpu.memory_space<vmem>>, vector<16x128xf32>
    tpu.vector_store %arg4[%c48_231, %967], %960 {strides = array<i32>} : memref<64x128xf32, #tpu.memory_space<vmem>>, vector<16x128xf32>,
    %c1_i32 = arith.constant 1 : i32
    return
  }
  func.func @transform_0(%arg0: i32) -> (i32, i32) {
    %c0_i32 = arith.constant 0 : i32
    %c0_i32_0 = arith.constant 0 : i32
    %c0_i32_1 = arith.constant 0 : i32
    return %c0_i32, %c0_i32_0 : i32, i32
  }
  func.func @transform_1(%arg0: i32) -> (i32, i32) {
    %c0_i32 = arith.constant 0 : i32
    %c0_i32_0 = arith.constant 0 : i32
    %c0_i32_1 = arith.constant 0 : i32
    return %c0_i32, %c0_i32_0 : i32, i32
  }
  func.func @transform_2(%arg0: i32) -> (i32, i32) {
    %c0_i32 = arith.constant 0 : i32
    %c0_i32_0 = arith.constant 0 : i32
    return %c0_i32, %arg0 : i32, i32
  }
  func.func @transform_3(%arg0: i32) -> (i32, i32) {
    %c0_i32 = arith.constant 0 : i32
    %c0_i32_0 = arith.constant 0 : i32
    return %c0_i32, %arg0 : i32, i32
  }
}

</mosaic_0001>

<llo_original>
// kernel: tpu_custom_call.1
$region0: #{tpu_custom_call.1}
  #allocation0 [shape = 'u32[]', space=smem, size = 0x4, offset = 0x4, fixed_abs, tag = 'smem constant byte address 0x4 - core index']
  #allocation1 [shape = 'u32[144,128]{1,0:T(1,128)}', space=vmem, size = 0x12000, scoped, tag = 'internal scratch']
  #allocation2 [shape = 'f32[512,128]{1,0:T(8,128)}', space=vmem, size = 0x40000, scoped, tag = 'scratch operand']
  %s0 = inlined_call_operand.vmem [shape: bf16[512,128], index: 0, kind: input, shape index: {}]
  %s1 = inlined_call_operand.vmem [shape: f32[512,1], index: 1, kind: input, shape index: {}]
  %s2 = inlined_call_operand.vmem [shape: bf16[128,128], index: 2, kind: input, shape index: {}]
  %s3 = inlined_call_operand.hbm [shape: f32[64,128], index: 3, kind: output, shape index: {}]
  %s4 = sld [smem:[#allocation0]]
  $region22: #{tpu_custom_call.1} parent=0
    _
  %s6 = ssub.s32 1, %s4
  %s7 = scalar_select 0, %s6, %s4
  $region1: #{tpu_custom_call.1} parent=0
    #allocation3 [shape = 'u8[32768]{0}', space=vmem, size = 0x8000, scoped, tag = 'output window, operand 0, single buffered']
    #allocation4 [shape = 's32[1]{0}', space=sflag, size = 0x4, scoped, tag = 'scoped memory for tpu_custom_call.1']
    %8 = vsyncpa [#allocation4], 0
    // Predicated region
    $region2: #{tpu_custom_call.1} parent=1 // pred_check
      _
    $region3: #{tpu_custom_call.1} parent=1 // pred_check_branch
      %10 = sbr.rel (0) target = $region5
    $region4: #{tpu_custom_call.1} parent=1 // pred_region
      _
    $region5: #{tpu_custom_call.1} parent=1 // pred_fallthru
      _
    // Predicated region
    $region6: #{tpu_custom_call.1} parent=1 // pred_check
      _
    $region7: #{tpu_custom_call.1} parent=1 // pred_check_branch
      %12 = sbr.rel (0) target = $region9
    $region8: #{tpu_custom_call.1} parent=1 // pred_region
      _
    $region9: #{tpu_custom_call.1} parent=1 // pred_fallthru
      _
    // Predicated region
    $region10: #{tpu_custom_call.1} parent=1 // pred_check
      _
    $region11: #{tpu_custom_call.1} parent=1 // pred_check_branch
      %14 = sbr.rel (0) target = $region13
    $region12: #{tpu_custom_call.1} parent=1 // pred_region
      _
    $region13: #{tpu_custom_call.1} parent=1 // pred_fallthru
      _
    %v16 = vld [vmem:[%s0] sm:$0xf]
    %v17 = vld [vmem:[%s0 + $0x4] sm:$0xf]
    %v18 = vld [vmem:[%s0 + $0x8] sm:$0xf]
    %v19 = vld [vmem:[%s0 + $0xc] sm:$0xf]
    %v20 = vld [vmem:[%s0 + $0x10] sm:$0xf]
    %v21 = vld [vmem:[%s0 + $0x14] sm:$0xf]
    %v22 = vld [vmem:[%s0 + $0x18] sm:$0xf]
    %v23 = vld [vmem:[%s0 + $0x1c] sm:$0xf]
    %v24 = vld [vmem:[%s0 + $0x20] sm:$0xf]
    %v25 = vld [vmem:[%s0 + $0x24] sm:$0xf]
    %v26 = vld [vmem:[%s0 + $0x28] sm:$0xf]
    %v27 = vld [vmem:[%s0 + $0x2c] sm:$0xf]
    %v28 = vld [vmem:[%s0 + $0x30] sm:$0xf]
    %v29 = vld [vmem:[%s0 + $0x34] sm:$0xf]
    %v30 = vld [vmem:[%s0 + $0x38] sm:$0xf]
    %v31 = vld [vmem:[%s0 + $0x3c] sm:$0xf]
    %v32 = vld [vmem:[%s0 + $0x40] sm:$0xf]
    %v33 = vld [vmem:[%s0 + $0x44] sm:$0xf]
    %v34 = vld [vmem:[%s0 + $0x48] sm:$0xf]
    %v35 = vld [vmem:[%s0 + $0x4c] sm:$0xf]
    %v36 = vld [vmem:[%s0 + $0x50] sm:$0xf]
    %v37 = vld [vmem:[%s0 + $0x54] sm:$0xf]
    %v38 = vld [vmem:[%s0 + $0x58] sm:$0xf]
    %v39 = vld [vmem:[%s0 + $0x5c] sm:$0xf]
    %v40 = vld [vmem:[%s0 + $0x60] sm:$0xf]
    %v41 = vld [vmem:[%s0 + $0x64] sm:$0xf]
    %v42 = vld [vmem:[%s0 + $0x68] sm:$0xf]
    %v43 = vld [vmem:[%s0 + $0x6c] sm:$0xf]
    %v44 = vld [vmem:[%s0 + $0x70] sm:$0xf]
    %v45 = vld [vmem:[%s0 + $0x74] sm:$0xf]
    %v46 = vld [vmem:[%s0 + $0x78] sm:$0xf]
    %v47 = vld [vmem:[%s0 + $0x7c] sm:$0xf]
    %v48 = vld [vmem:[%s0 + $0x80] sm:$0xf]
    %v49 = vld [vmem:[%s0 + $0x84] sm:$0xf]
    %v50 = vld [vmem:[%s0 + $0x88] sm:$0xf]
    %v51 = vld [vmem:[%s0 + $0x8c] sm:$0xf]
    %v52 = vld [vmem:[%s0 + $0x90] sm:$0xf]
    %v53 = vld [vmem:[%s0 + $0x94] sm:$0xf]
    %v54 = vld [vmem:[%s0 + $0x98] sm:$0xf]
    %v55 = vld [vmem:[%s0 + $0x9c] sm:$0xf]
    %v56 = vld [vmem:[%s0 + $0xa0] sm:$0xf]
    %v57 = vld [vmem:[%s0 + $0xa4] sm:$0xf]
    %v58 = vld [vmem:[%s0 + $0xa8] sm:$0xf]
    %v59 = vld [vmem:[%s0 + $0xac] sm:$0xf]
    %v60 = vld [vmem:[%s0 + $0xb0] sm:$0xf]
    %v61 = vld [vmem:[%s0 + $0xb4] sm:$0xf]
    %v62 = vld [vmem:[%s0 + $0xb8] sm:$0xf]
    %v63 = vld [vmem:[%s0 + $0xbc] sm:$0xf]
    %v64 = vld [vmem:[%s0 + $0xc0] sm:$0xf]
    %v65 = vld [vmem:[%s0 + $0xc4] sm:$0xf]
    %v66 = vld [vmem:[%s0 + $0xc8] sm:$0xf]
    %v67 = vld [vmem:[%s0 + $0xcc] sm:$0xf]
    %v68 = vld [vmem:[%s0 + $0xd0] sm:$0xf]
    %v69 = vld [vmem:[%s0 + $0xd4] sm:$0xf]
    %v70 = vld [vmem:[%s0 + $0xd8] sm:$0xf]
    %v71 = vld [vmem:[%s0 + $0xdc] sm:$0xf]
    %v72 = vld [vmem:[%s0 + $0xe0] sm:$0xf]
    %v73 = vld [vmem:[%s0 + $0xe4] sm:$0xf]
    %v74 = vld [vmem:[%s0 + $0xe8] sm:$0xf]
    %v75 = vld [vmem:[%s0 + $0xec] sm:$0xf]
    %v76 = vld [vmem:[%s0 + $0xf0] sm:$0xf]
    %v77 = vld [vmem:[%s0 + $0xf4] sm:$0xf]
    %v78 = vld [vmem:[%s0 + $0xf8] sm:$0xf]
    %v79 = vld [vmem:[%s0 + $0xfc] sm:$0xf]
    %v80 = vld [vmem:[%s2] sm:$0xf]
    %v81 = vld [vmem:[%s2 + $0x4] sm:$0xf]
    %v82 = vld [vmem:[%s2 + $0x8] sm:$0xf]
    %v83 = vld [vmem:[%s2 + $0xc] sm:$0xf]
    %v84 = vld [vmem:[%s2 + $0x10] sm:$0xf]
    %v85 = vld [vmem:[%s2 + $0x14] sm:$0xf]
    %v86 = vld [vmem:[%s2 + $0x18] sm:$0xf]
    %v87 = vld [vmem:[%s2 + $0x1c] sm:$0xf]
    %v88 = vld [vmem:[%s2 + $0x20] sm:$0xf]
    %v89 = vld [vmem:[%s2 + $0x24] sm:$0xf]
    %v90 = vld [vmem:[%s2 + $0x28] sm:$0xf]
    %v91 = vld [vmem:[%s2 + $0x2c] sm:$0xf]
    %v92 = vld [vmem:[%s2 + $0x30] sm:$0xf]
    %v93 = vld [vmem:[%s2 + $0x34] sm:$0xf]
    %v94 = vld [vmem:[%s2 + $0x38] sm:$0xf]
    %v95 = vld [vmem:[%s2 + $0x3c] sm:$0xf]
    %v96 = vld [vmem:[%s1] sm:$0xff]
    %v97 = vld [vmem:[%s1 + $0x8] sm:$0xff]
    %v98 = vld [vmem:[%s1 + $0x10] sm:$0xff]
    %v99 = vld [vmem:[%s1 + $0x18] sm:$0xff]
    %v100 = vld [vmem:[%s1 + $0x20] sm:$0xff]
    %v101 = vld [vmem:[%s1 + $0x28] sm:$0xff]
    %v102 = vld [vmem:[%s1 + $0x30] sm:$0xff]
    %v103 = vld [vmem:[%s1 + $0x38] sm:$0xff]
    %v104 = vld [vmem:[%s1 + $0x40] sm:$0xff]
    %v105 = vld [vmem:[%s1 + $0x48] sm:$0xff]
    %v106 = vld [vmem:[%s1 + $0x50] sm:$0xff]
    %v107 = vld [vmem:[%s1 + $0x58] sm:$0xff]
    %v108 = vld [vmem:[%s1 + $0x60] sm:$0xff]
    %v109 = vld [vmem:[%s1 + $0x68] sm:$0xff]
    %v110 = vld [vmem:[%s1 + $0x70] sm:$0xff]
    %v111 = vld [vmem:[%s1 + $0x78] sm:$0xff]
    %v112 = vld [vmem:[%s1 + $0x80] sm:$0xff]
    %v113 = vld [vmem:[%s1 + $0x88] sm:$0xff]
    %v114 = vld [vmem:[%s1 + $0x90] sm:$0xff]
    %v115 = vld [vmem:[%s1 + $0x98] sm:$0xff]
    %v116 = vld [vmem:[%s1 + $0xa0] sm:$0xff]
    %v117 = vld [vmem:[%s1 + $0xa8] sm:$0xff]
    %v118 = vld [vmem:[%s1 + $0xb0] sm:$0xff]
    %v119 = vld [vmem:[%s1 + $0xb8] sm:$0xff]
    %v120 = vld [vmem:[%s1 + $0xc0] sm:$0xff]
    %v121 = vld [vmem:[%s1 + $0xc8] sm:$0xff]
    %v122 = vld [vmem:[%s1 + $0xd0] sm:$0xff]
    %v123 = vld [vmem:[%s1 + $0xd8] sm:$0xff]
    %v124 = vld [vmem:[%s1 + $0xe0] sm:$0xff]
    %v125 = vld [vmem:[%s1 + $0xe8] sm:$0xff]
    %v126 = vld [vmem:[%s1 + $0xf0] sm:$0xff]
    %v127 = vld [vmem:[%s1 + $0xf8] sm:$0xff]
    %v128 = vld [vmem:[%s1 + $0x100] sm:$0xff]
    %v129 = vld [vmem:[%s1 + $0x108] sm:$0xff]
    %v130 = vld [vmem:[%s1 + $0x110] sm:$0xff]
    %v131 = vld [vmem:[%s1 + $0x118] sm:$0xff]
    %v132 = vld [vmem:[%s1 + $0x120] sm:$0xff]
    %v133 = vld [vmem:[%s1 + $0x128] sm:$0xff]
    %v134 = vld [vmem:[%s1 + $0x130] sm:$0xff]
    %v135 = vld [vmem:[%s1 + $0x138] sm:$0xff]
    %v136 = vld [vmem:[%s1 + $0x140] sm:$0xff]
    %v137 = vld [vmem:[%s1 + $0x148] sm:$0xff]
    %v138 = vld [vmem:[%s1 + $0x150] sm:$0xff]
    %v139 = vld [vmem:[%s1 + $0x158] sm:$0xff]
    %v140 = vld [vmem:[%s1 + $0x160] sm:$0xff]
    %v141 = vld [vmem:[%s1 + $0x168] sm:$0xff]
    %v142 = vld [vmem:[%s1 + $0x170] sm:$0xff]
    %v143 = vld [vmem:[%s1 + $0x178] sm:$0xff]
    %v144 = vld [vmem:[%s1 + $0x180] sm:$0xff]
    %v145 = vld [vmem:[%s1 + $0x188] sm:$0xff]
    %v146 = vld [vmem:[%s1 + $0x190] sm:$0xff]
    %v147 = vld [vmem:[%s1 + $0x198] sm:$0xff]
    %v148 = vld [vmem:[%s1 + $0x1a0] sm:$0xff]
    %v149 = vld [vmem:[%s1 + $0x1a8] sm:$0xff]
    %v150 = vld [vmem:[%s1 + $0x1b0] sm:$0xff]
    %v151 = vld [vmem:[%s1 + $0x1b8] sm:$0xff]
    %v152 = vld [vmem:[%s1 + $0x1c0] sm:$0xff]
    %v153 = vld [vmem:[%s1 + $0x1c8] sm:$0xff]
    %v154 = vld [vmem:[%s1 + $0x1d0] sm:$0xff]
    %v155 = vld [vmem:[%s1 + $0x1d8] sm:$0xff]
    %v156 = vld [vmem:[%s1 + $0x1e0] sm:$0xff]
    %v157 = vld [vmem:[%s1 + $0x1e8] sm:$0xff]
    %v158 = vld [vmem:[%s1 + $0x1f0] sm:$0xff]
    %v159 = vld [vmem:[%s1 + $0x1f8] sm:$0xff]
    %161 = vset.pattern.permute.xlu0 0
    %162 = vperm.xlu0 %161, %v96
    %v163 = vpop.permute.xlu0 %162
    %166 = vset.pattern.permute.xlu0 0
    %167 = vperm.xlu0 %166, %v97
    %v168 = vpop.permute.xlu0 %167
    %171 = vset.pattern.permute.xlu0 0
    %172 = vperm.xlu0 %171, %v98
    %v173 = vpop.permute.xlu0 %172
    %176 = vset.pattern.permute.xlu0 0
    %177 = vperm.xlu0 %176, %v99
    %v178 = vpop.permute.xlu0 %177
    %181 = vset.pattern.permute.xlu0 0
    %182 = vperm.xlu0 %181, %v100
    %v183 = vpop.permute.xlu0 %182
    %186 = vset.pattern.permute.xlu0 0
    %187 = vperm.xlu0 %186, %v101
    %v188 = vpop.permute.xlu0 %187
    %191 = vset.pattern.permute.xlu0 0
    %192 = vperm.xlu0 %191, %v102
    %v193 = vpop.permute.xlu0 %192
    %196 = vset.pattern.permute.xlu0 0
    %197 = vperm.xlu0 %196, %v103
    %v198 = vpop.permute.xlu0 %197
    %201 = vset.pattern.permute.xlu0 0
    %202 = vperm.xlu0 %201, %v104
    %v203 = vpop.permute.xlu0 %202
    %206 = vset.pattern.permute.xlu0 0
    %207 = vperm.xlu0 %206, %v105
    %v208 = vpop.permute.xlu0 %207
    %211 = vset.pattern.permute.xlu0 0
    %212 = vperm.xlu0 %211, %v106
    %v213 = vpop.permute.xlu0 %212
    %216 = vset.pattern.permute.xlu0 0
    %217 = vperm.xlu0 %216, %v107
    %v218 = vpop.permute.xlu0 %217
    %221 = vset.pattern.permute.xlu0 0
    %222 = vperm.xlu0 %221, %v108
    %v223 = vpop.permute.xlu0 %222
    %226 = vset.pattern.permute.xlu0 0
    %227 = vperm.xlu0 %226, %v109
    %v228 = vpop.permute.xlu0 %227
    %231 = vset.pattern.permute.xlu0 0
    %232 = vperm.xlu0 %231, %v110
    %v233 = vpop.permute.xlu0 %232
    %236 = vset.pattern.permute.xlu0 0
    %237 = vperm.xlu0 %236, %v111
    %v238 = vpop.permute.xlu0 %237
    %241 = vset.pattern.permute.xlu0 0
    %242 = vperm.xlu0 %241, %v112
    %v243 = vpop.permute.xlu0 %242
    %246 = vset.pattern.permute.xlu0 0
    %247 = vperm.xlu0 %246, %v113
    %v248 = vpop.permute.xlu0 %247
    %251 = vset.pattern.permute.xlu0 0
    %252 = vperm.xlu0 %251, %v114
    %v253 = vpop.permute.xlu0 %252
    %256 = vset.pattern.permute.xlu0 0
    %257 = vperm.xlu0 %256, %v115
    %v258 = vpop.permute.xlu0 %257
    %261 = vset.pattern.permute.xlu0 0
    %262 = vperm.xlu0 %261, %v116
    %v263 = vpop.permute.xlu0 %262
    %266 = vset.pattern.permute.xlu0 0
    %267 = vperm.xlu0 %266, %v117
    %v268 = vpop.permute.xlu0 %267
    %271 = vset.pattern.permute.xlu0 0
    %272 = vperm.xlu0 %271, %v118
    %v273 = vpop.permute.xlu0 %272
    %276 = vset.pattern.permute.xlu0 0
    %277 = vperm.xlu0 %276, %v119
    %v278 = vpop.permute.xlu0 %277
    %281 = vset.pattern.permute.xlu0 0
    %282 = vperm.xlu0 %281, %v120
    %v283 = vpop.permute.xlu0 %282
    %286 = vset.pattern.permute.xlu0 0
    %287 = vperm.xlu0 %286, %v121
    %v288 = vpop.permute.xlu0 %287
    %291 = vset.pattern.permute.xlu0 0
    %292 = vperm.xlu0 %291, %v122
    %v293 = vpop.permute.xlu0 %292
    %296 = vset.pattern.permute.xlu0 0
    %297 = vperm.xlu0 %296, %v123
    %v298 = vpop.permute.xlu0 %297
    %301 = vset.pattern.permute.xlu0 0
    %302 = vperm.xlu0 %301, %v124
    %v303 = vpop.permute.xlu0 %302
    %306 = vset.pattern.permute.xlu0 0
    %307 = vperm.xlu0 %306, %v125
    %v308 = vpop.permute.xlu0 %307
    %311 = vset.pattern.permute.xlu0 0
    %312 = vperm.xlu0 %311, %v126
    %v313 = vpop.permute.xlu0 %312
    %316 = vset.pattern.permute.xlu0 0
    %317 = vperm.xlu0 %316, %v127
    %v318 = vpop.permute.xlu0 %317
    %321 = vset.pattern.permute.xlu0 0
    %322 = vperm.xlu0 %321, %v128
    %v323 = vpop.permute.xlu0 %322
    %326 = vset.pattern.permute.xlu0 0
    %327 = vperm.xlu0 %326, %v129
    %v328 = vpop.permute.xlu0 %327
    %331 = vset.pattern.permute.xlu0 0
    %332 = vperm.xlu0 %331, %v130
    %v333 = vpop.permute.xlu0 %332
    %336 = vset.pattern.permute.xlu0 0
    %337 = vperm.xlu0 %336, %v131
    %v338 = vpop.permute.xlu0 %337
    %341 = vset.pattern.permute.xlu0 0
    %342 = vperm.xlu0 %341, %v132
    %v343 = vpop.permute.xlu0 %342
    %346 = vset.pattern.permute.xlu0 0
    %347 = vperm.xlu0 %346, %v133
    %v348 = vpop.permute.xlu0 %347
    %351 = vset.pattern.permute.xlu0 0
    %352 = vperm.xlu0 %351, %v134
    %v353 = vpop.permute.xlu0 %352
    %356 = vset.pattern.permute.xlu0 0
    %357 = vperm.xlu0 %356, %v135
    %v358 = vpop.permute.xlu0 %357
    %361 = vset.pattern.permute.xlu0 0
    %362 = vperm.xlu0 %361, %v136
    %v363 = vpop.permute.xlu0 %362
    %366 = vset.pattern.permute.xlu0 0
    %367 = vperm.xlu0 %366, %v137
    %v368 = vpop.permute.xlu0 %367
    %371 = vset.pattern.permute.xlu0 0
    %372 = vperm.xlu0 %371, %v138
    %v373 = vpop.permute.xlu0 %372
    %376 = vset.pattern.permute.xlu0 0
    %377 = vperm.xlu0 %376, %v139
    %v378 = vpop.permute.xlu0 %377
    %381 = vset.pattern.permute.xlu0 0
    %382 = vperm.xlu0 %381, %v140
    %v383 = vpop.permute.xlu0 %382
    %386 = vset.pattern.permute.xlu0 0
    %387 = vperm.xlu0 %386, %v141
    %v388 = vpop.permute.xlu0 %387
    %391 = vset.pattern.permute.xlu0 0
    %392 = vperm.xlu0 %391, %v142
    %v393 = vpop.permute.xlu0 %392
    %396 = vset.pattern.permute.xlu0 0
    %397 = vperm.xlu0 %396, %v143
    %v398 = vpop.permute.xlu0 %397
    %401 = vset.pattern.permute.xlu0 0
    %402 = vperm.xlu0 %401, %v144
    %v403 = vpop.permute.xlu0 %402
    %406 = vset.pattern.permute.xlu0 0
    %407 = vperm.xlu0 %406, %v145
    %v408 = vpop.permute.xlu0 %407
    %411 = vset.pattern.permute.xlu0 0
    %412 = vperm.xlu0 %411, %v146
    %v413 = vpop.permute.xlu0 %412
    %416 = vset.pattern.permute.xlu0 0
    %417 = vperm.xlu0 %416, %v147
    %v418 = vpop.permute.xlu0 %417
    %421 = vset.pattern.permute.xlu0 0
    %422 = vperm.xlu0 %421, %v148
    %v423 = vpop.permute.xlu0 %422
    %426 = vset.pattern.permute.xlu0 0
    %427 = vperm.xlu0 %426, %v149
    %v428 = vpop.permute.xlu0 %427
    %431 = vset.pattern.permute.xlu0 0
    %432 = vperm.xlu0 %431, %v150
    %v433 = vpop.permute.xlu0 %432
    %436 = vset.pattern.permute.xlu0 0
    %437 = vperm.xlu0 %436, %v151
    %v438 = vpop.permute.xlu0 %437
    %441 = vset.pattern.permute.xlu0 0
    %442 = vperm.xlu0 %441, %v152
    %v443 = vpop.permute.xlu0 %442
    %446 = vset.pattern.permute.xlu0 0
    %447 = vperm.xlu0 %446, %v153
    %v448 = vpop.permute.xlu0 %447
    %451 = vset.pattern.permute.xlu0 0
    %452 = vperm.xlu0 %451, %v154
    %v453 = vpop.permute.xlu0 %452
    %456 = vset.pattern.permute.xlu0 0
    %457 = vperm.xlu0 %456, %v155
    %v458 = vpop.permute.xlu0 %457
    %461 = vset.pattern.permute.xlu0 0
    %462 = vperm.xlu0 %461, %v156
    %v463 = vpop.permute.xlu0 %462
    %466 = vset.pattern.permute.xlu0 0
    %467 = vperm.xlu0 %466, %v157
    %v468 = vpop.permute.xlu0 %467
    %471 = vset.pattern.permute.xlu0 0
    %472 = vperm.xlu0 %471, %v158
    %v473 = vpop.permute.xlu0 %472
    %476 = vset.pattern.permute.xlu0 0
    %477 = vperm.xlu0 %476, %v159
    %v478 = vpop.permute.xlu0 %477
    %v544 = vunpack.c.l.b16 %v16
    %v545 = vunpack.c.l.b16 %v17
    %v546 = vunpack.c.l.b16 %v18
    %v547 = vunpack.c.l.b16 %v19
    %v548 = vunpack.c.l.b16 %v20
    %v549 = vunpack.c.l.b16 %v21
    %v550 = vunpack.c.l.b16 %v22
    %v551 = vunpack.c.l.b16 %v23
    %v552 = vunpack.c.l.b16 %v24
    %v553 = vunpack.c.l.b16 %v25
    %v554 = vunpack.c.l.b16 %v26
    %v555 = vunpack.c.l.b16 %v27
    %v556 = vunpack.c.l.b16 %v28
    %v557 = vunpack.c.l.b16 %v29
    %v558 = vunpack.c.l.b16 %v30
    %v559 = vunpack.c.l.b16 %v31
    %v560 = vunpack.c.l.b16 %v32
    %v561 = vunpack.c.l.b16 %v33
    %v562 = vunpack.c.l.b16 %v34
    %v563 = vunpack.c.l.b16 %v35
    %v564 = vunpack.c.l.b16 %v36
    %v565 = vunpack.c.l.b16 %v37
    %v566 = vunpack.c.l.b16 %v38
    %v567 = vunpack.c.l.b16 %v39
    %v568 = vunpack.c.l.b16 %v40
    %v569 = vunpack.c.l.b16 %v41
    %v570 = vunpack.c.l.b16 %v42
    %v571 = vunpack.c.l.b16 %v43
    %v572 = vunpack.c.l.b16 %v44
    %v573 = vunpack.c.l.b16 %v45
    %v574 = vunpack.c.l.b16 %v46
    %v575 = vunpack.c.l.b16 %v47
    %v576 = vunpack.c.l.b16 %v48
    %v577 = vunpack.c.l.b16 %v49
    %v578 = vunpack.c.l.b16 %v50
    %v579 = vunpack.c.l.b16 %v51
    %v580 = vunpack.c.l.b16 %v52
    %v581 = vunpack.c.l.b16 %v53
    %v582 = vunpack.c.l.b16 %v54
    %v583 = vunpack.c.l.b16 %v55
    %v584 = vunpack.c.l.b16 %v56
    %v585 = vunpack.c.l.b16 %v57
    %v586 = vunpack.c.l.b16 %v58
    %v587 = vunpack.c.l.b16 %v59
    %v588 = vunpack.c.l.b16 %v60
    %v589 = vunpack.c.l.b16 %v61
    %v590 = vunpack.c.l.b16 %v62
    %v591 = vunpack.c.l.b16 %v63
    %v592 = vunpack.c.l.b16 %v64
    %v593 = vunpack.c.l.b16 %v65
    %v594 = vunpack.c.l.b16 %v66
    %v595 = vunpack.c.l.b16 %v67
    %v596 = vunpack.c.l.b16 %v68
    %v597 = vunpack.c.l.b16 %v69
    %v598 = vunpack.c.l.b16 %v70
    %v599 = vunpack.c.l.b16 %v71
    %v600 = vunpack.c.l.b16 %v72
    %v601 = vunpack.c.l.b16 %v73
    %v602 = vunpack.c.l.b16 %v74
    %v603 = vunpack.c.l.b16 %v75
    %v604 = vunpack.c.l.b16 %v76
    %v605 = vunpack.c.l.b16 %v77
    %v606 = vunpack.c.l.b16 %v78
    %v607 = vunpack.c.l.b16 %v79
    %v608 = vpack.c.b16 %v545, %v544
    %v609 = vpack.c.b16 %v547, %v546
    %v610 = vpack.c.b16 %v549, %v548
    %v611 = vpack.c.b16 %v551, %v550
    %v612 = vpack.c.b16 %v553, %v552
    %v613 = vpack.c.b16 %v555, %v554
    %v614 = vpack.c.b16 %v557, %v556
    %v615 = vpack.c.b16 %v559, %v558
    %v616 = vpack.c.b16 %v561, %v560
    %v617 = vpack.c.b16 %v563, %v562
    %v618 = vpack.c.b16 %v565, %v564
    %v619 = vpack.c.b16 %v567, %v566
    %v620 = vpack.c.b16 %v569, %v568
    %v621 = vpack.c.b16 %v571, %v570
    %v622 = vpack.c.b16 %v573, %v572
    %v623 = vpack.c.b16 %v575, %v574
    %v624 = vpack.c.b16 %v577, %v576
    %v625 = vpack.c.b16 %v579, %v578
    %v626 = vpack.c.b16 %v581, %v580
    %v627 = vpack.c.b16 %v583, %v582
    %v628 = vpack.c.b16 %v585, %v584
    %v629 = vpack.c.b16 %v587, %v586
    %v630 = vpack.c.b16 %v589, %v588
    %v631 = vpack.c.b16 %v591, %v590
    %v632 = vpack.c.b16 %v593, %v592
    %v633 = vpack.c.b16 %v595, %v594
    %v634 = vpack.c.b16 %v597, %v596
    %v635 = vpack.c.b16 %v599, %v598
    %v636 = vpack.c.b16 %v601, %v600
    %v637 = vpack.c.b16 %v603, %v602
    %v638 = vpack.c.b16 %v605, %v604
    %v639 = vpack.c.b16 %v607, %v606
    %v688 = vunpack.c.l.b16 %v80
    %v689 = vunpack.c.l.b16 %v81
    %v690 = vunpack.c.l.b16 %v82
    %v691 = vunpack.c.l.b16 %v83
    %v692 = vunpack.c.l.b16 %v84
    %v693 = vunpack.c.l.b16 %v85
    %v694 = vunpack.c.l.b16 %v86
    %v695 = vunpack.c.l.b16 %v87
    %v696 = vunpack.c.l.b16 %v88
    %v697 = vunpack.c.l.b16 %v89
    %v698 = vunpack.c.l.b16 %v90
    %v699 = vunpack.c.l.b16 %v91
    %v700 = vunpack.c.l.b16 %v92
    %v701 = vunpack.c.l.b16 %v93
    %v702 = vunpack.c.l.b16 %v94
    %v703 = vunpack.c.l.b16 %v95
    %v704 = vpack.c.b16 %v689, %v688
    %v705 = vpack.c.b16 %v691, %v690
    %v706 = vpack.c.b16 %v693, %v692
    %v707 = vpack.c.b16 %v695, %v694
    %v708 = vpack.c.b16 %v697, %v696
    %v709 = vpack.c.b16 %v699, %v698
    %v710 = vpack.c.b16 %v701, %v700
    %v711 = vpack.c.b16 %v703, %v702
    %720 = vmatprep.subr.bf16.mxu0 0
    %721 = vmatpush1.bf16.msra.mxu0 %v704
    %722 = vmatprep.subr.bf16.mxu0 0
    %723 = vmatpush1.bf16.msra.mxu0 %v705
    %724 = vmatprep.subr.bf16.mxu0 0
    %725 = vmatpush1.bf16.msra.mxu0 %v706
    %726 = vmatprep.subr.bf16.mxu0 0
    %727 = vmatpush1.bf16.msra.mxu0 %v707
    %728 = vmatprep.subr.bf16.mxu0 0
    %729 = vmatpush1.bf16.msra.mxu0 %v708
    %730 = vmatprep.subr.bf16.mxu0 0
    %731 = vmatpush1.bf16.msra.mxu0 %v709
    %732 = vmatprep.subr.bf16.mxu0 0
    %733 = vmatpush1.bf16.msra.mxu0 %v710
    %734 = vmatprep.subr.bf16.mxu0 0
    %735 = vmatpush1.bf16.msra.mxu0 %v711
    %736 = vmatprep.subr.bf16.mxu0 0
    %737 = vmatpush1.bf16.msra.mxu0 0
    %738 = vmatprep.subr.bf16.mxu0 0
    %739 = vmatpush1.bf16.msra.mxu0 0
    %740 = vmatprep.subr.bf16.mxu0 0
    %741 = vmatpush1.bf16.msra.mxu0 0
    %742 = vmatprep.subr.bf16.mxu0 0
    %743 = vmatpush1.bf16.msra.mxu0 0
    %744 = vmatprep.subr.bf16.mxu0 0
    %745 = vmatpush1.bf16.msra.mxu0 0
    %746 = vmatprep.subr.bf16.mxu0 0
    %747 = vmatpush1.bf16.msra.mxu0 0
    %748 = vmatprep.subr.bf16.mxu0 0
    %749 = vmatpush1.bf16.msra.mxu0 0
    %750 = vmatprep.subr.bf16.mxu0 0
    %751 = vmatpush1.bf16.msra.mxu0 0
    %752 = vmatprep.mubr.bf16.mxu0 0
    %753 = vmatmul.mubr.bf16.gmra.mrb[0].mxu0 %v608
    %v754 = vpop.f32.mrb[0].mxu0
    %v755 = vadd.f32 %v163, %v754
    %v756 = vpop.f32.mrb[0].mxu0
    %v757 = vpop.f32.mrb[0].mxu0
    %v758 = vadd.f32 %v168, %v757
    %v759 = vpop.f32.mrb[0].mxu0
    %760 = vmatprep.mubr.bf16.mxu0 0
    %761 = vmatmul.mubr.bf16.gmra.mrb[0].mxu0 %v609
    %v762 = vpop.f32.mrb[0].mxu0
    %v763 = vadd.f32 %v173, %v762
    %v764 = vpop.f32.mrb[0].mxu0
    %v765 = vpop.f32.mrb[0].mxu0
    %v766 = vadd.f32 %v178, %v765
    %v767 = vpop.f32.mrb[0].mxu0
    %768 = vmatprep.mubr.bf16.mxu0 0
    %769 = vmatmul.mubr.bf16.gmra.mrb[0].mxu0 %v610
    %v770 = vpop.f32.mrb[0].mxu0
    %v771 = vadd.f32 %v183, %v770
    %v772 = vpop.f32.mrb[0].mxu0
    %v773 = vpop.f32.mrb[0].mxu0
    %v774 = vadd.f32 %v188, %v773
    %v775 = vpop.f32.mrb[0].mxu0
    %776 = vmatprep.mubr.bf16.mxu0 0
    %777 = vmatmul.mubr.bf16.gmra.mrb[0].mxu0 %v611
    %v778 = vpop.f32.mrb[0].mxu0
    %v779 = vadd.f32 %v193, %v778
    %v780 = vpop.f32.mrb[0].mxu0
    %v781 = vpop.f32.mrb[0].mxu0
    %v782 = vadd.f32 %v198, %v781
    %v783 = vpop.f32.mrb[0].mxu0
    %784 = vmatprep.mubr.bf16.mxu0 0
    %785 = vmatmul.mubr.bf16.gmra.mrb[0].mxu0 %v612
    %v786 = vpop.f32.mrb[0].mxu0
    %v787 = vadd.f32 %v203, %v786
    %v788 = vpop.f32.mrb[0].mxu0
    %v789 = vpop.f32.mrb[0].mxu0
    %v790 = vadd.f32 %v208, %v789
    %v791 = vpop.f32.mrb[0].mxu0
    %792 = vmatprep.mubr.bf16.mxu0 0
    %793 = vmatmul.mubr.bf16.gmra.mrb[0].mxu0 %v613
    %v794 = vpop.f32.mrb[0].mxu0
    %v795 = vadd.f32 %v213, %v794
    %v796 = vpop.f32.mrb[0].mxu0
    %v797 = vpop.f32.mrb[0].mxu0
    %v798 = vadd.f32 %v218, %v797
    %v799 = vpop.f32.mrb[0].mxu0
    %800 = vmatprep.mubr.bf16.mxu0 0
    %801 = vmatmul.mubr.bf16.gmra.mrb[0].mxu0 %v614
    %v802 = vpop.f32.mrb[0].mxu0
    %v803 = vadd.f32 %v223, %v802
    %v804 = vpop.f32.mrb[0].mxu0
    %v805 = vpop.f32.mrb[0].mxu0
    %v806 = vadd.f32 %v228, %v805
    %v807 = vpop.f32.mrb[0].mxu0
    %808 = vmatprep.mubr.bf16.mxu0 0
    %809 = vmatmul.mubr.bf16.gmra.mrb[0].mxu0 %v615
    %v810 = vpop.f32.mrb[0].mxu0
    %v811 = vadd.f32 %v233, %v810
    %v812 = vpop.f32.mrb[0].mxu0
    %v813 = vpop.f32.mrb[0].mxu0
    %v814 = vadd.f32 %v238, %v813
    %v815 = vpop.f32.mrb[0].mxu0
    %816 = vmatprep.mubr.bf16.mxu0 0
    %817 = vmatmul.mubr.bf16.gmra.mrb[0].mxu0 %v616
    %v818 = vpop.f32.mrb[0].mxu0
    %v819 = vadd.f32 %v243, %v818
    %v820 = vpop.f32.mrb[0].mxu0
    %v821 = vpop.f32.mrb[0].mxu0
    %v822 = vadd.f32 %v248, %v821
    %v823 = vpop.f32.mrb[0].mxu0
    %824 = vmatprep.mubr.bf16.mxu0 0
    %825 = vmatmul.mubr.bf16.gmra.mrb[0].mxu0 %v617
    %v826 = vpop.f32.mrb[0].mxu0
    %v827 = vadd.f32 %v253, %v826
    %v828 = vpop.f32.mrb[0].mxu0
    %v829 = vpop.f32.mrb[0].mxu0
    %v830 = vadd.f32 %v258, %v829
    %v831 = vpop.f32.mrb[0].mxu0
    %832 = vmatprep.mubr.bf16.mxu0 0
    %833 = vmatmul.mubr.bf16.gmra.mrb[0].mxu0 %v618
    %v834 = vpop.f32.mrb[0].mxu0
    %v835 = vadd.f32 %v263, %v834
    %v836 = vpop.f32.mrb[0].mxu0
    %v837 = vpop.f32.mrb[0].mxu0
    %v838 = vadd.f32 %v268, %v837
    %v839 = vpop.f32.mrb[0].mxu0
    %840 = vmatprep.mubr.bf16.mxu0 0
    %841 = vmatmul.mubr.bf16.gmra.mrb[0].mxu0 %v619
    %v842 = vpop.f32.mrb[0].mxu0
    %v843 = vadd.f32 %v273, %v842
    %v844 = vpop.f32.mrb[0].mxu0
    %v845 = vpop.f32.mrb[0].mxu0
    %v846 = vadd.f32 %v278, %v845
    %v847 = vpop.f32.mrb[0].mxu0
    %848 = vmatprep.mubr.bf16.mxu0 0
    %849 = vmatmul.mubr.bf16.gmra.mrb[0].mxu0 %v620
    %v850 = vpop.f32.mrb[0].mxu0
    %v851 = vadd.f32 %v283, %v850
    %v852 = vpop.f32.mrb[0].mxu0
    %v853 = vpop.f32.mrb[0].mxu0
    %v854 = vadd.f32 %v288, %v853
    %v855 = vpop.f32.mrb[0].mxu0
    %856 = vmatprep.mubr.bf16.mxu0 0
    %857 = vmatmul.mubr.bf16.gmra.mrb[0].mxu0 %v621
    %v858 = vpop.f32.mrb[0].mxu0
    %v859 = vadd.f32 %v293, %v858
    %v860 = vpop.f32.mrb[0].mxu0
    %v861 = vpop.f32.mrb[0].mxu0
    %v862 = vadd.f32 %v298, %v861
    %v863 = vpop.f32.mrb[0].mxu0
    %864 = vmatprep.mubr.bf16.mxu0 0
    %865 = vmatmul.mubr.bf16.gmra.mrb[0].mxu0 %v622
    %v866 = vpop.f32.mrb[0].mxu0
    %v867 = vadd.f32 %v303, %v866
    %v868 = vpop.f32.mrb[0].mxu0
    %v869 = vpop.f32.mrb[0].mxu0
    %v870 = vadd.f32 %v308, %v869
    %v871 = vpop.f32.mrb[0].mxu0
    %872 = vmatprep.mubr.bf16.mxu0 0
    %873 = vmatmul.mubr.bf16.gmra.mrb[0].mxu0 %v623
    %v874 = vpop.f32.mrb[0].mxu0
    %v875 = vadd.f32 %v313, %v874
    %v876 = vpop.f32.mrb[0].mxu0
    %v877 = vpop.f32.mrb[0].mxu0
    %v878 = vadd.f32 %v318, %v877
    %v879 = vpop.f32.mrb[0].mxu0
    %880 = vmatprep.mubr.bf16.mxu0 0
    %881 = vmatmul.mubr.bf16.gmra.mrb[0].mxu0 %v624
    %v882 = vpop.f32.mrb[0].mxu0
    %v883 = vadd.f32 %v323, %v882
    %v884 = vpop.f32.mrb[0].mxu0
    %v885 = vpop.f32.mrb[0].mxu0
    %v886 = vadd.f32 %v328, %v885
    %v887 = vpop.f32.mrb[0].mxu0
    %888 = vmatprep.mubr.bf16.mxu0 0
    %889 = vmatmul.mubr.bf16.gmra.mrb[0].mxu0 %v625
    %v890 = vpop.f32.mrb[0].mxu0
    %v891 = vadd.f32 %v333, %v890
    %v892 = vpop.f32.mrb[0].mxu0
    %v893 = vpop.f32.mrb[0].mxu0
    %v894 = vadd.f32 %v338, %v893
    %v895 = vpop.f32.mrb[0].mxu0
    %896 = vmatprep.mubr.bf16.mxu0 0
    %897 = vmatmul.mubr.bf16.gmra.mrb[0].mxu0 %v626
    %v898 = vpop.f32.mrb[0].mxu0
    %v899 = vadd.f32 %v343, %v898
    %v900 = vpop.f32.mrb[0].mxu0
    %v901 = vpop.f32.mrb[0].mxu0
    %v902 = vadd.f32 %v348, %v901
    %v903 = vpop.f32.mrb[0].mxu0
    %904 = vmatprep.mubr.bf16.mxu0 0
    %905 = vmatmul.mubr.bf16.gmra.mrb[0].mxu0 %v627
    %v906 = vpop.f32.mrb[0].mxu0
    %v907 = vadd.f32 %v353, %v906
    %v908 = vpop.f32.mrb[0].mxu0
    %v909 = vpop.f32.mrb[0].mxu0
    %v910 = vadd.f32 %v358, %v909
    %v911 = vpop.f32.mrb[0].mxu0
    %912 = vmatprep.mubr.bf16.mxu0 0
    %913 = vmatmul.mubr.bf16.gmra.mrb[0].mxu0 %v628
    %v914 = vpop.f32.mrb[0].mxu0
    %v915 = vadd.f32 %v363, %v914
    %v916 = vpop.f32.mrb[0].mxu0
    %v917 = vpop.f32.mrb[0].mxu0
    %v918 = vadd.f32 %v368, %v917
    %v919 = vpop.f32.mrb[0].mxu0
    %920 = vmatprep.mubr.bf16.mxu0 0
    %921 = vmatmul.mubr.bf16.gmra.mrb[0].mxu0 %v629
    %v922 = vpop.f32.mrb[0].mxu0
    %v923 = vadd.f32 %v373, %v922
    %v924 = vpop.f32.mrb[0].mxu0
    %v925 = vpop.f32.mrb[0].mxu0
    %v926 = vadd.f32 %v378, %v925
    %v927 = vpop.f32.mrb[0].mxu0
    %928 = vmatprep.mubr.bf16.mxu0 0
    %929 = vmatmul.mubr.bf16.gmra.mrb[0].mxu0 %v630
    %v930 = vpop.f32.mrb[0].mxu0
    %v931 = vadd.f32 %v383, %v930
    %v932 = vpop.f32.mrb[0].mxu0
    %v933 = vpop.f32.mrb[0].mxu0
    %v934 = vadd.f32 %v388, %v933
    %v935 = vpop.f32.mrb[0].mxu0
    %936 = vmatprep.mubr.bf16.mxu0 0
    %937 = vmatmul.mubr.bf16.gmra.mrb[0].mxu0 %v631
    %v938 = vpop.f32.mrb[0].mxu0
    %v939 = vadd.f32 %v393, %v938
    %v940 = vpop.f32.mrb[0].mxu0
    %v941 = vpop.f32.mrb[0].mxu0
    %v942 = vadd.f32 %v398, %v941
    %v943 = vpop.f32.mrb[0].mxu0
    %944 = vmatprep.mubr.bf16.mxu0 0
    %945 = vmatmul.mubr.bf16.gmra.mrb[0].mxu0 %v632
    %v946 = vpop.f32.mrb[0].mxu0
    %v947 = vadd.f32 %v403, %v946
    %v948 = vpop.f32.mrb[0].mxu0
    %v949 = vpop.f32.mrb[0].mxu0
    %v950 = vadd.f32 %v408, %v949
    %v951 = vpop.f32.mrb[0].mxu0
    %952 = vmatprep.mubr.bf16.mxu0 0
    %953 = vmatmul.mubr.bf16.gmra.mrb[0].mxu0 %v633
    %v954 = vpop.f32.mrb[0].mxu0
    %v955 = vadd.f32 %v413, %v954
    %v956 = vpop.f32.mrb[0].mxu0
    %v957 = vpop.f32.mrb[0].mxu0
    %v958 = vadd.f32 %v418, %v957
    %v959 = vpop.f32.mrb[0].mxu0
    %960 = vmatprep.mubr.bf16.mxu0 0
    %961 = vmatmul.mubr.bf16.gmra.mrb[0].mxu0 %v634
    %v962 = vpop.f32.mrb[0].mxu0
    %v963 = vadd.f32 %v423, %v962
    %v964 = vpop.f32.mrb[0].mxu0
    %v965 = vpop.f32.mrb[0].mxu0
    %v966 = vadd.f32 %v428, %v965
    %v967 = vpop.f32.mrb[0].mxu0
    %968 = vmatprep.mubr.bf16.mxu0 0
    %969 = vmatmul.mubr.bf16.gmra.mrb[0].mxu0 %v635
    %v970 = vpop.f32.mrb[0].mxu0
    %v971 = vadd.f32 %v433, %v970
    %v972 = vpop.f32.mrb[0].mxu0
    %v973 = vpop.f32.mrb[0].mxu0
    %v974 = vadd.f32 %v438, %v973
    %v975 = vpop.f32.mrb[0].mxu0
    %976 = vmatprep.mubr.bf16.mxu0 0
    %977 = vmatmul.mubr.bf16.gmra.mrb[0].mxu0 %v636
    %v978 = vpop.f32.mrb[0].mxu0
    %v979 = vadd.f32 %v443, %v978
    %v980 = vpop.f32.mrb[0].mxu0
    %v981 = vpop.f32.mrb[0].mxu0
    %v982 = vadd.f32 %v448, %v981
    %v983 = vpop.f32.mrb[0].mxu0
    %984 = vmatprep.mubr.bf16.mxu0 0
    %985 = vmatmul.mubr.bf16.gmra.mrb[0].mxu0 %v637
    %v986 = vpop.f32.mrb[0].mxu0
    %v987 = vadd.f32 %v453, %v986
    %v988 = vpop.f32.mrb[0].mxu0
    %v989 = vpop.f32.mrb[0].mxu0
    %v990 = vadd.f32 %v458, %v989
    %v991 = vpop.f32.mrb[0].mxu0
    %992 = vmatprep.mubr.bf16.mxu0 0
    %993 = vmatmul.mubr.bf16.gmra.mrb[0].mxu0 %v638
    %v994 = vpop.f32.mrb[0].mxu0
    %v995 = vadd.f32 %v463, %v994
    %v996 = vpop.f32.mrb[0].mxu0
    %v997 = vpop.f32.mrb[0].mxu0
    %v998 = vadd.f32 %v468, %v997
    %v999 = vpop.f32.mrb[0].mxu0
    %1000 = vmatprep.mubr.bf16.mxu0 0
    %1001 = vmatmul.mubr.bf16.gmra.mrb[0].mxu0 %v639
    %v1002 = vpop.f32.mrb[0].mxu0
    %v1003 = vadd.f32 %v473, %v1002
    %v1004 = vpop.f32.mrb[0].mxu0
    %v1005 = vpop.f32.mrb[0].mxu0
    %v1006 = vadd.f32 %v478, %v1005
    %v1007 = vpop.f32.mrb[0].mxu0
    %1008 = vdwg.mxu0
    %1009 = vst [vmem:[#allocation2] sm:$0xff] %v755
    %1010 = vst [vmem:[#allocation2 + $0x8] sm:$0xff] %v758
    %1011 = vst [vmem:[#allocation2 + $0x10] sm:$0xff] %v763
    %1012 = vst [vmem:[#allocation2 + $0x18] sm:$0xff] %v766
    %1013 = vst [vmem:[#allocation2 + $0x20] sm:$0xff] %v771
    %1014 = vst [vmem:[#allocation2 + $0x28] sm:$0xff] %v774
    %1015 = vst [vmem:[#allocation2 + $0x30] sm:$0xff] %v779
    %1016 = vst [vmem:[#allocation2 + $0x38] sm:$0xff] %v782
    %1017 = vst [vmem:[#allocation2 + $0x40] sm:$0xff] %v787
    %1018 = vst [vmem:[#allocation2 + $0x48] sm:$0xff] %v790
    %1019 = vst [vmem:[#allocation2 + $0x50] sm:$0xff] %v795
    %1020 = vst [vmem:[#allocation2 + $0x58] sm:$0xff] %v798
    %1021 = vst [vmem:[#allocation2 + $0x60] sm:$0xff] %v803
    %1022 = vst [vmem:[#allocation2 + $0x68] sm:$0xff] %v806
    %1023 = vst [vmem:[#allocation2 + $0x70] sm:$0xff] %v811
    %1024 = vst [vmem:[#allocation2 + $0x78] sm:$0xff] %v814
    %1025 = vst [vmem:[#allocation2 + $0x80] sm:$0xff] %v819
    %1026 = vst [vmem:[#allocation2 + $0x88] sm:$0xff] %v822
    %1027 = vst [vmem:[#allocation2 + $0x90] sm:$0xff] %v827
    %1028 = vst [vmem:[#allocation2 + $0x98] sm:$0xff] %v830
    %1029 = vst [vmem:[#allocation2 + $0xa0] sm:$0xff] %v835
    %1030 = vst [vmem:[#allocation2 + $0xa8] sm:$0xff] %v838
    %1031 = vst [vmem:[#allocation2 + $0xb0] sm:$0xff] %v843
    %1032 = vst [vmem:[#allocation2 + $0xb8] sm:$0xff] %v846
    %1033 = vst [vmem:[#allocation2 + $0xc0] sm:$0xff] %v851
    %1034 = vst [vmem:[#allocation2 + $0xc8] sm:$0xff] %v854
    %1035 = vst [vmem:[#allocation2 + $0xd0] sm:$0xff] %v859
    %1036 = vst [vmem:[#allocation2 + $0xd8] sm:$0xff] %v862
    %1037 = vst [vmem:[#allocation2 + $0xe0] sm:$0xff] %v867
    %1038 = vst [vmem:[#allocation2 + $0xe8] sm:$0xff] %v870
    %1039 = vst [vmem:[#allocation2 + $0xf0] sm:$0xff] %v875
    %1040 = vst [vmem:[#allocation2 + $0xf8] sm:$0xff] %v878
    %1041 = vst [vmem:[#allocation2 + $0x100] sm:$0xff] %v883
    %1042 = vst [vmem:[#allocation2 + $0x108] sm:$0xff] %v886
    %1043 = vst [vmem:[#allocation2 + $0x110] sm:$0xff] %v891
    %1044 = vst [vmem:[#allocation2 + $0x118] sm:$0xff] %v894
    %1045 = vst [vmem:[#allocation2 + $0x120] sm:$0xff] %v899
    %1046 = vst [vmem:[#allocation2 + $0x128] sm:$0xff] %v902
    %1047 = vst [vmem:[#allocation2 + $0x130] sm:$0xff] %v907
    %1048 = vst [vmem:[#allocation2 + $0x138] sm:$0xff] %v910
    %1049 = vst [vmem:[#allocation2 + $0x140] sm:$0xff] %v915
    %1050 = vst [vmem:[#allocation2 + $0x148] sm:$0xff] %v918
    %1051 = vst [vmem:[#allocation2 + $0x150] sm:$0xff] %v923
    %1052 = vst [vmem:[#allocation2 + $0x158] sm:$0xff] %v926
    %1053 = vst [vmem:[#allocation2 + $0x160] sm:$0xff] %v931
    %1054 = vst [vmem:[#allocation2 + $0x168] sm:$0xff] %v934
    %1055 = vst [vmem:[#allocation2 + $0x170] sm:$0xff] %v939
    %1056 = vst [vmem:[#allocation2 + $0x178] sm:$0xff] %v942
    %1057 = vst [vmem:[#allocation2 + $0x180] sm:$0xff] %v947
    %1058 = vst [vmem:[#allocation2 + $0x188] sm:$0xff] %v950
    %1059 = vst [vmem:[#allocation2 + $0x190] sm:$0xff] %v955
    %1060 = vst [vmem:[#allocation2 + $0x198] sm:$0xff] %v958
    %1061 = vst [vmem:[#allocation2 + $0x1a0] sm:$0xff] %v963
    %1062 = vst [vmem:[#allocation2 + $0x1a8] sm:$0xff] %v966
    %1063 = vst [vmem:[#allocation2 + $0x1b0] sm:$0xff] %v971
    %1064 = vst [vmem:[#allocation2 + $0x1b8] sm:$0xff] %v974
    %1065 = vst [vmem:[#allocation2 + $0x1c0] sm:$0xff] %v979
    %1066 = vst [vmem:[#allocation2 + $0x1c8] sm:$0xff] %v982
    %1067 = vst [vmem:[#allocation2 + $0x1d0] sm:$0xff] %v987
    %1068 = vst [vmem:[#allocation2 + $0x1d8] sm:$0xff] %v990
    %1069 = vst [vmem:[#allocation2 + $0x1e0] sm:$0xff] %v995
    %1070 = vst [vmem:[#allocation2 + $0x1e8] sm:$0xff] %v998
    %1071 = vst [vmem:[#allocation2 + $0x1f0] sm:$0xff] %v1003
    %1072 = vst [vmem:[#allocation2 + $0x1f8] sm:$0xff] %v1006
    %v1073 = vld [vmem:[#allocation2] sm:$0xff]
    %v1074 = vld [vmem:[#allocation2 + $0x8] sm:$0xff]
    %v1075 = vld [vmem:[#allocation2 + $0x40] sm:$0xff]
    %v1076 = vld [vmem:[#allocation2 + $0x48] sm:$0xff]
    %v1077 = vadd.f32 %v1073, %v1075
    %v1078 = vadd.f32 %v1074, %v1076
    %v1079 = vld [vmem:[#allocation2 + $0x80] sm:$0xff]
    %v1080 = vld [vmem:[#allocation2 + $0x88] sm:$0xff]
    %v1081 = vadd.f32 %v1077, %v1079
    %v1082 = vadd.f32 %v1078, %v1080
    %v1083 = vld [vmem:[#allocation2 + $0xc0] sm:$0xff]
    %v1084 = vld [vmem:[#allocation2 + $0xc8] sm:$0xff]
    %v1085 = vadd.f32 %v1081, %v1083
    %v1086 = vadd.f32 %v1082, %v1084
    %v1087 = vld [vmem:[#allocation2 + $0x100] sm:$0xff]
    %v1088 = vld [vmem:[#allocation2 + $0x108] sm:$0xff]
    %v1089 = vadd.f32 %v1085, %v1087
    %v1090 = vadd.f32 %v1086, %v1088
    %v1091 = vld [vmem:[#allocation2 + $0x140] sm:$0xff]
    %v1092 = vld [vmem:[#allocation2 + $0x148] sm:$0xff]
    %v1093 = vadd.f32 %v1089, %v1091
    %v1094 = vadd.f32 %v1090, %v1092
    %v1095 = vld [vmem:[#allocation2 + $0x180] sm:$0xff]
    %v1096 = vld [vmem:[#allocation2 + $0x188] sm:$0xff]
    %v1097 = vadd.f32 %v1093, %v1095
    %v1098 = vadd.f32 %v1094, %v1096
    %v1099 = vld [vmem:[#allocation2 + $0x1c0] sm:$0xff]
    %v1100 = vld [vmem:[#allocation2 + $0x1c8] sm:$0xff]
    %v1101 = vadd.f32 %v1097, %v1099
    %v1102 = vadd.f32 %v1098, %v1100
    %v1103 = vmul.f32 %v1101, 0.25
    %v1104 = vmul.f32 %v1102, 0.25
    %v1105 = vmul.f32 %v1103, %v1103
    %v1106 = vmul.f32 %v1104, %v1104
    %v1107 = vadd.f32 %v1105, %v1106
    %v1108 = vrot.slane %v1107, 4
    %v1109 = vadd.f32 %v1107, %v1108
    %v1110 = vrot.slane %v1109, 2
    %v1111 = vadd.f32 %v1109, %v1110
    %v1112 = vrot.slane %v1111, 1
    %v1113 = vadd.f32 %v1111, %v1112
    %v1114 = vrsqrt.pop %v1113
    %v1115 = vmul.f32 %v1113, %v1114
    %vm1116 = vcmp.eq.f32.partialorder %v1113, inf
    %v1117 = vsel %vm1116, %v1113, %v1115
    %vm1118 = vcmp.eq.f32.partialorder %v1113, 0.0
    %v1119 = vand.u32 %v1113, 2147483648
    %v1120 = vsel %vm1118, %v1119, %v1117
    %v1121 = vadd.f32 %v1113, 1.0
    %v1122 = vrcp.pop %v1121
    %v1123 = vmul.f32 %v1120, %v1122
    %v1124 = vmul.f32 %v1123, %v1103
    %v1125 = vmul.f32 %v1123, %v1104
    %v1126 = vld [vmem:[#allocation2 + $0x10] sm:$0xff]
    %v1127 = vld [vmem:[#allocation2 + $0x18] sm:$0xff]
    %v1128 = vld [vmem:[#allocation2 + $0x50] sm:$0xff]
    %v1129 = vld [vmem:[#allocation2 + $0x58] sm:$0xff]
    %v1130 = vadd.f32 %v1126, %v1128
    %v1131 = vadd.f32 %v1127, %v1129
    %v1132 = vld [vmem:[#allocation2 + $0x90] sm:$0xff]
    %v1133 = vld [vmem:[#allocation2 + $0x98] sm:$0xff]
    %v1134 = vadd.f32 %v1130, %v1132
    %v1135 = vadd.f32 %v1131, %v1133
    %v1136 = vld [vmem:[#allocation2 + $0xd0] sm:$0xff]
    %v1137 = vld [vmem:[#allocation2 + $0xd8] sm:$0xff]
    %v1138 = vadd.f32 %v1134, %v1136
    %v1139 = vadd.f32 %v1135, %v1137
    %v1140 = vld [vmem:[#allocation2 + $0x110] sm:$0xff]
    %v1141 = vld [vmem:[#allocation2 + $0x118] sm:$0xff]
    %v1142 = vadd.f32 %v1138, %v1140
    %v1143 = vadd.f32 %v1139, %v1141
    %v1144 = vld [vmem:[#allocation2 + $0x150] sm:$0xff]
    %v1145 = vld [vmem:[#allocation2 + $0x158] sm:$0xff]
    %v1146 = vadd.f32 %v1142, %v1144
    %v1147 = vadd.f32 %v1143, %v1145
    %v1148 = vld [vmem:[#allocation2 + $0x190] sm:$0xff]
    %v1149 = vld [vmem:[#allocation2 + $0x198] sm:$0xff]
    %v1150 = vadd.f32 %v1146, %v1148
    %v1151 = vadd.f32 %v1147, %v1149
    %v1152 = vld [vmem:[#allocation2 + $0x1d0] sm:$0xff]
    %v1153 = vld [vmem:[#allocation2 + $0x1d8] sm:$0xff]
    %v1154 = vadd.f32 %v1150, %v1152
    %v1155 = vadd.f32 %v1151, %v1153
    %v1156 = vmul.f32 %v1154, 0.25
    %v1157 = vmul.f32 %v1155, 0.25
    %v1158 = vmul.f32 %v1156, %v1156
    %v1159 = vmul.f32 %v1157, %v1157
    %v1160 = vadd.f32 %v1158, %v1159
    %v1161 = vrot.slane %v1160, 4
    %v1162 = vadd.f32 %v1160, %v1161
    %v1163 = vrot.slane %v1162, 2
    %v1164 = vadd.f32 %v1162, %v1163
    %v1165 = vrot.slane %v1164, 1
    %v1166 = vadd.f32 %v1164, %v1165
    %v1167 = vrsqrt.pop %v1166
    %v1168 = vmul.f32 %v1166, %v1167
    %vm1169 = vcmp.eq.f32.partialorder %v1166, inf
    %v1170 = vsel %vm1169, %v1166, %v1168
    %vm1171 = vcmp.eq.f32.partialorder %v1166, 0.0
    %v1172 = vand.u32 %v1166, 2147483648
    %v1173 = vsel %vm1171, %v1172, %v1170
    %v1174 = vadd.f32 %v1166, 1.0
    %v1175 = vrcp.pop %v1174
    %v1176 = vmul.f32 %v1173, %v1175
    %v1177 = vmul.f32 %v1176, %v1156
    %v1178 = vmul.f32 %v1176, %v1157
    %v1179 = vld [vmem:[#allocation2 + $0x20] sm:$0xff]
    %v1180 = vld [vmem:[#allocation2 + $0x28] sm:$0xff]
    %v1181 = vld [vmem:[#allocation2 + $0x60] sm:$0xff]
    %v1182 = vld [vmem:[#allocation2 + $0x68] sm:$0xff]
    %v1183 = vadd.f32 %v1179, %v1181
    %v1184 = vadd.f32 %v1180, %v1182
    %v1185 = vld [vmem:[#allocation2 + $0xa0] sm:$0xff]
    %v1186 = vld [vmem:[#allocation2 + $0xa8] sm:$0xff]
    %v1187 = vadd.f32 %v1183, %v1185
    %v1188 = vadd.f32 %v1184, %v1186
    %v1189 = vld [vmem:[#allocation2 + $0xe0] sm:$0xff]
    %v1190 = vld [vmem:[#allocation2 + $0xe8] sm:$0xff]
    %v1191 = vadd.f32 %v1187, %v1189
    %v1192 = vadd.f32 %v1188, %v1190
    %v1193 = vld [vmem:[#allocation2 + $0x120] sm:$0xff]
    %v1194 = vld [vmem:[#allocation2 + $0x128] sm:$0xff]
    %v1195 = vadd.f32 %v1191, %v1193
    %v1196 = vadd.f32 %v1192, %v1194
    %v1197 = vld [vmem:[#allocation2 + $0x160] sm:$0xff]
    %v1198 = vld [vmem:[#allocation2 + $0x168] sm:$0xff]
    %v1199 = vadd.f32 %v1195, %v1197
    %v1200 = vadd.f32 %v1196, %v1198
    %v1201 = vld [vmem:[#allocation2 + $0x1a0] sm:$0xff]
    %v1202 = vld [vmem:[#allocation2 + $0x1a8] sm:$0xff]
    %v1203 = vadd.f32 %v1199, %v1201
    %v1204 = vadd.f32 %v1200, %v1202
    %v1205 = vld [vmem:[#allocation2 + $0x1e0] sm:$0xff]
    %v1206 = vld [vmem:[#allocation2 + $0x1e8] sm:$0xff]
    %v1207 = vadd.f32 %v1203, %v1205
    %v1208 = vadd.f32 %v1204, %v1206
    %v1209 = vmul.f32 %v1207, 0.25
    %v1210 = vmul.f32 %v1208, 0.25
    %v1211 = vmul.f32 %v1209, %v1209
    %v1212 = vmul.f32 %v1210, %v1210
    %v1213 = vadd.f32 %v1211, %v1212
    %v1214 = vrot.slane %v1213, 4
    %v1215 = vadd.f32 %v1213, %v1214
    %v1216 = vrot.slane %v1215, 2
    %v1217 = vadd.f32 %v1215, %v1216
    %v1218 = vrot.slane %v1217, 1
    %v1219 = vadd.f32 %v1217, %v1218
    %v1220 = vrsqrt.pop %v1219
    %v1221 = vmul.f32 %v1219, %v1220
    %vm1222 = vcmp.eq.f32.partialorder %v1219, inf
    %v1223 = vsel %vm1222, %v1219, %v1221
    %vm1224 = vcmp.eq.f32.partialorder %v1219, 0.0
    %v1225 = vand.u32 %v1219, 2147483648
    %v1226 = vsel %vm1224, %v1225, %v1223
    %v1227 = vadd.f32 %v1219, 1.0
    %v1228 = vrcp.pop %v1227
    %v1229 = vmul.f32 %v1226, %v1228
    %v1230 = vmul.f32 %v1229, %v1209
    %v1231 = vmul.f32 %v1229, %v1210
    %v1232 = vld [vmem:[#allocation2 + $0x30] sm:$0xff]
    %v1233 = vld [vmem:[#allocation2 + $0x38] sm:$0xff]
    %v1234 = vld [vmem:[#allocation2 + $0x70] sm:$0xff]
    %v1235 = vld [vmem:[#allocation2 + $0x78] sm:$0xff]
    %v1236 = vadd.f32 %v1232, %v1234
    %v1237 = vadd.f32 %v1233, %v1235
    %v1238 = vld [vmem:[#allocation2 + $0xb0] sm:$0xff]
    %v1239 = vld [vmem:[#allocation2 + $0xb8] sm:$0xff]
    %v1240 = vadd.f32 %v1236, %v1238
    %v1241 = vadd.f32 %v1237, %v1239
    %v1242 = vld [vmem:[#allocation2 + $0xf0] sm:$0xff]
    %v1243 = vld [vmem:[#allocation2 + $0xf8] sm:$0xff]
    %v1244 = vadd.f32 %v1240, %v1242
    %v1245 = vadd.f32 %v1241, %v1243
    %v1246 = vld [vmem:[#allocation2 + $0x130] sm:$0xff]
    %v1247 = vld [vmem:[#allocation2 + $0x138] sm:$0xff]
    %v1248 = vadd.f32 %v1244, %v1246
    %v1249 = vadd.f32 %v1245, %v1247
    %v1250 = vld [vmem:[#allocation2 + $0x170] sm:$0xff]
    %v1251 = vld [vmem:[#allocation2 + $0x178] sm:$0xff]
    %v1252 = vadd.f32 %v1248, %v1250
    %v1253 = vadd.f32 %v1249, %v1251
    %v1254 = vld [vmem:[#allocation2 + $0x1b0] sm:$0xff]
    %v1255 = vld [vmem:[#allocation2 + $0x1b8] sm:$0xff]
    %v1256 = vadd.f32 %v1252, %v1254
    %v1257 = vadd.f32 %v1253, %v1255
    %v1258 = vld [vmem:[#allocation2 + $0x1f0] sm:$0xff]
    %v1259 = vld [vmem:[#allocation2 + $0x1f8] sm:$0xff]
    %v1260 = vadd.f32 %v1256, %v1258
    %v1261 = vadd.f32 %v1257, %v1259
    %v1262 = vmul.f32 %v1260, 0.25
    %v1263 = vmul.f32 %v1261, 0.25
    %v1264 = vmul.f32 %v1262, %v1262
    %v1265 = vmul.f32 %v1263, %v1263
    %v1266 = vadd.f32 %v1264, %v1265
    %v1267 = vrot.slane %v1266, 4
    %v1268 = vadd.f32 %v1266, %v1267
    %v1269 = vrot.slane %v1268, 2
    %v1270 = vadd.f32 %v1268, %v1269
    %v1271 = vrot.slane %v1270, 1
    %v1272 = vadd.f32 %v1270, %v1271
    %v1273 = vrsqrt.pop %v1272
    %v1274 = vmul.f32 %v1272, %v1273
    %vm1275 = vcmp.eq.f32.partialorder %v1272, inf
    %v1276 = vsel %vm1275, %v1272, %v1274
    %vm1277 = vcmp.eq.f32.partialorder %v1272, 0.0
    %v1278 = vand.u32 %v1272, 2147483648
    %v1279 = vsel %vm1277, %v1278, %v1276
    %v1280 = vadd.f32 %v1272, 1.0
    %v1281 = vrcp.pop %v1280
    %v1282 = vmul.f32 %v1279, %v1281
    %v1283 = vmul.f32 %v1282, %v1262
    %v1284 = vmul.f32 %v1282, %v1263
    %v1285 = vmul.f32 %v1073, %v1124
    %v1286 = vmul.f32 %v1074, %v1125
    %v1287 = vadd.f32 %v1285, %v1286
    %v1288 = vrot.slane %v1287, 4
    %v1289 = vadd.f32 %v1287, %v1288
    %v1290 = vrot.slane %v1289, 2
    %v1291 = vadd.f32 %v1289, %v1290
    %v1292 = vrot.slane %v1291, 1
    %v1293 = vadd.f32 %v1291, %v1292
    %v1294 = vmul.f32 %v1075, %v1124
    %v1295 = vmul.f32 %v1076, %v1125
    %v1296 = vadd.f32 %v1294, %v1295
    %v1297 = vrot.slane %v1296, 4
    %v1298 = vadd.f32 %v1296, %v1297
    %v1299 = vrot.slane %v1298, 2
    %v1300 = vadd.f32 %v1298, %v1299
    %v1301 = vrot.slane %v1300, 1
    %v1302 = vadd.f32 %v1300, %v1301
    %v1303 = vmul.f32 %v1079, %v1124
    %v1304 = vmul.f32 %v1080, %v1125
    %v1305 = vadd.f32 %v1303, %v1304
    %v1306 = vrot.slane %v1305, 4
    %v1307 = vadd.f32 %v1305, %v1306
    %v1308 = vrot.slane %v1307, 2
    %v1309 = vadd.f32 %v1307, %v1308
    %v1310 = vrot.slane %v1309, 1
    %v1311 = vadd.f32 %v1309, %v1310
    %v1312 = vmul.f32 %v1083, %v1124
    %v1313 = vmul.f32 %v1084, %v1125
    %v1314 = vadd.f32 %v1312, %v1313
    %v1315 = vrot.slane %v1314, 4
    %v1316 = vadd.f32 %v1314, %v1315
    %v1317 = vrot.slane %v1316, 2
    %v1318 = vadd.f32 %v1316, %v1317
    %v1319 = vrot.slane %v1318, 1
    %v1320 = vadd.f32 %v1318, %v1319
    %v1321 = vmul.f32 %v1087, %v1124
    %v1322 = vmul.f32 %v1088, %v1125
    %v1323 = vadd.f32 %v1321, %v1322
    %v1324 = vrot.slane %v1323, 4
    %v1325 = vadd.f32 %v1323, %v1324
    %v1326 = vrot.slane %v1325, 2
    %v1327 = vadd.f32 %v1325, %v1326
    %v1328 = vrot.slane %v1327, 1
    %v1329 = vadd.f32 %v1327, %v1328
    %v1330 = vmul.f32 %v1091, %v1124
    %v1331 = vmul.f32 %v1092, %v1125
    %v1332 = vadd.f32 %v1330, %v1331
    %v1333 = vrot.slane %v1332, 4
    %v1334 = vadd.f32 %v1332, %v1333
    %v1335 = vrot.slane %v1334, 2
    %v1336 = vadd.f32 %v1334, %v1335
    %v1337 = vrot.slane %v1336, 1
    %v1338 = vadd.f32 %v1336, %v1337
    %v1339 = vmul.f32 %v1095, %v1124
    %v1340 = vmul.f32 %v1096, %v1125
    %v1341 = vadd.f32 %v1339, %v1340
    %v1342 = vrot.slane %v1341, 4
    %v1343 = vadd.f32 %v1341, %v1342
    %v1344 = vrot.slane %v1343, 2
    %v1345 = vadd.f32 %v1343, %v1344
    %v1346 = vrot.slane %v1345, 1
    %v1347 = vadd.f32 %v1345, %v1346
    %v1348 = vmul.f32 %v1099, %v1124
    %v1349 = vmul.f32 %v1100, %v1125
    %v1350 = vadd.f32 %v1348, %v1349
    %v1351 = vrot.slane %v1350, 4
    %v1352 = vadd.f32 %v1350, %v1351
    %v1353 = vrot.slane %v1352, 2
    %v1354 = vadd.f32 %v1352, %v1353
    %v1355 = vrot.slane %v1354, 1
    %v1356 = vadd.f32 %v1354, %v1355
    %vm1357 = vcmask 1040384
    %v1358 = vsel %vm1357, %v1293, %v1302
    %vm1359 = vcmask 1041408
    %v1360 = vsel %vm1359, %v1358, %v1311
    %vm1361 = vcmask 1042432
    %v1362 = vsel %vm1361, %v1360, %v1320
    %vm1363 = vcmask 1043456
    %v1364 = vsel %vm1363, %v1362, %v1329
    %vm1365 = vcmask 1044480
    %v1366 = vsel %vm1365, %v1364, %v1338
    %vm1367 = vcmask 1045504
    %v1368 = vsel %vm1367, %v1366, %v1347
    %vm1369 = vcmask 1046528
    %v1370 = vsel %vm1369, %v1368, %v1356
    %v1371 = vmul.f32 %v1126, %v1177
    %v1372 = vmul.f32 %v1127, %v1178
    %v1373 = vadd.f32 %v1371, %v1372
    %v1374 = vrot.slane %v1373, 4
    %v1375 = vadd.f32 %v1373, %v1374
    %v1376 = vrot.slane %v1375, 2
    %v1377 = vadd.f32 %v1375, %v1376
    %v1378 = vrot.slane %v1377, 1
    %v1379 = vadd.f32 %v1377, %v1378
    %v1380 = vmul.f32 %v1128, %v1177
    %v1381 = vmul.f32 %v1129, %v1178
    %v1382 = vadd.f32 %v1380, %v1381
    %v1383 = vrot.slane %v1382, 4
    %v1384 = vadd.f32 %v1382, %v1383
    %v1385 = vrot.slane %v1384, 2
    %v1386 = vadd.f32 %v1384, %v1385
    %v1387 = vrot.slane %v1386, 1
    %v1388 = vadd.f32 %v1386, %v1387
    %v1389 = vmul.f32 %v1132, %v1177
    %v1390 = vmul.f32 %v1133, %v1178
    %v1391 = vadd.f32 %v1389, %v1390
    %v1392 = vrot.slane %v1391, 4
    %v1393 = vadd.f32 %v1391, %v1392
    %v1394 = vrot.slane %v1393, 2
    %v1395 = vadd.f32 %v1393, %v1394
    %v1396 = vrot.slane %v1395, 1
    %v1397 = vadd.f32 %v1395, %v1396
    %v1398 = vmul.f32 %v1136, %v1177
    %v1399 = vmul.f32 %v1137, %v1178
    %v1400 = vadd.f32 %v1398, %v1399
    %v1401 = vrot.slane %v1400, 4
    %v1402 = vadd.f32 %v1400, %v1401
    %v1403 = vrot.slane %v1402, 2
    %v1404 = vadd.f32 %v1402, %v1403
    %v1405 = vrot.slane %v1404, 1
    %v1406 = vadd.f32 %v1404, %v1405
    %v1407 = vmul.f32 %v1140, %v1177
    %v1408 = vmul.f32 %v1141, %v1178
    %v1409 = vadd.f32 %v1407, %v1408
    %v1410 = vrot.slane %v1409, 4
    %v1411 = vadd.f32 %v1409, %v1410
    %v1412 = vrot.slane %v1411, 2
    %v1413 = vadd.f32 %v1411, %v1412
    %v1414 = vrot.slane %v1413, 1
    %v1415 = vadd.f32 %v1413, %v1414
    %v1416 = vmul.f32 %v1144, %v1177
    %v1417 = vmul.f32 %v1145, %v1178
    %v1418 = vadd.f32 %v1416, %v1417
    %v1419 = vrot.slane %v1418, 4
    %v1420 = vadd.f32 %v1418, %v1419
    %v1421 = vrot.slane %v1420, 2
    %v1422 = vadd.f32 %v1420, %v1421
    %v1423 = vrot.slane %v1422, 1
    %v1424 = vadd.f32 %v1422, %v1423
    %v1425 = vmul.f32 %v1148, %v1177
    %v1426 = vmul.f32 %v1149, %v1178
    %v1427 = vadd.f32 %v1425, %v1426
    %v1428 = vrot.slane %v1427, 4
    %v1429 = vadd.f32 %v1427, %v1428
    %v1430 = vrot.slane %v1429, 2
    %v1431 = vadd.f32 %v1429, %v1430
    %v1432 = vrot.slane %v1431, 1
    %v1433 = vadd.f32 %v1431, %v1432
    %v1434 = vmul.f32 %v1152, %v1177
    %v1435 = vmul.f32 %v1153, %v1178
    %v1436 = vadd.f32 %v1434, %v1435
    %v1437 = vrot.slane %v1436, 4
    %v1438 = vadd.f32 %v1436, %v1437
    %v1439 = vrot.slane %v1438, 2
    %v1440 = vadd.f32 %v1438, %v1439
    %v1441 = vrot.slane %v1440, 1
    %v1442 = vadd.f32 %v1440, %v1441
    %v1443 = vsel %vm1357, %v1379, %v1388
    %v1444 = vsel %vm1359, %v1443, %v1397
    %v1445 = vsel %vm1361, %v1444, %v1406
    %v1446 = vsel %vm1363, %v1445, %v1415
    %v1447 = vsel %vm1365, %v1446, %v1424
    %v1448 = vsel %vm1367, %v1447, %v1433
    %v1449 = vsel %vm1369, %v1448, %v1442
    %v1450 = vmul.f32 %v1179, %v1230
    %v1451 = vmul.f32 %v1180, %v1231
    %v1452 = vadd.f32 %v1450, %v1451
    %v1453 = vrot.slane %v1452, 4
    %v1454 = vadd.f32 %v1452, %v1453
    %v1455 = vrot.slane %v1454, 2
    %v1456 = vadd.f32 %v1454, %v1455
    %v1457 = vrot.slane %v1456, 1
    %v1458 = vadd.f32 %v1456, %v1457
    %v1459 = vmul.f32 %v1181, %v1230
    %v1460 = vmul.f32 %v1182, %v1231
    %v1461 = vadd.f32 %v1459, %v1460
    %v1462 = vrot.slane %v1461, 4
    %v1463 = vadd.f32 %v1461, %v1462
    %v1464 = vrot.slane %v1463, 2
    %v1465 = vadd.f32 %v1463, %v1464
    %v1466 = vrot.slane %v1465, 1
    %v1467 = vadd.f32 %v1465, %v1466
    %v1468 = vmul.f32 %v1185, %v1230
    %v1469 = vmul.f32 %v1186, %v1231
    %v1470 = vadd.f32 %v1468, %v1469
    %v1471 = vrot.slane %v1470, 4
    %v1472 = vadd.f32 %v1470, %v1471
    %v1473 = vrot.slane %v1472, 2
    %v1474 = vadd.f32 %v1472, %v1473
    %v1475 = vrot.slane %v1474, 1
    %v1476 = vadd.f32 %v1474, %v1475
    %v1477 = vmul.f32 %v1189, %v1230
    %v1478 = vmul.f32 %v1190, %v1231
    %v1479 = vadd.f32 %v1477, %v1478
    %v1480 = vrot.slane %v1479, 4
    %v1481 = vadd.f32 %v1479, %v1480
    %v1482 = vrot.slane %v1481, 2
    %v1483 = vadd.f32 %v1481, %v1482
    %v1484 = vrot.slane %v1483, 1
    %v1485 = vadd.f32 %v1483, %v1484
    %v1486 = vmul.f32 %v1193, %v1230
    %v1487 = vmul.f32 %v1194, %v1231
    %v1488 = vadd.f32 %v1486, %v1487
    %v1489 = vrot.slane %v1488, 4
    %v1490 = vadd.f32 %v1488, %v1489
    %v1491 = vrot.slane %v1490, 2
    %v1492 = vadd.f32 %v1490, %v1491
    %v1493 = vrot.slane %v1492, 1
    %v1494 = vadd.f32 %v1492, %v1493
    %v1495 = vmul.f32 %v1197, %v1230
    %v1496 = vmul.f32 %v1198, %v1231
    %v1497 = vadd.f32 %v1495, %v1496
    %v1498 = vrot.slane %v1497, 4
    %v1499 = vadd.f32 %v1497, %v1498
    %v1500 = vrot.slane %v1499, 2
    %v1501 = vadd.f32 %v1499, %v1500
    %v1502 = vrot.slane %v1501, 1
    %v1503 = vadd.f32 %v1501, %v1502
    %v1504 = vmul.f32 %v1201, %v1230
    %v1505 = vmul.f32 %v1202, %v1231
    %v1506 = vadd.f32 %v1504, %v1505
    %v1507 = vrot.slane %v1506, 4
    %v1508 = vadd.f32 %v1506, %v1507
    %v1509 = vrot.slane %v1508, 2
    %v1510 = vadd.f32 %v1508, %v1509
    %v1511 = vrot.slane %v1510, 1
    %v1512 = vadd.f32 %v1510, %v1511
    %v1513 = vmul.f32 %v1205, %v1230
    %v1514 = vmul.f32 %v1206, %v1231
    %v1515 = vadd.f32 %v1513, %v1514
    %v1516 = vrot.slane %v1515, 4
    %v1517 = vadd.f32 %v1515, %v1516
    %v1518 = vrot.slane %v1517, 2
    %v1519 = vadd.f32 %v1517, %v1518
    %v1520 = vrot.slane %v1519, 1
    %v1521 = vadd.f32 %v1519, %v1520
    %v1522 = vsel %vm1357, %v1458, %v1467
    %v1523 = vsel %vm1359, %v1522, %v1476
    %v1524 = vsel %vm1361, %v1523, %v1485
    %v1525 = vsel %vm1363, %v1524, %v1494
    %v1526 = vsel %vm1365, %v1525, %v1503
    %v1527 = vsel %vm1367, %v1526, %v1512
    %v1528 = vsel %vm1369, %v1527, %v1521
    %v1529 = vmul.f32 %v1232, %v1283
    %v1530 = vmul.f32 %v1233, %v1284
    %v1531 = vadd.f32 %v1529, %v1530
    %v1532 = vrot.slane %v1531, 4
    %v1533 = vadd.f32 %v1531, %v1532
    %v1534 = vrot.slane %v1533, 2
    %v1535 = vadd.f32 %v1533, %v1534
    %v1536 = vrot.slane %v1535, 1
    %v1537 = vadd.f32 %v1535, %v1536
    %v1538 = vmul.f32 %v1234, %v1283
    %v1539 = vmul.f32 %v1235, %v1284
    %v1540 = vadd.f32 %v1538, %v1539
    %v1541 = vrot.slane %v1540, 4
    %v1542 = vadd.f32 %v1540, %v1541
    %v1543 = vrot.slane %v1542, 2
    %v1544 = vadd.f32 %v1542, %v1543
    %v1545 = vrot.slane %v1544, 1
    %v1546 = vadd.f32 %v1544, %v1545
    %v1547 = vmul.f32 %v1238, %v1283
    %v1548 = vmul.f32 %v1239, %v1284
    %v1549 = vadd.f32 %v1547, %v1548
    %v1550 = vrot.slane %v1549, 4
    %v1551 = vadd.f32 %v1549, %v1550
    %v1552 = vrot.slane %v1551, 2
    %v1553 = vadd.f32 %v1551, %v1552
    %v1554 = vrot.slane %v1553, 1
    %v1555 = vadd.f32 %v1553, %v1554
    %v1556 = vmul.f32 %v1242, %v1283
    %v1557 = vmul.f32 %v1243, %v1284
    %v1558 = vadd.f32 %v1556, %v1557
    %v1559 = vrot.slane %v1558, 4
    %v1560 = vadd.f32 %v1558, %v1559
    %v1561 = vrot.slane %v1560, 2
    %v1562 = vadd.f32 %v1560, %v1561
    %v1563 = vrot.slane %v1562, 1
    %v1564 = vadd.f32 %v1562, %v1563
    %v1565 = vmul.f32 %v1246, %v1283
    %v1566 = vmul.f32 %v1247, %v1284
    %v1567 = vadd.f32 %v1565, %v1566
    %v1568 = vrot.slane %v1567, 4
    %v1569 = vadd.f32 %v1567, %v1568
    %v1570 = vrot.slane %v1569, 2
    %v1571 = vadd.f32 %v1569, %v1570
    %v1572 = vrot.slane %v1571, 1
    %v1573 = vadd.f32 %v1571, %v1572
    %v1574 = vmul.f32 %v1250, %v1283
    %v1575 = vmul.f32 %v1251, %v1284
    %v1576 = vadd.f32 %v1574, %v1575
    %v1577 = vrot.slane %v1576, 4
    %v1578 = vadd.f32 %v1576, %v1577
    %v1579 = vrot.slane %v1578, 2
    %v1580 = vadd.f32 %v1578, %v1579
    %v1581 = vrot.slane %v1580, 1
    %v1582 = vadd.f32 %v1580, %v1581
    %v1583 = vmul.f32 %v1254, %v1283
    %v1584 = vmul.f32 %v1255, %v1284
    %v1585 = vadd.f32 %v1583, %v1584
    %v1586 = vrot.slane %v1585, 4
    %v1587 = vadd.f32 %v1585, %v1586
    %v1588 = vrot.slane %v1587, 2
    %v1589 = vadd.f32 %v1587, %v1588
    %v1590 = vrot.slane %v1589, 1
    %v1591 = vadd.f32 %v1589, %v1590
    %v1592 = vmul.f32 %v1258, %v1283
    %v1593 = vmul.f32 %v1259, %v1284
    %v1594 = vadd.f32 %v1592, %v1593
    %v1595 = vrot.slane %v1594, 4
    %v1596 = vadd.f32 %v1594, %v1595
    %v1597 = vrot.slane %v1596, 2
    %v1598 = vadd.f32 %v1596, %v1597
    %v1599 = vrot.slane %v1598, 1
    %v1600 = vadd.f32 %v1598, %v1599
    %v1601 = vsel %vm1357, %v1537, %v1546
    %v1602 = vsel %vm1359, %v1601, %v1555
    %v1603 = vsel %vm1361, %v1602, %v1564
    %v1604 = vsel %vm1363, %v1603, %v1573
    %v1605 = vsel %vm1365, %v1604, %v1582
    %v1606 = vsel %vm1367, %v1605, %v1591
    %v1607 = vsel %vm1369, %v1606, %v1600
    %v1608 = vmax.f32 %v1370, %v1449
    %v1609 = vmax.f32 %v1608, %v1528
    %v1610 = vmax.f32 %v1609, %v1607
    %v1611 = vsub.f32 %v1370, %v1610
    %v1612 = vmul.f32 %v1611, 1.442695
    %v1613 = vpow.pop %v1612
    %v1614 = vsub.f32 %v1449, %v1610
    %v1615 = vmul.f32 %v1614, 1.442695
    %v1616 = vpow.pop %v1615
    %v1617 = vsub.f32 %v1528, %v1610
    %v1618 = vmul.f32 %v1617, 1.442695
    %v1619 = vpow.pop %v1618
    %v1620 = vsub.f32 %v1607, %v1610
    %v1621 = vmul.f32 %v1620, 1.442695
    %v1622 = vpow.pop %v1621
    %v1623 = vadd.f32 %v1613, %v1616
    %v1624 = vadd.f32 %v1623, %v1619
    %v1625 = vadd.f32 %v1624, %v1622
    %v1626 = vrcp.pop %v1625
    %v1627 = vmul.f32 %v1613, %v1626
    %v1628 = vmul.f32 %v1616, %v1626
    %v1629 = vmul.f32 %v1619, %v1626
    %v1630 = vmul.f32 %v1622, %v1626
    %v1631 = vlaneseq
    %v1632 = vshrl.u32 %v1631, 7
    %v1633 = vsub.s32 0, %v1632
    %v1634 = vrot.slane %v1627, %v1633
    %v1635 = vmul.f32 %v1634, %v1073
    %v1636 = vmul.f32 %v1634, %v1074
    %v1637 = vlaneseq
    %v1638 = vshrl.u32 %v1637, 7
    %v1639 = vsub.s32 1, %v1638
    %v1640 = vrot.slane %v1627, %v1639
    %v1641 = vmul.f32 %v1640, %v1075
    %v1642 = vmul.f32 %v1640, %v1076
    %v1643 = vadd.f32 %v1635, %v1641
    %v1644 = vadd.f32 %v1636, %v1642
    %v1645 = vlaneseq
    %v1646 = vshrl.u32 %v1645, 7
    %v1647 = vsub.s32 2, %v1646
    %v1648 = vrot.slane %v1627, %v1647
    %v1649 = vmul.f32 %v1648, %v1079
    %v1650 = vmul.f32 %v1648, %v1080
    %v1651 = vadd.f32 %v1643, %v1649
    %v1652 = vadd.f32 %v1644, %v1650
    %v1653 = vlaneseq
    %v1654 = vshrl.u32 %v1653, 7
    %v1655 = vsub.s32 3, %v1654
    %v1656 = vrot.slane %v1627, %v1655
    %v1657 = vmul.f32 %v1656, %v1083
    %v1658 = vmul.f32 %v1656, %v1084
    %v1659 = vadd.f32 %v1651, %v1657
    %v1660 = vadd.f32 %v1652, %v1658
    %v1661 = vlaneseq
    %v1662 = vshrl.u32 %v1661, 7
    %v1663 = vsub.s32 4, %v1662
    %v1664 = vrot.slane %v1627, %v1663
    %v1665 = vmul.f32 %v1664, %v1087
    %v1666 = vmul.f32 %v1664, %v1088
    %v1667 = vadd.f32 %v1659, %v1665
    %v1668 = vadd.f32 %v1660, %v1666
    %v1669 = vlaneseq
    %v1670 = vshrl.u32 %v1669, 7
    %v1671 = vsub.s32 5, %v1670
    %v1672 = vrot.slane %v1627, %v1671
    %v1673 = vmul.f32 %v1672, %v1091
    %v1674 = vmul.f32 %v1672, %v1092
    %v1675 = vadd.f32 %v1667, %v1673
    %v1676 = vadd.f32 %v1668, %v1674
    %v1677 = vlaneseq
    %v1678 = vshrl.u32 %v1677, 7
    %v1679 = vsub.s32 6, %v1678
    %v1680 = vrot.slane %v1627, %v1679
    %v1681 = vmul.f32 %v1680, %v1095
    %v1682 = vmul.f32 %v1680, %v1096
    %v1683 = vadd.f32 %v1675, %v1681
    %v1684 = vadd.f32 %v1676, %v1682
    %v1685 = vlaneseq
    %v1686 = vshrl.u32 %v1685, 7
    %v1687 = vsub.s32 7, %v1686
    %v1688 = vrot.slane %v1627, %v1687
    %v1689 = vmul.f32 %v1688, %v1099
    %v1690 = vmul.f32 %v1688, %v1100
    %v1691 = vadd.f32 %v1683, %v1689
    %v1692 = vadd.f32 %v1684, %v1690
    %v1693 = vmul.f32 %v1691, %v1691
    %v1694 = vmul.f32 %v1692, %v1692
    %v1695 = vadd.f32 %v1693, %v1694
    %v1696 = vrot.slane %v1695, 4
    %v1697 = vadd.f32 %v1695, %v1696
    %v1698 = vrot.slane %v1697, 2
    %v1699 = vadd.f32 %v1697, %v1698
    %v1700 = vrot.slane %v1699, 1
    %v1701 = vadd.f32 %v1699, %v1700
    %v1702 = vrsqrt.pop %v1701
    %v1703 = vmul.f32 %v1701, %v1702
    %vm1704 = vcmp.eq.f32.partialorder %v1701, inf
    %v1705 = vsel %vm1704, %v1701, %v1703
    %vm1706 = vcmp.eq.f32.partialorder %v1701, 0.0
    %v1707 = vand.u32 %v1701, 2147483648
    %v1708 = vsel %vm1706, %v1707, %v1705
    %v1709 = vadd.f32 %v1701, 1.0
    %v1710 = vrcp.pop %v1709
    %v1711 = vmul.f32 %v1708, %v1710
    %v1712 = vmul.f32 %v1711, %v1691
    %v1713 = vmul.f32 %v1711, %v1692
    %v1714 = vlaneseq
    %v1715 = vshrl.u32 %v1714, 7
    %v1716 = vsub.s32 0, %v1715
    %v1717 = vrot.slane %v1628, %v1716
    %v1718 = vmul.f32 %v1717, %v1126
    %v1719 = vmul.f32 %v1717, %v1127
    %v1720 = vlaneseq
    %v1721 = vshrl.u32 %v1720, 7
    %v1722 = vsub.s32 1, %v1721
    %v1723 = vrot.slane %v1628, %v1722
    %v1724 = vmul.f32 %v1723, %v1128
    %v1725 = vmul.f32 %v1723, %v1129
    %v1726 = vadd.f32 %v1718, %v1724
    %v1727 = vadd.f32 %v1719, %v1725
    %v1728 = vlaneseq
    %v1729 = vshrl.u32 %v1728, 7
    %v1730 = vsub.s32 2, %v1729
    %v1731 = vrot.slane %v1628, %v1730
    %v1732 = vmul.f32 %v1731, %v1132
    %v1733 = vmul.f32 %v1731, %v1133
    %v1734 = vadd.f32 %v1726, %v1732
    %v1735 = vadd.f32 %v1727, %v1733
    %v1736 = vlaneseq
    %v1737 = vshrl.u32 %v1736, 7
    %v1738 = vsub.s32 3, %v1737
    %v1739 = vrot.slane %v1628, %v1738
    %v1740 = vmul.f32 %v1739, %v1136
    %v1741 = vmul.f32 %v1739, %v1137
    %v1742 = vadd.f32 %v1734, %v1740
    %v1743 = vadd.f32 %v1735, %v1741
    %v1744 = vlaneseq
    %v1745 = vshrl.u32 %v1744, 7
    %v1746 = vsub.s32 4, %v1745
    %v1747 = vrot.slane %v1628, %v1746
    %v1748 = vmul.f32 %v1747, %v1140
    %v1749 = vmul.f32 %v1747, %v1141
    %v1750 = vadd.f32 %v1742, %v1748
    %v1751 = vadd.f32 %v1743, %v1749
    %v1752 = vlaneseq
    %v1753 = vshrl.u32 %v1752, 7
    %v1754 = vsub.s32 5, %v1753
    %v1755 = vrot.slane %v1628, %v1754
    %v1756 = vmul.f32 %v1755, %v1144
    %v1757 = vmul.f32 %v1755, %v1145
    %v1758 = vadd.f32 %v1750, %v1756
    %v1759 = vadd.f32 %v1751, %v1757
    %v1760 = vlaneseq
    %v1761 = vshrl.u32 %v1760, 7
    %v1762 = vsub.s32 6, %v1761
    %v1763 = vrot.slane %v1628, %v1762
    %v1764 = vmul.f32 %v1763, %v1148
    %v1765 = vmul.f32 %v1763, %v1149
    %v1766 = vadd.f32 %v1758, %v1764
    %v1767 = vadd.f32 %v1759, %v1765
    %v1768 = vlaneseq
    %v1769 = vshrl.u32 %v1768, 7
    %v1770 = vsub.s32 7, %v1769
    %v1771 = vrot.slane %v1628, %v1770
    %v1772 = vmul.f32 %v1771, %v1152
    %v1773 = vmul.f32 %v1771, %v1153
    %v1774 = vadd.f32 %v1766, %v1772
    %v1775 = vadd.f32 %v1767, %v1773
    %v1776 = vmul.f32 %v1774, %v1774
    %v1777 = vmul.f32 %v1775, %v1775
    %v1778 = vadd.f32 %v1776, %v1777
    %v1779 = vrot.slane %v1778, 4
    %v1780 = vadd.f32 %v1778, %v1779
    %v1781 = vrot.slane %v1780, 2
    %v1782 = vadd.f32 %v1780, %v1781
    %v1783 = vrot.slane %v1782, 1
    %v1784 = vadd.f32 %v1782, %v1783
    %v1785 = vrsqrt.pop %v1784
    %v1786 = vmul.f32 %v1784, %v1785
    %vm1787 = vcmp.eq.f32.partialorder %v1784, inf
    %v1788 = vsel %vm1787, %v1784, %v1786
    %vm1789 = vcmp.eq.f32.partialorder %v1784, 0.0
    %v1790 = vand.u32 %v1784, 2147483648
    %v1791 = vsel %vm1789, %v1790, %v1788
    %v1792 = vadd.f32 %v1784, 1.0
    %v1793 = vrcp.pop %v1792
    %v1794 = vmul.f32 %v1791, %v1793
    %v1795 = vmul.f32 %v1794, %v1774
    %v1796 = vmul.f32 %v1794, %v1775
    %v1797 = vlaneseq
    %v1798 = vshrl.u32 %v1797, 7
    %v1799 = vsub.s32 0, %v1798
    %v1800 = vrot.slane %v1629, %v1799
    %v1801 = vmul.f32 %v1800, %v1179
    %v1802 = vmul.f32 %v1800, %v1180
    %v1803 = vlaneseq
    %v1804 = vshrl.u32 %v1803, 7
    %v1805 = vsub.s32 1, %v1804
    %v1806 = vrot.slane %v1629, %v1805
    %v1807 = vmul.f32 %v1806, %v1181
    %v1808 = vmul.f32 %v1806, %v1182
    %v1809 = vadd.f32 %v1801, %v1807
    %v1810 = vadd.f32 %v1802, %v1808
    %v1811 = vlaneseq
    %v1812 = vshrl.u32 %v1811, 7
    %v1813 = vsub.s32 2, %v1812
    %v1814 = vrot.slane %v1629, %v1813
    %v1815 = vmul.f32 %v1814, %v1185
    %v1816 = vmul.f32 %v1814, %v1186
    %v1817 = vadd.f32 %v1809, %v1815
    %v1818 = vadd.f32 %v1810, %v1816
    %v1819 = vlaneseq
    %v1820 = vshrl.u32 %v1819, 7
    %v1821 = vsub.s32 3, %v1820
    %v1822 = vrot.slane %v1629, %v1821
    %v1823 = vmul.f32 %v1822, %v1189
    %v1824 = vmul.f32 %v1822, %v1190
    %v1825 = vadd.f32 %v1817, %v1823
    %v1826 = vadd.f32 %v1818, %v1824
    %v1827 = vlaneseq
    %v1828 = vshrl.u32 %v1827, 7
    %v1829 = vsub.s32 4, %v1828
    %v1830 = vrot.slane %v1629, %v1829
    %v1831 = vmul.f32 %v1830, %v1193
    %v1832 = vmul.f32 %v1830, %v1194
    %v1833 = vadd.f32 %v1825, %v1831
    %v1834 = vadd.f32 %v1826, %v1832
    %v1835 = vlaneseq
    %v1836 = vshrl.u32 %v1835, 7
    %v1837 = vsub.s32 5, %v1836
    %v1838 = vrot.slane %v1629, %v1837
    %v1839 = vmul.f32 %v1838, %v1197
    %v1840 = vmul.f32 %v1838, %v1198
    %v1841 = vadd.f32 %v1833, %v1839
    %v1842 = vadd.f32 %v1834, %v1840
    %v1843 = vlaneseq
    %v1844 = vshrl.u32 %v1843, 7
    %v1845 = vsub.s32 6, %v1844
    %v1846 = vrot.slane %v1629, %v1845
    %v1847 = vmul.f32 %v1846, %v1201
    %v1848 = vmul.f32 %v1846, %v1202
    %v1849 = vadd.f32 %v1841, %v1847
    %v1850 = vadd.f32 %v1842, %v1848
    %v1851 = vlaneseq
    %v1852 = vshrl.u32 %v1851, 7
    %v1853 = vsub.s32 7, %v1852
    %v1854 = vrot.slane %v1629, %v1853
    %v1855 = vmul.f32 %v1854, %v1205
    %v1856 = vmul.f32 %v1854, %v1206
    %v1857 = vadd.f32 %v1849, %v1855
    %v1858 = vadd.f32 %v1850, %v1856
    %v1859 = vmul.f32 %v1857, %v1857
    %v1860 = vmul.f32 %v1858, %v1858
    %v1861 = vadd.f32 %v1859, %v1860
    %v1862 = vrot.slane %v1861, 4
    %v1863 = vadd.f32 %v1861, %v1862
    %v1864 = vrot.slane %v1863, 2
    %v1865 = vadd.f32 %v1863, %v1864
    %v1866 = vrot.slane %v1865, 1
    %v1867 = vadd.f32 %v1865, %v1866
    %v1868 = vrsqrt.pop %v1867
    %v1869 = vmul.f32 %v1867, %v1868
    %vm1870 = vcmp.eq.f32.partialorder %v1867, inf
    %v1871 = vsel %vm1870, %v1867, %v1869
    %vm1872 = vcmp.eq.f32.partialorder %v1867, 0.0
    %v1873 = vand.u32 %v1867, 2147483648
    %v1874 = vsel %vm1872, %v1873, %v1871
    %v1875 = vadd.f32 %v1867, 1.0
    %v1876 = vrcp.pop %v1875
    %v1877 = vmul.f32 %v1874, %v1876
    %v1878 = vmul.f32 %v1877, %v1857
    %v1879 = vmul.f32 %v1877, %v1858
    %v1880 = vlaneseq
    %v1881 = vshrl.u32 %v1880, 7
    %v1882 = vsub.s32 0, %v1881
    %v1883 = vrot.slane %v1630, %v1882
    %v1884 = vmul.f32 %v1883, %v1232
    %v1885 = vmul.f32 %v1883, %v1233
    %v1886 = vlaneseq
    %v1887 = vshrl.u32 %v1886, 7
    %v1888 = vsub.s32 1, %v1887
    %v1889 = vrot.slane %v1630, %v1888
    %v1890 = vmul.f32 %v1889, %v1234
    %v1891 = vmul.f32 %v1889, %v1235
    %v1892 = vadd.f32 %v1884, %v1890
    %v1893 = vadd.f32 %v1885, %v1891
    %v1894 = vlaneseq
    %v1895 = vshrl.u32 %v1894, 7
    %v1896 = vsub.s32 2, %v1895
    %v1897 = vrot.slane %v1630, %v1896
    %v1898 = vmul.f32 %v1897, %v1238
    %v1899 = vmul.f32 %v1897, %v1239
    %v1900 = vadd.f32 %v1892, %v1898
    %v1901 = vadd.f32 %v1893, %v1899
    %v1902 = vlaneseq
    %v1903 = vshrl.u32 %v1902, 7
    %v1904 = vsub.s32 3, %v1903
    %v1905 = vrot.slane %v1630, %v1904
    %v1906 = vmul.f32 %v1905, %v1242
    %v1907 = vmul.f32 %v1905, %v1243
    %v1908 = vadd.f32 %v1900, %v1906
    %v1909 = vadd.f32 %v1901, %v1907
    %v1910 = vlaneseq
    %v1911 = vshrl.u32 %v1910, 7
    %v1912 = vsub.s32 4, %v1911
    %v1913 = vrot.slane %v1630, %v1912
    %v1914 = vmul.f32 %v1913, %v1246
    %v1915 = vmul.f32 %v1913, %v1247
    %v1916 = vadd.f32 %v1908, %v1914
    %v1917 = vadd.f32 %v1909, %v1915
    %v1918 = vlaneseq
    %v1919 = vshrl.u32 %v1918, 7
    %v1920 = vsub.s32 5, %v1919
    %v1921 = vrot.slane %v1630, %v1920
    %v1922 = vmul.f32 %v1921, %v1250
    %v1923 = vmul.f32 %v1921, %v1251
    %v1924 = vadd.f32 %v1916, %v1922
    %v1925 = vadd.f32 %v1917, %v1923
    %v1926 = vlaneseq
    %v1927 = vshrl.u32 %v1926, 7
    %v1928 = vsub.s32 6, %v1927
    %v1929 = vrot.slane %v1630, %v1928
    %v1930 = vmul.f32 %v1929, %v1254
    %v1931 = vmul.f32 %v1929, %v1255
    %v1932 = vadd.f32 %v1924, %v1930
    %v1933 = vadd.f32 %v1925, %v1931
    %v1934 = vlaneseq
    %v1935 = vshrl.u32 %v1934, 7
    %v1936 = vsub.s32 7, %v1935
    %v1937 = vrot.slane %v1630, %v1936
    %v1938 = vmul.f32 %v1937, %v1258
    %v1939 = vmul.f32 %v1937, %v1259
    %v1940 = vadd.f32 %v1932, %v1938
    %v1941 = vadd.f32 %v1933, %v1939
    %v1942 = vmul.f32 %v1940, %v1940
    %v1943 = vmul.f32 %v1941, %v1941
    %v1944 = vadd.f32 %v1942, %v1943
    %v1945 = vrot.slane %v1944, 4
    %v1946 = vadd.f32 %v1944, %v1945
    %v1947 = vrot.slane %v1946, 2
    %v1948 = vadd.f32 %v1946, %v1947
    %v1949 = vrot.slane %v1948, 1
    %v1950 = vadd.f32 %v1948, %v1949
    %v1951 = vrsqrt.pop %v1950
    %v1952 = vmul.f32 %v1950, %v1951
    %vm1953 = vcmp.eq.f32.partialorder %v1950, inf
    %v1954 = vsel %vm1953, %v1950, %v1952
    %vm1955 = vcmp.eq.f32.partialorder %v1950, 0.0
    %v1956 = vand.u32 %v1950, 2147483648
    %v1957 = vsel %vm1955, %v1956, %v1954
    %v1958 = vadd.f32 %v1950, 1.0
    %v1959 = vrcp.pop %v1958
    %v1960 = vmul.f32 %v1957, %v1959
    %v1961 = vmul.f32 %v1960, %v1940
    %v1962 = vmul.f32 %v1960, %v1941
    %v1963 = vmul.f32 %v1073, %v1712
    %v1964 = vmul.f32 %v1074, %v1713
    %v1965 = vadd.f32 %v1963, %v1964
    %v1966 = vrot.slane %v1965, 4
    %v1967 = vadd.f32 %v1965, %v1966
    %v1968 = vrot.slane %v1967, 2
    %v1969 = vadd.f32 %v1967, %v1968
    %v1970 = vrot.slane %v1969, 1
    %v1971 = vadd.f32 %v1969, %v1970
    %v1972 = vmul.f32 %v1075, %v1712
    %v1973 = vmul.f32 %v1076, %v1713
    %v1974 = vadd.f32 %v1972, %v1973
    %v1975 = vrot.slane %v1974, 4
    %v1976 = vadd.f32 %v1974, %v1975
    %v1977 = vrot.slane %v1976, 2
    %v1978 = vadd.f32 %v1976, %v1977
    %v1979 = vrot.slane %v1978, 1
    %v1980 = vadd.f32 %v1978, %v1979
    %v1981 = vmul.f32 %v1079, %v1712
    %v1982 = vmul.f32 %v1080, %v1713
    %v1983 = vadd.f32 %v1981, %v1982
    %v1984 = vrot.slane %v1983, 4
    %v1985 = vadd.f32 %v1983, %v1984
    %v1986 = vrot.slane %v1985, 2
    %v1987 = vadd.f32 %v1985, %v1986
    %v1988 = vrot.slane %v1987, 1
    %v1989 = vadd.f32 %v1987, %v1988
    %v1990 = vmul.f32 %v1083, %v1712
    %v1991 = vmul.f32 %v1084, %v1713
    %v1992 = vadd.f32 %v1990, %v1991
    %v1993 = vrot.slane %v1992, 4
    %v1994 = vadd.f32 %v1992, %v1993
    %v1995 = vrot.slane %v1994, 2
    %v1996 = vadd.f32 %v1994, %v1995
    %v1997 = vrot.slane %v1996, 1
    %v1998 = vadd.f32 %v1996, %v1997
    %v1999 = vmul.f32 %v1087, %v1712
    %v2000 = vmul.f32 %v1088, %v1713
    %v2001 = vadd.f32 %v1999, %v2000
    %v2002 = vrot.slane %v2001, 4
    %v2003 = vadd.f32 %v2001, %v2002
    %v2004 = vrot.slane %v2003, 2
    %v2005 = vadd.f32 %v2003, %v2004
    %v2006 = vrot.slane %v2005, 1
    %v2007 = vadd.f32 %v2005, %v2006
    %v2008 = vmul.f32 %v1091, %v1712
    %v2009 = vmul.f32 %v1092, %v1713
    %v2010 = vadd.f32 %v2008, %v2009
    %v2011 = vrot.slane %v2010, 4
    %v2012 = vadd.f32 %v2010, %v2011
    %v2013 = vrot.slane %v2012, 2
    %v2014 = vadd.f32 %v2012, %v2013
    %v2015 = vrot.slane %v2014, 1
    %v2016 = vadd.f32 %v2014, %v2015
    %v2017 = vmul.f32 %v1095, %v1712
    %v2018 = vmul.f32 %v1096, %v1713
    %v2019 = vadd.f32 %v2017, %v2018
    %v2020 = vrot.slane %v2019, 4
    %v2021 = vadd.f32 %v2019, %v2020
    %v2022 = vrot.slane %v2021, 2
    %v2023 = vadd.f32 %v2021, %v2022
    %v2024 = vrot.slane %v2023, 1
    %v2025 = vadd.f32 %v2023, %v2024
    %v2026 = vmul.f32 %v1099, %v1712
    %v2027 = vmul.f32 %v1100, %v1713
    %v2028 = vadd.f32 %v2026, %v2027
    %v2029 = vrot.slane %v2028, 4
    %v2030 = vadd.f32 %v2028, %v2029
    %v2031 = vrot.slane %v2030, 2
    %v2032 = vadd.f32 %v2030, %v2031
    %v2033 = vrot.slane %v2032, 1
    %v2034 = vadd.f32 %v2032, %v2033
    %v2035 = vsel %vm1357, %v1971, %v1980
    %v2036 = vsel %vm1359, %v2035, %v1989
    %v2037 = vsel %vm1361, %v2036, %v1998
    %v2038 = vsel %vm1363, %v2037, %v2007
    %v2039 = vsel %vm1365, %v2038, %v2016
    %v2040 = vsel %vm1367, %v2039, %v2025
    %v2041 = vsel %vm1369, %v2040, %v2034
    %v2042 = vmul.f32 %v1126, %v1795
    %v2043 = vmul.f32 %v1127, %v1796
    %v2044 = vadd.f32 %v2042, %v2043
    %v2045 = vrot.slane %v2044, 4
    %v2046 = vadd.f32 %v2044, %v2045
    %v2047 = vrot.slane %v2046, 2
    %v2048 = vadd.f32 %v2046, %v2047
    %v2049 = vrot.slane %v2048, 1
    %v2050 = vadd.f32 %v2048, %v2049
    %v2051 = vmul.f32 %v1128, %v1795
    %v2052 = vmul.f32 %v1129, %v1796
    %v2053 = vadd.f32 %v2051, %v2052
    %v2054 = vrot.slane %v2053, 4
    %v2055 = vadd.f32 %v2053, %v2054
    %v2056 = vrot.slane %v2055, 2
    %v2057 = vadd.f32 %v2055, %v2056
    %v2058 = vrot.slane %v2057, 1
    %v2059 = vadd.f32 %v2057, %v2058
    %v2060 = vmul.f32 %v1132, %v1795
    %v2061 = vmul.f32 %v1133, %v1796
    %v2062 = vadd.f32 %v2060, %v2061
    %v2063 = vrot.slane %v2062, 4
    %v2064 = vadd.f32 %v2062, %v2063
    %v2065 = vrot.slane %v2064, 2
    %v2066 = vadd.f32 %v2064, %v2065
    %v2067 = vrot.slane %v2066, 1
    %v2068 = vadd.f32 %v2066, %v2067
    %v2069 = vmul.f32 %v1136, %v1795
    %v2070 = vmul.f32 %v1137, %v1796
    %v2071 = vadd.f32 %v2069, %v2070
    %v2072 = vrot.slane %v2071, 4
    %v2073 = vadd.f32 %v2071, %v2072
    %v2074 = vrot.slane %v2073, 2
    %v2075 = vadd.f32 %v2073, %v2074
    %v2076 = vrot.slane %v2075, 1
    %v2077 = vadd.f32 %v2075, %v2076
    %v2078 = vmul.f32 %v1140, %v1795
    %v2079 = vmul.f32 %v1141, %v1796
    %v2080 = vadd.f32 %v2078, %v2079
    %v2081 = vrot.slane %v2080, 4
    %v2082 = vadd.f32 %v2080, %v2081
    %v2083 = vrot.slane %v2082, 2
    %v2084 = vadd.f32 %v2082, %v2083
    %v2085 = vrot.slane %v2084, 1
    %v2086 = vadd.f32 %v2084, %v2085
    %v2087 = vmul.f32 %v1144, %v1795
    %v2088 = vmul.f32 %v1145, %v1796
    %v2089 = vadd.f32 %v2087, %v2088
    %v2090 = vrot.slane %v2089, 4
    %v2091 = vadd.f32 %v2089, %v2090
    %v2092 = vrot.slane %v2091, 2
    %v2093 = vadd.f32 %v2091, %v2092
    %v2094 = vrot.slane %v2093, 1
    %v2095 = vadd.f32 %v2093, %v2094
    %v2096 = vmul.f32 %v1148, %v1795
    %v2097 = vmul.f32 %v1149, %v1796
    %v2098 = vadd.f32 %v2096, %v2097
    %v2099 = vrot.slane %v2098, 4
    %v2100 = vadd.f32 %v2098, %v2099
    %v2101 = vrot.slane %v2100, 2
    %v2102 = vadd.f32 %v2100, %v2101
    %v2103 = vrot.slane %v2102, 1
    %v2104 = vadd.f32 %v2102, %v2103
    %v2105 = vmul.f32 %v1152, %v1795
    %v2106 = vmul.f32 %v1153, %v1796
    %v2107 = vadd.f32 %v2105, %v2106
    %v2108 = vrot.slane %v2107, 4
    %v2109 = vadd.f32 %v2107, %v2108
    %v2110 = vrot.slane %v2109, 2
    %v2111 = vadd.f32 %v2109, %v2110
    %v2112 = vrot.slane %v2111, 1
    %v2113 = vadd.f32 %v2111, %v2112
    %v2114 = vsel %vm1357, %v2050, %v2059
    %v2115 = vsel %vm1359, %v2114, %v2068
    %v2116 = vsel %vm1361, %v2115, %v2077
    %v2117 = vsel %vm1363, %v2116, %v2086
    %v2118 = vsel %vm1365, %v2117, %v2095
    %v2119 = vsel %vm1367, %v2118, %v2104
    %v2120 = vsel %vm1369, %v2119, %v2113
    %v2121 = vmul.f32 %v1179, %v1878
    %v2122 = vmul.f32 %v1180, %v1879
    %v2123 = vadd.f32 %v2121, %v2122
    %v2124 = vrot.slane %v2123, 4
    %v2125 = vadd.f32 %v2123, %v2124
    %v2126 = vrot.slane %v2125, 2
    %v2127 = vadd.f32 %v2125, %v2126
    %v2128 = vrot.slane %v2127, 1
    %v2129 = vadd.f32 %v2127, %v2128
    %v2130 = vmul.f32 %v1181, %v1878
    %v2131 = vmul.f32 %v1182, %v1879
    %v2132 = vadd.f32 %v2130, %v2131
    %v2133 = vrot.slane %v2132, 4
    %v2134 = vadd.f32 %v2132, %v2133
    %v2135 = vrot.slane %v2134, 2
    %v2136 = vadd.f32 %v2134, %v2135
    %v2137 = vrot.slane %v2136, 1
    %v2138 = vadd.f32 %v2136, %v2137
    %v2139 = vmul.f32 %v1185, %v1878
    %v2140 = vmul.f32 %v1186, %v1879
    %v2141 = vadd.f32 %v2139, %v2140
    %v2142 = vrot.slane %v2141, 4
    %v2143 = vadd.f32 %v2141, %v2142
    %v2144 = vrot.slane %v2143, 2
    %v2145 = vadd.f32 %v2143, %v2144
    %v2146 = vrot.slane %v2145, 1
    %v2147 = vadd.f32 %v2145, %v2146
    %v2148 = vmul.f32 %v1189, %v1878
    %v2149 = vmul.f32 %v1190, %v1879
    %v2150 = vadd.f32 %v2148, %v2149
    %v2151 = vrot.slane %v2150, 4
    %v2152 = vadd.f32 %v2150, %v2151
    %v2153 = vrot.slane %v2152, 2
    %v2154 = vadd.f32 %v2152, %v2153
    %v2155 = vrot.slane %v2154, 1
    %v2156 = vadd.f32 %v2154, %v2155
    %v2157 = vmul.f32 %v1193, %v1878
    %v2158 = vmul.f32 %v1194, %v1879
    %v2159 = vadd.f32 %v2157, %v2158
    %v2160 = vrot.slane %v2159, 4
    %v2161 = vadd.f32 %v2159, %v2160
    %v2162 = vrot.slane %v2161, 2
    %v2163 = vadd.f32 %v2161, %v2162
    %v2164 = vrot.slane %v2163, 1
    %v2165 = vadd.f32 %v2163, %v2164
    %v2166 = vmul.f32 %v1197, %v1878
    %v2167 = vmul.f32 %v1198, %v1879
    %v2168 = vadd.f32 %v2166, %v2167
    %v2169 = vrot.slane %v2168, 4
    %v2170 = vadd.f32 %v2168, %v2169
    %v2171 = vrot.slane %v2170, 2
    %v2172 = vadd.f32 %v2170, %v2171
    %v2173 = vrot.slane %v2172, 1
    %v2174 = vadd.f32 %v2172, %v2173
    %v2175 = vmul.f32 %v1201, %v1878
    %v2176 = vmul.f32 %v1202, %v1879
    %v2177 = vadd.f32 %v2175, %v2176
    %v2178 = vrot.slane %v2177, 4
    %v2179 = vadd.f32 %v2177, %v2178
    %v2180 = vrot.slane %v2179, 2
    %v2181 = vadd.f32 %v2179, %v2180
    %v2182 = vrot.slane %v2181, 1
    %v2183 = vadd.f32 %v2181, %v2182
    %v2184 = vmul.f32 %v1205, %v1878
    %v2185 = vmul.f32 %v1206, %v1879
    %v2186 = vadd.f32 %v2184, %v2185
    %v2187 = vrot.slane %v2186, 4
    %v2188 = vadd.f32 %v2186, %v2187
    %v2189 = vrot.slane %v2188, 2
    %v2190 = vadd.f32 %v2188, %v2189
    %v2191 = vrot.slane %v2190, 1
    %v2192 = vadd.f32 %v2190, %v2191
    %v2193 = vsel %vm1357, %v2129, %v2138
    %v2194 = vsel %vm1359, %v2193, %v2147
    %v2195 = vsel %vm1361, %v2194, %v2156
    %v2196 = vsel %vm1363, %v2195, %v2165
    %v2197 = vsel %vm1365, %v2196, %v2174
    %v2198 = vsel %vm1367, %v2197, %v2183
    %v2199 = vsel %vm1369, %v2198, %v2192
    %v2200 = vmul.f32 %v1232, %v1961
    %v2201 = vmul.f32 %v1233, %v1962
    %v2202 = vadd.f32 %v2200, %v2201
    %v2203 = vrot.slane %v2202, 4
    %v2204 = vadd.f32 %v2202, %v2203
    %v2205 = vrot.slane %v2204, 2
    %v2206 = vadd.f32 %v2204, %v2205
    %v2207 = vrot.slane %v2206, 1
    %v2208 = vadd.f32 %v2206, %v2207
    %v2209 = vmul.f32 %v1234, %v1961
    %v2210 = vmul.f32 %v1235, %v1962
    %v2211 = vadd.f32 %v2209, %v2210
    %v2212 = vrot.slane %v2211, 4
    %v2213 = vadd.f32 %v2211, %v2212
    %v2214 = vrot.slane %v2213, 2
    %v2215 = vadd.f32 %v2213, %v2214
    %v2216 = vrot.slane %v2215, 1
    %v2217 = vadd.f32 %v2215, %v2216
    %v2218 = vmul.f32 %v1238, %v1961
    %v2219 = vmul.f32 %v1239, %v1962
    %v2220 = vadd.f32 %v2218, %v2219
    %v2221 = vrot.slane %v2220, 4
    %v2222 = vadd.f32 %v2220, %v2221
    %v2223 = vrot.slane %v2222, 2
    %v2224 = vadd.f32 %v2222, %v2223
    %v2225 = vrot.slane %v2224, 1
    %v2226 = vadd.f32 %v2224, %v2225
    %v2227 = vmul.f32 %v1242, %v1961
    %v2228 = vmul.f32 %v1243, %v1962
    %v2229 = vadd.f32 %v2227, %v2228
    %v2230 = vrot.slane %v2229, 4
    %v2231 = vadd.f32 %v2229, %v2230
    %v2232 = vrot.slane %v2231, 2
    %v2233 = vadd.f32 %v2231, %v2232
    %v2234 = vrot.slane %v2233, 1
    %v2235 = vadd.f32 %v2233, %v2234
    %v2236 = vmul.f32 %v1246, %v1961
    %v2237 = vmul.f32 %v1247, %v1962
    %v2238 = vadd.f32 %v2236, %v2237
    %v2239 = vrot.slane %v2238, 4
    %v2240 = vadd.f32 %v2238, %v2239
    %v2241 = vrot.slane %v2240, 2
    %v2242 = vadd.f32 %v2240, %v2241
    %v2243 = vrot.slane %v2242, 1
    %v2244 = vadd.f32 %v2242, %v2243
    %v2245 = vmul.f32 %v1250, %v1961
    %v2246 = vmul.f32 %v1251, %v1962
    %v2247 = vadd.f32 %v2245, %v2246
    %v2248 = vrot.slane %v2247, 4
    %v2249 = vadd.f32 %v2247, %v2248
    %v2250 = vrot.slane %v2249, 2
    %v2251 = vadd.f32 %v2249, %v2250
    %v2252 = vrot.slane %v2251, 1
    %v2253 = vadd.f32 %v2251, %v2252
    %v2254 = vmul.f32 %v1254, %v1961
    %v2255 = vmul.f32 %v1255, %v1962
    %v2256 = vadd.f32 %v2254, %v2255
    %v2257 = vrot.slane %v2256, 4
    %v2258 = vadd.f32 %v2256, %v2257
    %v2259 = vrot.slane %v2258, 2
    %v2260 = vadd.f32 %v2258, %v2259
    %v2261 = vrot.slane %v2260, 1
    %v2262 = vadd.f32 %v2260, %v2261
    %v2263 = vmul.f32 %v1258, %v1961
    %v2264 = vmul.f32 %v1259, %v1962
    %v2265 = vadd.f32 %v2263, %v2264
    %v2266 = vrot.slane %v2265, 4
    %v2267 = vadd.f32 %v2265, %v2266
    %v2268 = vrot.slane %v2267, 2
    %v2269 = vadd.f32 %v2267, %v2268
    %v2270 = vrot.slane %v2269, 1
    %v2271 = vadd.f32 %v2269, %v2270
    %v2272 = vsel %vm1357, %v2208, %v2217
    %v2273 = vsel %vm1359, %v2272, %v2226
    %v2274 = vsel %vm1361, %v2273, %v2235
    %v2275 = vsel %vm1363, %v2274, %v2244
    %v2276 = vsel %vm1365, %v2275, %v2253
    %v2277 = vsel %vm1367, %v2276, %v2262
    %v2278 = vsel %vm1369, %v2277, %v2271
    %v2279 = vadd.f32 %v1370, %v2041
    %v2280 = vadd.f32 %v1449, %v2120
    %v2281 = vadd.f32 %v1528, %v2199
    %v2282 = vadd.f32 %v1607, %v2278
    %v2283 = vmax.f32 %v2279, %v2280
    %v2284 = vmax.f32 %v2283, %v2281
    %v2285 = vmax.f32 %v2284, %v2282
    %v2286 = vsub.f32 %v2279, %v2285
    %v2287 = vmul.f32 %v2286, 1.442695
    %v2288 = vpow.pop %v2287
    %v2289 = vsub.f32 %v2280, %v2285
    %v2290 = vmul.f32 %v2289, 1.442695
    %v2291 = vpow.pop %v2290
    %v2292 = vsub.f32 %v2281, %v2285
    %v2293 = vmul.f32 %v2292, 1.442695
    %v2294 = vpow.pop %v2293
    %v2295 = vsub.f32 %v2282, %v2285
    %v2296 = vmul.f32 %v2295, 1.442695
    %v2297 = vpow.pop %v2296
    %v2298 = vadd.f32 %v2288, %v2291
    %v2299 = vadd.f32 %v2298, %v2294
    %v2300 = vadd.f32 %v2299, %v2297
    %v2301 = vrcp.pop %v2300
    %v2302 = vmul.f32 %v2288, %v2301
    %v2303 = vmul.f32 %v2291, %v2301
    %v2304 = vmul.f32 %v2294, %v2301
    %v2305 = vmul.f32 %v2297, %v2301
    %v2306 = vlaneseq
    %v2307 = vshrl.u32 %v2306, 7
    %v2308 = vsub.s32 0, %v2307
    %v2309 = vrot.slane %v2302, %v2308
    %v2310 = vmul.f32 %v2309, %v1073
    %v2311 = vmul.f32 %v2309, %v1074
    %v2312 = vlaneseq
    %v2313 = vshrl.u32 %v2312, 7
    %v2314 = vsub.s32 1, %v2313
    %v2315 = vrot.slane %v2302, %v2314
    %v2316 = vmul.f32 %v2315, %v1075
    %v2317 = vmul.f32 %v2315, %v1076
    %v2318 = vadd.f32 %v2310, %v2316
    %v2319 = vadd.f32 %v2311, %v2317
    %v2320 = vlaneseq
    %v2321 = vshrl.u32 %v2320, 7
    %v2322 = vsub.s32 2, %v2321
    %v2323 = vrot.slane %v2302, %v2322
    %v2324 = vmul.f32 %v2323, %v1079
    %v2325 = vmul.f32 %v2323, %v1080
    %v2326 = vadd.f32 %v2318, %v2324
    %v2327 = vadd.f32 %v2319, %v2325
    %v2328 = vlaneseq
    %v2329 = vshrl.u32 %v2328, 7
    %v2330 = vsub.s32 3, %v2329
    %v2331 = vrot.slane %v2302, %v2330
    %v2332 = vmul.f32 %v2331, %v1083
    %v2333 = vmul.f32 %v2331, %v1084
    %v2334 = vadd.f32 %v2326, %v2332
    %v2335 = vadd.f32 %v2327, %v2333
    %v2336 = vlaneseq
    %v2337 = vshrl.u32 %v2336, 7
    %v2338 = vsub.s32 4, %v2337
    %v2339 = vrot.slane %v2302, %v2338
    %v2340 = vmul.f32 %v2339, %v1087
    %v2341 = vmul.f32 %v2339, %v1088
    %v2342 = vadd.f32 %v2334, %v2340
    %v2343 = vadd.f32 %v2335, %v2341
    %v2344 = vlaneseq
    %v2345 = vshrl.u32 %v2344, 7
    %v2346 = vsub.s32 5, %v2345
    %v2347 = vrot.slane %v2302, %v2346
    %v2348 = vmul.f32 %v2347, %v1091
    %v2349 = vmul.f32 %v2347, %v1092
    %v2350 = vadd.f32 %v2342, %v2348
    %v2351 = vadd.f32 %v2343, %v2349
    %v2352 = vlaneseq
    %v2353 = vshrl.u32 %v2352, 7
    %v2354 = vsub.s32 6, %v2353
    %v2355 = vrot.slane %v2302, %v2354
    %v2356 = vmul.f32 %v2355, %v1095
    %v2357 = vmul.f32 %v2355, %v1096
    %v2358 = vadd.f32 %v2350, %v2356
    %v2359 = vadd.f32 %v2351, %v2357
    %v2360 = vlaneseq
    %v2361 = vshrl.u32 %v2360, 7
    %v2362 = vsub.s32 7, %v2361
    %v2363 = vrot.slane %v2302, %v2362
    %v2364 = vmul.f32 %v2363, %v1099
    %v2365 = vmul.f32 %v2363, %v1100
    %v2366 = vadd.f32 %v2358, %v2364
    %v2367 = vadd.f32 %v2359, %v2365
    %v2368 = vmul.f32 %v2366, %v2366
    %v2369 = vmul.f32 %v2367, %v2367
    %v2370 = vadd.f32 %v2368, %v2369
    %v2371 = vrot.slane %v2370, 4
    %v2372 = vadd.f32 %v2370, %v2371
    %v2373 = vrot.slane %v2372, 2
    %v2374 = vadd.f32 %v2372, %v2373
    %v2375 = vrot.slane %v2374, 1
    %v2376 = vadd.f32 %v2374, %v2375
    %v2377 = vrsqrt.pop %v2376
    %v2378 = vmul.f32 %v2376, %v2377
    %vm2379 = vcmp.eq.f32.partialorder %v2376, inf
    %v2380 = vsel %vm2379, %v2376, %v2378
    %vm2381 = vcmp.eq.f32.partialorder %v2376, 0.0
    %v2382 = vand.u32 %v2376, 2147483648
    %v2383 = vsel %vm2381, %v2382, %v2380
    %v2384 = vadd.f32 %v2376, 1.0
    %v2385 = vrcp.pop %v2384
    %v2386 = vmul.f32 %v2383, %v2385
    %v2387 = vmul.f32 %v2386, %v2366
    %v2388 = vmul.f32 %v2386, %v2367
    %v2389 = vlaneseq
    %v2390 = vshrl.u32 %v2389, 7
    %v2391 = vsub.s32 0, %v2390
    %v2392 = vrot.slane %v2303, %v2391
    %v2393 = vmul.f32 %v2392, %v1126
    %v2394 = vmul.f32 %v2392, %v1127
    %v2395 = vlaneseq
    %v2396 = vshrl.u32 %v2395, 7
    %v2397 = vsub.s32 1, %v2396
    %v2398 = vrot.slane %v2303, %v2397
    %v2399 = vmul.f32 %v2398, %v1128
    %v2400 = vmul.f32 %v2398, %v1129
    %v2401 = vadd.f32 %v2393, %v2399
    %v2402 = vadd.f32 %v2394, %v2400
    %v2403 = vlaneseq
    %v2404 = vshrl.u32 %v2403, 7
    %v2405 = vsub.s32 2, %v2404
    %v2406 = vrot.slane %v2303, %v2405
    %v2407 = vmul.f32 %v2406, %v1132
    %v2408 = vmul.f32 %v2406, %v1133
    %v2409 = vadd.f32 %v2401, %v2407
    %v2410 = vadd.f32 %v2402, %v2408
    %v2411 = vlaneseq
    %v2412 = vshrl.u32 %v2411, 7
    %v2413 = vsub.s32 3, %v2412
    %v2414 = vrot.slane %v2303, %v2413
    %v2415 = vmul.f32 %v2414, %v1136
    %v2416 = vmul.f32 %v2414, %v1137
    %v2417 = vadd.f32 %v2409, %v2415
    %v2418 = vadd.f32 %v2410, %v2416
    %v2419 = vlaneseq
    %v2420 = vshrl.u32 %v2419, 7
    %v2421 = vsub.s32 4, %v2420
    %v2422 = vrot.slane %v2303, %v2421
    %v2423 = vmul.f32 %v2422, %v1140
    %v2424 = vmul.f32 %v2422, %v1141
    %v2425 = vadd.f32 %v2417, %v2423
    %v2426 = vadd.f32 %v2418, %v2424
    %v2427 = vlaneseq
    %v2428 = vshrl.u32 %v2427, 7
    %v2429 = vsub.s32 5, %v2428
    %v2430 = vrot.slane %v2303, %v2429
    %v2431 = vmul.f32 %v2430, %v1144
    %v2432 = vmul.f32 %v2430, %v1145
    %v2433 = vadd.f32 %v2425, %v2431
    %v2434 = vadd.f32 %v2426, %v2432
    %v2435 = vlaneseq
    %v2436 = vshrl.u32 %v2435, 7
    %v2437 = vsub.s32 6, %v2436
    %v2438 = vrot.slane %v2303, %v2437
    %v2439 = vmul.f32 %v2438, %v1148
    %v2440 = vmul.f32 %v2438, %v1149
    %v2441 = vadd.f32 %v2433, %v2439
    %v2442 = vadd.f32 %v2434, %v2440
    %v2443 = vlaneseq
    %v2444 = vshrl.u32 %v2443, 7
    %v2445 = vsub.s32 7, %v2444
    %v2446 = vrot.slane %v2303, %v2445
    %v2447 = vmul.f32 %v2446, %v1152
    %v2448 = vmul.f32 %v2446, %v1153
    %v2449 = vadd.f32 %v2441, %v2447
    %v2450 = vadd.f32 %v2442, %v2448
    %v2451 = vmul.f32 %v2449, %v2449
    %v2452 = vmul.f32 %v2450, %v2450
    %v2453 = vadd.f32 %v2451, %v2452
    %v2454 = vrot.slane %v2453, 4
    %v2455 = vadd.f32 %v2453, %v2454
    %v2456 = vrot.slane %v2455, 2
    %v2457 = vadd.f32 %v2455, %v2456
    %v2458 = vrot.slane %v2457, 1
    %v2459 = vadd.f32 %v2457, %v2458
    %v2460 = vrsqrt.pop %v2459
    %v2461 = vmul.f32 %v2459, %v2460
    %vm2462 = vcmp.eq.f32.partialorder %v2459, inf
    %v2463 = vsel %vm2462, %v2459, %v2461
    %vm2464 = vcmp.eq.f32.partialorder %v2459, 0.0
    %v2465 = vand.u32 %v2459, 2147483648
    %v2466 = vsel %vm2464, %v2465, %v2463
    %v2467 = vadd.f32 %v2459, 1.0
    %v2468 = vrcp.pop %v2467
    %v2469 = vmul.f32 %v2466, %v2468
    %v2470 = vmul.f32 %v2469, %v2449
    %v2471 = vmul.f32 %v2469, %v2450
    %v2472 = vlaneseq
    %v2473 = vshrl.u32 %v2472, 7
    %v2474 = vsub.s32 0, %v2473
    %v2475 = vrot.slane %v2304, %v2474
    %v2476 = vmul.f32 %v2475, %v1179
    %v2477 = vmul.f32 %v2475, %v1180
    %v2478 = vlaneseq
    %v2479 = vshrl.u32 %v2478, 7
    %v2480 = vsub.s32 1, %v2479
    %v2481 = vrot.slane %v2304, %v2480
    %v2482 = vmul.f32 %v2481, %v1181
    %v2483 = vmul.f32 %v2481, %v1182
    %v2484 = vadd.f32 %v2476, %v2482
    %v2485 = vadd.f32 %v2477, %v2483
    %v2486 = vlaneseq
    %v2487 = vshrl.u32 %v2486, 7
    %v2488 = vsub.s32 2, %v2487
    %v2489 = vrot.slane %v2304, %v2488
    %v2490 = vmul.f32 %v2489, %v1185
    %v2491 = vmul.f32 %v2489, %v1186
    %v2492 = vadd.f32 %v2484, %v2490
    %v2493 = vadd.f32 %v2485, %v2491
    %v2494 = vlaneseq
    %v2495 = vshrl.u32 %v2494, 7
    %v2496 = vsub.s32 3, %v2495
    %v2497 = vrot.slane %v2304, %v2496
    %v2498 = vmul.f32 %v2497, %v1189
    %v2499 = vmul.f32 %v2497, %v1190
    %v2500 = vadd.f32 %v2492, %v2498
    %v2501 = vadd.f32 %v2493, %v2499
    %v2502 = vlaneseq
    %v2503 = vshrl.u32 %v2502, 7
    %v2504 = vsub.s32 4, %v2503
    %v2505 = vrot.slane %v2304, %v2504
    %v2506 = vmul.f32 %v2505, %v1193
    %v2507 = vmul.f32 %v2505, %v1194
    %v2508 = vadd.f32 %v2500, %v2506
    %v2509 = vadd.f32 %v2501, %v2507
    %v2510 = vlaneseq
    %v2511 = vshrl.u32 %v2510, 7
    %v2512 = vsub.s32 5, %v2511
    %v2513 = vrot.slane %v2304, %v2512
    %v2514 = vmul.f32 %v2513, %v1197
    %v2515 = vmul.f32 %v2513, %v1198
    %v2516 = vadd.f32 %v2508, %v2514
    %v2517 = vadd.f32 %v2509, %v2515
    %v2518 = vlaneseq
    %v2519 = vshrl.u32 %v2518, 7
    %v2520 = vsub.s32 6, %v2519
    %v2521 = vrot.slane %v2304, %v2520
    %v2522 = vmul.f32 %v2521, %v1201
    %v2523 = vmul.f32 %v2521, %v1202
    %v2524 = vadd.f32 %v2516, %v2522
    %v2525 = vadd.f32 %v2517, %v2523
    %v2526 = vlaneseq
    %v2527 = vshrl.u32 %v2526, 7
    %v2528 = vsub.s32 7, %v2527
    %v2529 = vrot.slane %v2304, %v2528
    %v2530 = vmul.f32 %v2529, %v1205
    %v2531 = vmul.f32 %v2529, %v1206
    %v2532 = vadd.f32 %v2524, %v2530
    %v2533 = vadd.f32 %v2525, %v2531
    %v2534 = vmul.f32 %v2532, %v2532
    %v2535 = vmul.f32 %v2533, %v2533
    %v2536 = vadd.f32 %v2534, %v2535
    %v2537 = vrot.slane %v2536, 4
    %v2538 = vadd.f32 %v2536, %v2537
    %v2539 = vrot.slane %v2538, 2
    %v2540 = vadd.f32 %v2538, %v2539
    %v2541 = vrot.slane %v2540, 1
    %v2542 = vadd.f32 %v2540, %v2541
    %v2543 = vrsqrt.pop %v2542
    %v2544 = vmul.f32 %v2542, %v2543
    %vm2545 = vcmp.eq.f32.partialorder %v2542, inf
    %v2546 = vsel %vm2545, %v2542, %v2544
    %vm2547 = vcmp.eq.f32.partialorder %v2542, 0.0
    %v2548 = vand.u32 %v2542, 2147483648
    %v2549 = vsel %vm2547, %v2548, %v2546
    %v2550 = vadd.f32 %v2542, 1.0
    %v2551 = vrcp.pop %v2550
    %v2552 = vmul.f32 %v2549, %v2551
    %v2553 = vmul.f32 %v2552, %v2532
    %v2554 = vmul.f32 %v2552, %v2533
    %v2555 = vlaneseq
    %v2556 = vshrl.u32 %v2555, 7
    %v2557 = vsub.s32 0, %v2556
    %v2558 = vrot.slane %v2305, %v2557
    %v2559 = vmul.f32 %v2558, %v1232
    %v2560 = vmul.f32 %v2558, %v1233
    %v2561 = vlaneseq
    %v2562 = vshrl.u32 %v2561, 7
    %v2563 = vsub.s32 1, %v2562
    %v2564 = vrot.slane %v2305, %v2563
    %v2565 = vmul.f32 %v2564, %v1234
    %v2566 = vmul.f32 %v2564, %v1235
    %v2567 = vadd.f32 %v2559, %v2565
    %v2568 = vadd.f32 %v2560, %v2566
    %v2569 = vlaneseq
    %v2570 = vshrl.u32 %v2569, 7
    %v2571 = vsub.s32 2, %v2570
    %v2572 = vrot.slane %v2305, %v2571
    %v2573 = vmul.f32 %v2572, %v1238
    %v2574 = vmul.f32 %v2572, %v1239
    %v2575 = vadd.f32 %v2567, %v2573
    %v2576 = vadd.f32 %v2568, %v2574
    %v2577 = vlaneseq
    %v2578 = vshrl.u32 %v2577, 7
    %v2579 = vsub.s32 3, %v2578
    %v2580 = vrot.slane %v2305, %v2579
    %v2581 = vmul.f32 %v2580, %v1242
    %v2582 = vmul.f32 %v2580, %v1243
    %v2583 = vadd.f32 %v2575, %v2581
    %v2584 = vadd.f32 %v2576, %v2582
    %v2585 = vlaneseq
    %v2586 = vshrl.u32 %v2585, 7
    %v2587 = vsub.s32 4, %v2586
    %v2588 = vrot.slane %v2305, %v2587
    %v2589 = vmul.f32 %v2588, %v1246
    %v2590 = vmul.f32 %v2588, %v1247
    %v2591 = vadd.f32 %v2583, %v2589
    %v2592 = vadd.f32 %v2584, %v2590
    %v2593 = vlaneseq
    %v2594 = vshrl.u32 %v2593, 7
    %v2595 = vsub.s32 5, %v2594
    %v2596 = vrot.slane %v2305, %v2595
    %v2597 = vmul.f32 %v2596, %v1250
    %v2598 = vmul.f32 %v2596, %v1251
    %v2599 = vadd.f32 %v2591, %v2597
    %v2600 = vadd.f32 %v2592, %v2598
    %v2601 = vlaneseq
    %v2602 = vshrl.u32 %v2601, 7
    %v2603 = vsub.s32 6, %v2602
    %v2604 = vrot.slane %v2305, %v2603
    %v2605 = vmul.f32 %v2604, %v1254
    %v2606 = vmul.f32 %v2604, %v1255
    %v2607 = vadd.f32 %v2599, %v2605
    %v2608 = vadd.f32 %v2600, %v2606
    %v2609 = vlaneseq
    %v2610 = vshrl.u32 %v2609, 7
    %v2611 = vsub.s32 7, %v2610
    %v2612 = vrot.slane %v2305, %v2611
    %v2613 = vmul.f32 %v2612, %v1258
    %v2614 = vmul.f32 %v2612, %v1259
    %v2615 = vadd.f32 %v2607, %v2613
    %v2616 = vadd.f32 %v2608, %v2614
    %v2617 = vmul.f32 %v2615, %v2615
    %v2618 = vmul.f32 %v2616, %v2616
    %v2619 = vadd.f32 %v2617, %v2618
    %v2620 = vrot.slane %v2619, 4
    %v2621 = vadd.f32 %v2619, %v2620
    %v2622 = vrot.slane %v2621, 2
    %v2623 = vadd.f32 %v2621, %v2622
    %v2624 = vrot.slane %v2623, 1
    %v2625 = vadd.f32 %v2623, %v2624
    %v2626 = vrsqrt.pop %v2625
    %v2627 = vmul.f32 %v2625, %v2626
    %vm2628 = vcmp.eq.f32.partialorder %v2625, inf
    %v2629 = vsel %vm2628, %v2625, %v2627
    %vm2630 = vcmp.eq.f32.partialorder %v2625, 0.0
    %v2631 = vand.u32 %v2625, 2147483648
    %v2632 = vsel %vm2630, %v2631, %v2629
    %v2633 = vadd.f32 %v2625, 1.0
    %v2634 = vrcp.pop %v2633
    %v2635 = vmul.f32 %v2632, %v2634
    %v2636 = vmul.f32 %v2635, %v2615
    %v2637 = vmul.f32 %v2635, %v2616
    %2638 = vst [vmem:[#allocation3] sm:$0xff] %v2387
    %2639 = vst [vmem:[#allocation3 + $0x8] sm:$0xff] %v2388
    %2640 = vst [vmem:[#allocation3 + $0x10] sm:$0xff] %v2470
    %2641 = vst [vmem:[#allocation3 + $0x18] sm:$0xff] %v2471
    %2642 = vst [vmem:[#allocation3 + $0x20] sm:$0xff] %v2553
    %2643 = vst [vmem:[#allocation3 + $0x28] sm:$0xff] %v2554
    %2644 = vst [vmem:[#allocation3 + $0x30] sm:$0xff] %v2636
    %2645 = vst [vmem:[#allocation3 + $0x38] sm:$0xff] %v2637
    // Predicated region
    $region14: #{tpu_custom_call.1} parent=1 // pred_check
      _
    $region15: #{tpu_custom_call.1} parent=1 // pred_check_branch
      %2647 = sbr.rel (0) target = $region17
    $region16: #{tpu_custom_call.1} parent=1 // pred_region
      %s2649 = ssub.s32 1024, 1024
      %2650 = vsyncadd [#allocation4], %s2649
      %s2651 = sshll.u32 [#allocation3], 4
      %s2652 = int_to_ptr.vmem [resolvable:$true] %s2651
      %2657 = dma.vmem_to_hbm [thread:$0]  %s2652, 1024, %s3, [#allocation4], 128, 128, 8
    $region17: #{tpu_custom_call.1} parent=1 // pred_fallthru
      _
    // Predicated region
    $region18: #{tpu_custom_call.1} parent=1 // pred_check
      _
    $region19: #{tpu_custom_call.1} parent=1 // pred_check_branch
      %2659 = sbr.rel (0) target = $region21
    $region20: #{tpu_custom_call.1} parent=1 // pred_region
      %2660 = dma.done [#allocation4], 1024
    $region21: #{tpu_custom_call.1} parent=1 // pred_fallthru
      _
    %2661 = vsyncpa [#allocation4], 1

</llo_original>
